<compile_context>
chip_gen: v5e
topology: v5e:2x2
jax: 0.10.0
libtpu: 0.0.40
codegen_flags: <defaults>
</compile_context>

<pallas_src>
import functools
import math

import jax
import jax.numpy as jnp
from jax.experimental import pallas as pl
from jax.experimental.pallas import tpu as pltpu


_VMEM_LIMIT = 64 * 1024 * 1024   # generous scoped-VMEM budget (safe on v5e/v6e/v7x)


# ----------------------------------------------------------------------------
# Static tap / phase bookkeeping (shared by weight packing and the kernels)
# ----------------------------------------------------------------------------

def _tap_layout(kh, kw, stride):
    """Group the kh*kw conv taps by stride phase.

    Returns a list of (ry, rx, taps); taps is a tuple of (dy, dx, qy, qx):
      (ry, rx): phase offset (dy % stride, dx % stride) inside the padded input
      (dy, dx): original tap
      (qy, qx): offset of the tap inside its phase slab (dy//stride, dx//stride)
    For stride == 1 there is a single phase containing every tap.
    """
    groups = {}
    for dy in range(kh):
        for dx in range(kw):
            groups.setdefault((dy % stride, dx % stride), []).append(
                (dy, dx, dy // stride, dx // stride))
    return [(ry, rx, tuple(groups[(ry, rx)])) for (ry, rx) in sorted(groups)]


def _pad_hw(x, pad, value=0.0):
    if pad == 0:
        return x
    return jnp.pad(x, ((0, 0), (pad, pad), (pad, pad), (0, 0)),
                   constant_values=value)


# ----------------------------------------------------------------------------
# Pallas kernels
# ----------------------------------------------------------------------------

def _conv_bn_kernel(*refs, tap_slices, oh, ow, cin, cout, relu, has_res,
                    n_phase, pad, in_hw):
    """Fused implicit-GEMM conv + folded BN (+residual, +ReLU) for one image.

    refs = [phase_0 .. phase_{n_phase-1}, w_packed, scale, shift,
            (residual,), out, (pad_scratch if pad > 0)]
      phase_i    : (H_i, W_i, cin)        bf16
      w_packed   : (kh*kw*cin, cout)      bf16   im2col-ordered weights
      scale      : (1, cout)              f32    folded BN scale
      shift      : (1, cout)              f32    folded BN shift
      residual   : (oh, ow, cout)         bf16   (optional)
      out        : (oh, ow, cout)         bf16
      pad_scratch: (H+2p, W+2p, cin)      bf16   (stride-1 in-kernel padding)
    """
    n_in = n_phase + 3 + (1 if has_res else 0)
    phase_refs = refs[:n_phase]
    w_ref = refs[n_phase]
    s_ref = refs[n_phase + 1]
    b_ref = refs[n_phase + 2]
    res_ref = refs[n_phase + 3] if has_res else None
    out_ref = refs[n_in]
    pad_ref = refs[n_in + 1] if pad > 0 else None

    if pad > 0:
        # In-kernel zero padding: zero-initialised VMEM scratch + interior copy.
        h, w = in_hw
        pad_ref[...] = jnp.zeros_like(pad_ref)
        pad_ref[pad:pad + h, pad:pad + w, :] = phase_refs[0][...]

    # Implicit im2col: concatenate all taps along K so the whole conv is one
    # deep MXU matmul (K = kh*kw*cin) instead of kh*kw shallow accumulations.
    cols = []
    for (pi, qy, qx) in tap_slices:          # statically unrolled
        src = pad_ref if pad > 0 else phase_refs[pi]
        cols.append(src[qy:qy + oh, qx:qx + ow, :].reshape(oh * ow, cin))
    a = cols[0] if len(cols) == 1 else jnp.concatenate(cols, axis=-1)

    y = jnp.dot(a, w_ref[...], preferred_element_type=jnp.float32)
    y = y * s_ref[...] + b_ref[...]
    if has_res:
        y = y + res_ref[...].reshape(oh * ow, cout).astype(jnp.float32)
    if relu:
        y = jnp.maximum(y, 0.0)
    out_ref[...] = y.reshape(oh, ow, cout).astype(out_ref.dtype)


def _maxpool_kernel(*refs, tap_slices, oh, ow, n_phase):
    """Running max over the k*k taps for one image, kept in bf16."""
    phase_refs = refs[:n_phase]
    out_ref = refs[-1]
    r = None
    for (pi, qy, qx) in tap_slices:
        v = phase_refs[pi][qy:qy + oh, qx:qx + ow, :]
        r = v if r is None else jnp.maximum(r, v)
    out_ref[...] = r.astype(out_ref.dtype)


def _head_kernel(x_ref, w_ref, b_ref, o_ref):
    """Fused global average pool + fc + bias: (bt, HW, C) -> (bt, classes)."""
    feat = jnp.mean(x_ref[...].astype(jnp.float32), axis=1)        # (bt, C)
    o_ref[...] = (jnp.dot(feat, w_ref[...],
                          preferred_element_type=jnp.float32) + b_ref[...])


# ----------------------------------------------------------------------------
# Wrappers
# ----------------------------------------------------------------------------

def conv_bn(x, w_packed, scale, shift, *, kh, kw, stride, padding, relu,
            residual=None):
    """Fused conv + folded BN (+ residual) (+ ReLU).  NHWC bf16 in/out."""
    B, H, W, cin = x.shape
    cout = w_packed.shape[-1]
    oh = (H + 2 * padding - kh) // stride + 1
    ow = (W + 2 * padding - kw) // stride + 1
    layout = _tap_layout(kh, kw, stride)
    tap_slices = tuple((pi, qy, qx)
                       for pi, (_, _, taps) in enumerate(layout)
                       for (_, _, qy, qx) in taps)

    if stride == 1:
        # Unpadded input; zero padding happens inside the kernel (VMEM
        # scratch), so this conv reads its input from HBM exactly once.
        phases = [x]
        pad = padding
        scratch = ([pltpu.VMEM((H + 2 * padding, W + 2 * padding, cin),
                               x.dtype)] if padding > 0 else [])
    else:
        # Strided convs (a small minority): stride-phase decomposition in the
        # wrapper keeps every in-kernel tap slice contiguous.
        x_pad = _pad_hw(x, padding)
        phases = [x_pad[:, ry::stride, rx::stride, :]
                  for (ry, rx, _) in layout]
        pad = 0
        scratch = []

    n_phase = len(phases)
    has_res = residual is not None

    in_specs = [pl.BlockSpec((None,) + p.shape[1:], lambda b: (b, 0, 0, 0))
                for p in phases]
    in_specs += [
        pl.BlockSpec(w_packed.shape, lambda b: (0, 0)),   # weights stay resident
        pl.BlockSpec((1, cout), lambda b: (0, 0)),
        pl.BlockSpec((1, cout), lambda b: (0, 0)),
    ]
    args = list(phases) + [w_packed, scale, shift]
    if has_res:
        in_specs.append(pl.BlockSpec((None, oh, ow, cout),
                                     lambda b: (b, 0, 0, 0)))
        args.append(residual)

    kernel = functools.partial(
        _conv_bn_kernel, tap_slices=tap_slices, oh=oh, ow=ow, cin=cin,
        cout=cout, relu=relu, has_res=has_res, n_phase=n_phase, pad=pad,
        in_hw=(H, W))

    return pl.pallas_call(
        kernel,
        out_shape=jax.ShapeDtypeStruct((B, oh, ow, cout), jnp.bfloat16),
        grid=(B,),
        in_specs=in_specs,
        out_specs=pl.BlockSpec((None, oh, ow, cout), lambda b: (b, 0, 0, 0)),
        scratch_shapes=scratch,
        compiler_params=pltpu.CompilerParams(
            dimension_semantics=("parallel",),
            vmem_limit_bytes=_VMEM_LIMIT),
    )(*args)


def maxpool2d(x, k=3, stride=2, padding=1):
    B, H, W, C = x.shape
    oh = (H + 2 * padding - k) // stride + 1
    ow = (W + 2 * padding - k) // stride + 1
    layout = _tap_layout(k, k, stride)
    tap_slices = tuple((pi, qy, qx)
                       for pi, (_, _, taps) in enumerate(layout)
                       for (_, _, qy, qx) in taps)
    x_pad = _pad_hw(x, padding, value=float("-inf"))
    phases = [x_pad[:, ry::stride, rx::stride, :] for (ry, rx, _) in layout]
    n_phase = len(phases)

    in_specs = [pl.BlockSpec((None,) + p.shape[1:], lambda b: (b, 0, 0, 0))
                for p in phases]
    kernel = functools.partial(_maxpool_kernel, tap_slices=tap_slices,
                               oh=oh, ow=ow, n_phase=n_phase)
    return pl.pallas_call(
        kernel,
        out_shape=jax.ShapeDtypeStruct((B, oh, ow, C), jnp.bfloat16),
        grid=(B,),
        in_specs=in_specs,
        out_specs=pl.BlockSpec((None, oh, ow, C), lambda b: (b, 0, 0, 0)),
        compiler_params=pltpu.CompilerParams(
            dimension_semantics=("parallel",),
            vmem_limit_bytes=_VMEM_LIMIT),
    )(*phases)


def avgpool_fc(x, fc_w, fc_b):
    """Global average pool + fc + bias, gridded over batch tiles."""
    B, H, W, C = x.shape
    ncls = fc_w.shape[1]
    x3 = x.reshape(B, H * W, C)
    bt = 8 if B % 8 == 0 else B          # batch tile (full batch if B not /8)
    return pl.pallas_call(
        _head_kernel,
        out_shape=jax.ShapeDtypeStruct((B, ncls), jnp.float32),
        grid=(B // bt,),
        in_specs=[pl.BlockSpec((bt, H * W, C), lambda i: (i, 0, 0)),
                  pl.BlockSpec((C, ncls), lambda i: (0, 0)),
                  pl.BlockSpec((1, ncls), lambda i: (0, 0))],
        out_specs=pl.BlockSpec((bt, ncls), lambda i: (i, 0)),
        compiler_params=pltpu.CompilerParams(
            dimension_semantics=("parallel",)),
    )(x3, fc_w, fc_b)


# ----------------------------------------------------------------------------
# Network building blocks
# ----------------------------------------------------------------------------

def basic_block(x, bp):
    """torchvision BasicBlock: relu(bn2(conv2(relu(bn1(conv1(x))))) + id)."""
    stride = bp["stride"]
    out = conv_bn(x, bp["conv1_w"], *bp["bn1"], kh=3, kw=3, stride=stride,
                  padding=1, relu=True)
    if "down_w" in bp:
        idn = conv_bn(x, bp["down_w"], *bp["dbn"], kh=1, kw=1, stride=stride,
                      padding=0, relu=False)
    else:
        idn = x
    return conv_bn(out, bp["conv2_w"], *bp["bn2"], kh=3, kw=3, stride=1,
                   padding=1, relu=True, residual=idn)


# ----------------------------------------------------------------------------
# Deterministic parameter construction (synthetic, shapes match ResNet34)
# ----------------------------------------------------------------------------

def _init_conv(key, kh, kw, cin, cout, stride=1):
    std = 1.0 / math.sqrt(kh * kw * cin)
    w = std * jax.random.normal(key, (kh, kw, cin, cout), jnp.float32)
    # Pre-pack ONCE as a single (kh*kw*cin, cout) GEMM operand whose row order
    # matches the kernel's im2col columns (phase-major, tap-major, cin-minor).
    rows = []
    for (_, _, taps) in _tap_layout(kh, kw, stride):
        for (dy, dx, _, _) in taps:
            rows.append(w[dy, dx])                      # (cin, cout)
    return jnp.concatenate(rows, axis=0).astype(jnp.bfloat16)


def _init_bn(key, c, eps=1e-5):
    k1, k2, k3, k4 = jax.random.split(key, 4)
    gamma = 1.0 + 0.1 * jax.random.normal(k1, (c,), jnp.float32)
    beta = 0.1 * jax.random.normal(k2, (c,), jnp.float32)
    mean = 0.1 * jax.random.normal(k3, (c,), jnp.float32)
    var = jnp.abs(1.0 + 0.1 * jax.random.normal(k4, (c,), jnp.float32))
    scale = gamma / jnp.sqrt(var + eps)          # folded inference-mode BN
    shift = beta - mean * scale
    return scale.reshape(1, c), shift.reshape(1, c)


def make_resnet34_params(key, num_classes):
    keys = iter(jax.random.split(key, 256))
    params = {}
    params["conv1_w"] = _init_conv(next(keys), 7, 7, 3, 64, stride=2)
    params["bn1"] = _init_bn(next(keys), 64)

    layer_cfg = [(64, 64, 3, 1), (64, 128, 4, 2),
                 (128, 256, 6, 2), (256, 512, 3, 2)]
    layers = []
    for cin, cout, nblocks, stride in layer_cfg:
        blocks = []
        for bi in range(nblocks):
            s = stride if bi == 0 else 1
            c_in = cin if bi == 0 else cout
            bp = {"stride": s,
                  "conv1_w": _init_conv(next(keys), 3, 3, c_in, cout, stride=s),
                  "bn1": _init_bn(next(keys), cout),
                  "conv2_w": _init_conv(next(keys), 3, 3, cout, cout, stride=1),
                  "bn2": _init_bn(next(keys), cout)}
            if s != 1 or c_in != cout:
                bp["down_w"] = _init_conv(next(keys), 1, 1, c_in, cout,
                                          stride=s)
                bp["dbn"] = _init_bn(next(keys), cout)
            blocks.append(bp)
        layers.append(blocks)
    params["layers"] = layers

    params["fc_w"] = (1.0 / math.sqrt(512)) * jax.random.normal(
        next(keys), (512, num_classes), jnp.float32)
    params["fc_b"] = (0.1 * jax.random.normal(
        next(keys), (num_classes,), jnp.float32)).reshape(1, num_classes)
    return params


# ----------------------------------------------------------------------------
# Full forward pass
# ----------------------------------------------------------------------------

def resnet34_forward(params, x_nchw):
    """x_nchw: (B, 3, H, W) float32 -> logits (B, num_classes)."""
    # Layout: convert PyTorch NCHW input to NHWC (bf16) for the TPU kernels.
    x = jnp.transpose(x_nchw, (0, 2, 3, 1)).astype(jnp.bfloat16)

    x = conv_bn(x, params["conv1_w"], *params["bn1"], kh=7, kw=7, stride=2,
                padding=3, relu=True)
    x = maxpool2d(x, k=3, stride=2, padding=1)

    for blocks in params["layers"]:
        for bp in blocks:
            x = basic_block(x, bp)

    return avgpool_fc(x, params["fc_w"], params["fc_b"])   # (B, num_classes)


# ----------------------------------------------------------------------------
# Main
# ----------------------------------------------------------------------------

if __name__ == "__main__":
    key = jax.random.PRNGKey(0)
    pkey, xkey = jax.random.split(key)

    num_classes = 10
    params = make_resnet34_params(pkey, num_classes)

    # Small input consistent with the module's (B x C x H x W) contract.
    x = jax.random.normal(xkey, (2, 3, 16, 16), jnp.float32)

    logits = resnet34_forward(params, x)
    logits = jax.block_until_ready(logits)

    assert logits.shape == (2, num_classes)
    assert bool(jnp.all(jnp.isfinite(logits)))
    print("KERNEL_OK")
</pallas_src>

<mosaic_0001>
module attributes {stable_mosaic.version = 11 : i64} {
  func.func @_conv_bn_kernel(%arg0: i32, %arg1: memref<1x11x11x3xbf16, #tpu.memory_space<vmem>>, %arg2: memref<1x11x11x3xbf16, #tpu.memory_space<vmem>>, %arg3: memref<1x11x11x3xbf16, #tpu.memory_space<vmem>>, %arg4: memref<1x11x11x3xbf16, #tpu.memory_space<vmem>>, %arg5: memref<147x64xbf16, #tpu.memory_space<vmem>>, %arg6: memref<1x64xf32, #tpu.memory_space<vmem>>, %arg7: memref<1x64xf32, #tpu.memory_space<vmem>>, %arg8: memref<1x8x8x64xbf16, #tpu.memory_space<vmem>>) attributes {dimension_semantics = [#tpu.dimension_semantics<parallel>], iteration_bounds = array<i64: 2>, scalar_prefetch = 0 : i64, scratch_operands = 0 : i64, tpu.core_type = #tpu.core_type<tc>, window_params = [{transform_indices = @transform_0, window_bounds = array<i64: 1, 11, 11, 3>}, {transform_indices = @transform_1, window_bounds = array<i64: 1, 11, 11, 3>}, {transform_indices = @transform_2, window_bounds = array<i64: 1, 11, 11, 3>}, {transform_indices = @transform_3, window_bounds = array<i64: 1, 11, 11, 3>}, {pipeline_mode = #tpu.pipeline_mode<synchronous>, transform_indices = @transform_4, window_bounds = array<i64: 147, 64>}, {pipeline_mode = #tpu.pipeline_mode<synchronous>, transform_indices = @transform_5, window_bounds = array<i64: 1, 64>}, {pipeline_mode = #tpu.pipeline_mode<synchronous>, transform_indices = @transform_6, window_bounds = array<i64: 1, 64>}, {transform_indices = @transform_7, window_bounds = array<i64: 1, 8, 8, 64>}]} {
    %c0 = arith.constant 0 : index
    %c0_0 = arith.constant 0 : index
    %c0_1 = arith.constant 0 : index
    %c0_2 = arith.constant 0 : index
    %0 = vector.load %arg1[%c0, %c0_0, %c0_1, %c0_2] : memref<1x11x11x3xbf16, #tpu.memory_space<vmem>>, vector<1x8x8x3xbf16>
    %1 = vector.shape_cast %0 : vector<1x8x8x3xbf16> to vector<8x8x3xbf16>
    %2 = vector.shape_cast %1 : vector<8x8x3xbf16> to vector<64x3xbf16>
    %c0_3 = arith.constant 0 : index
    %c0_4 = arith.constant 0 : index
    %c1 = arith.constant 1 : index
    %c0_5 = arith.constant 0 : index
    %3 = vector.load %arg1[%c0_3, %c0_4, %c1, %c0_5] : memref<1x11x11x3xbf16, #tpu.memory_space<vmem>>, vector<1x8x8x3xbf16>
    %4 = vector.shape_cast %3 : vector<1x8x8x3xbf16> to vector<8x8x3xbf16>
    %5 = vector.shape_cast %4 : vector<8x8x3xbf16> to vector<64x3xbf16>
    %c0_6 = arith.constant 0 : index
    %c0_7 = arith.constant 0 : index
    %c2 = arith.constant 2 : index
    %c0_8 = arith.constant 0 : index
    %6 = vector.load %arg1[%c0_6, %c0_7, %c2, %c0_8] : memref<1x11x11x3xbf16, #tpu.memory_space<vmem>>, vector<1x8x8x3xbf16>
    %7 = vector.shape_cast %6 : vector<1x8x8x3xbf16> to vector<8x8x3xbf16>
    %8 = vector.shape_cast %7 : vector<8x8x3xbf16> to vector<64x3xbf16>
    %c0_9 = arith.constant 0 : index
    %c0_10 = arith.constant 0 : index
    %c3 = arith.constant 3 : index
    %c0_11 = arith.constant 0 : index
    %9 = vector.load %arg1[%c0_9, %c0_10, %c3, %c0_11] : memref<1x11x11x3xbf16, #tpu.memory_space<vmem>>, vector<1x8x8x3xbf16>
    %10 = vector.shape_cast %9 : vector<1x8x8x3xbf16> to vector<8x8x3xbf16>
    %11 = vector.shape_cast %10 : vector<8x8x3xbf16> to vector<64x3xbf16>
    %c0_12 = arith.constant 0 : index
    %c1_13 = arith.constant 1 : index
    %c0_14 = arith.constant 0 : index
    %c0_15 = arith.constant 0 : index
    %12 = vector.load %arg1[%c0_12, %c1_13, %c0_14, %c0_15] : memref<1x11x11x3xbf16, #tpu.memory_space<vmem>>, vector<1x8x8x3xbf16>
    %13 = vector.shape_cast %12 : vector<1x8x8x3xbf16> to vector<8x8x3xbf16>
    %14 = vector.shape_cast %13 : vector<8x8x3xbf16> to vector<64x3xbf16>
    %c0_16 = arith.constant 0 : index
    %c1_17 = arith.constant 1 : index
    %c1_18 = arith.constant 1 : index
    %c0_19 = arith.constant 0 : index
    %15 = vector.load %arg1[%c0_16, %c1_17, %c1_18, %c0_19] : memref<1x11x11x3xbf16, #tpu.memory_space<vmem>>, vector<1x8x8x3xbf16>
    %16 = vector.shape_cast %15 : vector<1x8x8x3xbf16> to vector<8x8x3xbf16>
    %17 = vector.shape_cast %16 : vector<8x8x3xbf16> to vector<64x3xbf16>
    %c0_20 = arith.constant 0 : index
    %c1_21 = arith.constant 1 : index
    %c2_22 = arith.constant 2 : index
    %c0_23 = arith.constant 0 : index
    %18 = vector.load %arg1[%c0_20, %c1_21, %c2_22, %c0_23] : memref<1x11x11x3xbf16, #tpu.memory_space<vmem>>, vector<1x8x8x3xbf16>
    %19 = vector.shape_cast %18 : vector<1x8x8x3xbf16> to vector<8x8x3xbf16>
    %20 = vector.shape_cast %19 : vector<8x8x3xbf16> to vector<64x3xbf16>
    %c0_24 = arith.constant 0 : index
    %c1_25 = arith.constant 1 : index
    %c3_26 = arith.constant 3 : index
    %c0_27 = arith.constant 0 : index
    %21 = vector.load %arg1[%c0_24, %c1_25, %c3_26, %c0_27] : memref<1x11x11x3xbf16, #tpu.memory_space<vmem>>, vector<1x8x8x3xbf16>
    %22 = vector.shape_cast %21 : vector<1x8x8x3xbf16> to vector<8x8x3xbf16>
    %23 = vector.shape_cast %22 : vector<8x8x3xbf16> to vector<64x3xbf16>
    %c0_28 = arith.constant 0 : index
    %c2_29 = arith.constant 2 : index
    %c0_30 = arith.constant 0 : index
    %c0_31 = arith.constant 0 : index
    %24 = vector.load %arg1[%c0_28, %c2_29, %c0_30, %c0_31] : memref<1x11x11x3xbf16, #tpu.memory_space<vmem>>, vector<1x8x8x3xbf16>
    %25 = vector.shape_cast %24 : vector<1x8x8x3xbf16> to vector<8x8x3xbf16>
    %26 = vector.shape_cast %25 : vector<8x8x3xbf16> to vector<64x3xbf16>
    %c0_32 = arith.constant 0 : index
    %c2_33 = arith.constant 2 : index
    %c1_34 = arith.constant 1 : index
    %c0_35 = arith.constant 0 : index
    %27 = vector.load %arg1[%c0_32, %c2_33, %c1_34, %c0_35] : memref<1x11x11x3xbf16, #tpu.memory_space<vmem>>, vector<1x8x8x3xbf16>
    %28 = vector.shape_cast %27 : vector<1x8x8x3xbf16> to vector<8x8x3xbf16>
    %29 = vector.shape_cast %28 : vector<8x8x3xbf16> to vector<64x3xbf16>
    %c0_36 = arith.constant 0 : index
    %c2_37 = arith.constant 2 : index
    %c2_38 = arith.constant 2 : index
    %c0_39 = arith.constant 0 : index
    %30 = vector.load %arg1[%c0_36, %c2_37, %c2_38, %c0_39] : memref<1x11x11x3xbf16, #tpu.memory_space<vmem>>, vector<1x8x8x3xbf16>
    %31 = vector.shape_cast %30 : vector<1x8x8x3xbf16> to vector<8x8x3xbf16>
    %32 = vector.shape_cast %31 : vector<8x8x3xbf16> to vector<64x3xbf16>
    %c0_40 = arith.constant 0 : index
    %c2_41 = arith.constant 2 : index
    %c3_42 = arith.constant 3 : index
    %c0_43 = arith.constant 0 : index
    %33 = vector.load %arg1[%c0_40, %c2_41, %c3_42, %c0_43] : memref<1x11x11x3xbf16, #tpu.memory_space<vmem>>, vector<1x8x8x3xbf16>
    %34 = vector.shape_cast %33 : vector<1x8x8x3xbf16> to vector<8x8x3xbf16>
    %35 = vector.shape_cast %34 : vector<8x8x3xbf16> to vector<64x3xbf16>
    %c0_44 = arith.constant 0 : index
    %c3_45 = arith.constant 3 : index
    %c0_46 = arith.constant 0 : index
    %c0_47 = arith.constant 0 : index
    %36 = vector.load %arg1[%c0_44, %c3_45, %c0_46, %c0_47] : memref<1x11x11x3xbf16, #tpu.memory_space<vmem>>, vector<1x8x8x3xbf16>
    %37 = vector.shape_cast %36 : vector<1x8x8x3xbf16> to vector<8x8x3xbf16>
    %38 = vector.shape_cast %37 : vector<8x8x3xbf16> to vector<64x3xbf16>
    %c0_48 = arith.constant 0 : index
    %c3_49 = arith.constant 3 : index
    %c1_50 = arith.constant 1 : index
    %c0_51 = arith.constant 0 : index
    %39 = vector.load %arg1[%c0_48, %c3_49, %c1_50, %c0_51] : memref<1x11x11x3xbf16, #tpu.memory_space<vmem>>, vector<1x8x8x3xbf16>
    %40 = vector.shape_cast %39 : vector<1x8x8x3xbf16> to vector<8x8x3xbf16>
    %41 = vector.shape_cast %40 : vector<8x8x3xbf16> to vector<64x3xbf16>
    %c0_52 = arith.constant 0 : index
    %c3_53 = arith.constant 3 : index
    %c2_54 = arith.constant 2 : index
    %c0_55 = arith.constant 0 : index
    %42 = vector.load %arg1[%c0_52, %c3_53, %c2_54, %c0_55] : memref<1x11x11x3xbf16, #tpu.memory_space<vmem>>, vector<1x8x8x3xbf16>
    %43 = vector.shape_cast %42 : vector<1x8x8x3xbf16> to vector<8x8x3xbf16>
    %44 = vector.shape_cast %43 : vector<8x8x3xbf16> to vector<64x3xbf16>
    %c0_56 = arith.constant 0 : index
    %c3_57 = arith.constant 3 : index
    %c3_58 = arith.constant 3 : index
    %c0_59 = arith.constant 0 : index
    %45 = vector.load %arg1[%c0_56, %c3_57, %c3_58, %c0_59] : memref<1x11x11x3xbf16, #tpu.memory_space<vmem>>, vector<1x8x8x3xbf16>
    %46 = vector.shape_cast %45 : vector<1x8x8x3xbf16> to vector<8x8x3xbf16>
    %47 = vector.shape_cast %46 : vector<8x8x3xbf16> to vector<64x3xbf16>
    %c0_60 = arith.constant 0 : index
    %c0_61 = arith.constant 0 : index
    %c0_62 = arith.constant 0 : index
    %c0_63 = arith.constant 0 : index
    %48 = vector.load %arg2[%c0_60, %c0_61, %c0_62, %c0_63] : memref<1x11x11x3xbf16, #tpu.memory_space<vmem>>, vector<1x8x8x3xbf16>
    %49 = vector.shape_cast %48 : vector<1x8x8x3xbf16> to vector<8x8x3xbf16>
    %50 = vector.shape_cast %49 : vector<8x8x3xbf16> to vector<64x3xbf16>
    %c0_64 = arith.constant 0 : index
    %c0_65 = arith.constant 0 : index
    %c1_66 = arith.constant 1 : index
    %c0_67 = arith.constant 0 : index
    %51 = vector.load %arg2[%c0_64, %c0_65, %c1_66, %c0_67] : memref<1x11x11x3xbf16, #tpu.memory_space<vmem>>, vector<1x8x8x3xbf16>
    %52 = vector.shape_cast %51 : vector<1x8x8x3xbf16> to vector<8x8x3xbf16>
    %53 = vector.shape_cast %52 : vector<8x8x3xbf16> to vector<64x3xbf16>
    %c0_68 = arith.constant 0 : index
    %c0_69 = arith.constant 0 : index
    %c2_70 = arith.constant 2 : index
    %c0_71 = arith.constant 0 : index
    %54 = vector.load %arg2[%c0_68, %c0_69, %c2_70, %c0_71] : memref<1x11x11x3xbf16, #tpu.memory_space<vmem>>, vector<1x8x8x3xbf16>
    %55 = vector.shape_cast %54 : vector<1x8x8x3xbf16> to vector<8x8x3xbf16>
    %56 = vector.shape_cast %55 : vector<8x8x3xbf16> to vector<64x3xbf16>
    %c0_72 = arith.constant 0 : index
    %c1_73 = arith.constant 1 : index
    %c0_74 = arith.constant 0 : index
    %c0_75 = arith.constant 0 : index
    %57 = vector.load %arg2[%c0_72, %c1_73, %c0_74, %c0_75] : memref<1x11x11x3xbf16, #tpu.memory_space<vmem>>, vector<1x8x8x3xbf16>
    %58 = vector.shape_cast %57 : vector<1x8x8x3xbf16> to vector<8x8x3xbf16>
    %59 = vector.shape_cast %58 : vector<8x8x3xbf16> to vector<64x3xbf16>
    %c0_76 = arith.constant 0 : index
    %c1_77 = arith.constant 1 : index
    %c1_78 = arith.constant 1 : index
    %c0_79 = arith.constant 0 : index
    %60 = vector.load %arg2[%c0_76, %c1_77, %c1_78, %c0_79] : memref<1x11x11x3xbf16, #tpu.memory_space<vmem>>, vector<1x8x8x3xbf16>
    %61 = vector.shape_cast %60 : vector<1x8x8x3xbf16> to vector<8x8x3xbf16>
    %62 = vector.shape_cast %61 : vector<8x8x3xbf16> to vector<64x3xbf16>
    %c0_80 = arith.constant 0 : index
    %c1_81 = arith.constant 1 : index
    %c2_82 = arith.constant 2 : index
    %c0_83 = arith.constant 0 : index
    %63 = vector.load %arg2[%c0_80, %c1_81, %c2_82, %c0_83] : memref<1x11x11x3xbf16, #tpu.memory_space<vmem>>, vector<1x8x8x3xbf16>
    %64 = vector.shape_cast %63 : vector<1x8x8x3xbf16> to vector<8x8x3xbf16>
    %65 = vector.shape_cast %64 : vector<8x8x3xbf16> to vector<64x3xbf16>
    %c0_84 = arith.constant 0 : index
    %c2_85 = arith.constant 2 : index
    %c0_86 = arith.constant 0 : index
    %c0_87 = arith.constant 0 : index
    %66 = vector.load %arg2[%c0_84, %c2_85, %c0_86, %c0_87] : memref<1x11x11x3xbf16, #tpu.memory_space<vmem>>, vector<1x8x8x3xbf16>
    %67 = vector.shape_cast %66 : vector<1x8x8x3xbf16> to vector<8x8x3xbf16>
    %68 = vector.shape_cast %67 : vector<8x8x3xbf16> to vector<64x3xbf16>
    %c0_88 = arith.constant 0 : index
    %c2_89 = arith.constant 2 : index
    %c1_90 = arith.constant 1 : index
    %c0_91 = arith.constant 0 : index
    %69 = vector.load %arg2[%c0_88, %c2_89, %c1_90, %c0_91] : memref<1x11x11x3xbf16, #tpu.memory_space<vmem>>, vector<1x8x8x3xbf16>
    %70 = vector.shape_cast %69 : vector<1x8x8x3xbf16> to vector<8x8x3xbf16>
    %71 = vector.shape_cast %70 : vector<8x8x3xbf16> to vector<64x3xbf16>
    %c0_92 = arith.constant 0 : index
    %c2_93 = arith.constant 2 : index
    %c2_94 = arith.constant 2 : index
    %c0_95 = arith.constant 0 : index
    %72 = vector.load %arg2[%c0_92, %c2_93, %c2_94, %c0_95] : memref<1x11x11x3xbf16, #tpu.memory_space<vmem>>, vector<1x8x8x3xbf16>
    %73 = vector.shape_cast %72 : vector<1x8x8x3xbf16> to vector<8x8x3xbf16>
    %74 = vector.shape_cast %73 : vector<8x8x3xbf16> to vector<64x3xbf16>
    %c0_96 = arith.constant 0 : index
    %c3_97 = arith.constant 3 : index
    %c0_98 = arith.constant 0 : index
    %c0_99 = arith.constant 0 : index
    %75 = vector.load %arg2[%c0_96, %c3_97, %c0_98, %c0_99] : memref<1x11x11x3xbf16, #tpu.memory_space<vmem>>, vector<1x8x8x3xbf16>
    %76 = vector.shape_cast %75 : vector<1x8x8x3xbf16> to vector<8x8x3xbf16>
    %77 = vector.shape_cast %76 : vector<8x8x3xbf16> to vector<64x3xbf16>
    %c0_100 = arith.constant 0 : index
    %c3_101 = arith.constant 3 : index
    %c1_102 = arith.constant 1 : index
    %c0_103 = arith.constant 0 : index
    %78 = vector.load %arg2[%c0_100, %c3_101, %c1_102, %c0_103] : memref<1x11x11x3xbf16, #tpu.memory_space<vmem>>, vector<1x8x8x3xbf16>
    %79 = vector.shape_cast %78 : vector<1x8x8x3xbf16> to vector<8x8x3xbf16>
    %80 = vector.shape_cast %79 : vector<8x8x3xbf16> to vector<64x3xbf16>
    %c0_104 = arith.constant 0 : index
    %c3_105 = arith.constant 3 : index
    %c2_106 = arith.constant 2 : index
    %c0_107 = arith.constant 0 : index
    %81 = vector.load %arg2[%c0_104, %c3_105, %c2_106, %c0_107] : memref<1x11x11x3xbf16, #tpu.memory_space<vmem>>, vector<1x8x8x3xbf16>
    %82 = vector.shape_cast %81 : vector<1x8x8x3xbf16> to vector<8x8x3xbf16>
    %83 = vector.shape_cast %82 : vector<8x8x3xbf16> to vector<64x3xbf16>
    %c0_108 = arith.constant 0 : index
    %c0_109 = arith.constant 0 : index
    %c0_110 = arith.constant 0 : index
    %c0_111 = arith.constant 0 : index
    %84 = vector.load %arg3[%c0_108, %c0_109, %c0_110, %c0_111] : memref<1x11x11x3xbf16, #tpu.memory_space<vmem>>, vector<1x8x8x3xbf16>
    %85 = vector.shape_cast %84 : vector<1x8x8x3xbf16> to vector<8x8x3xbf16>
    %86 = vector.shape_cast %85 : vector<8x8x3xbf16> to vector<64x3xbf16>
    %c0_112 = arith.constant 0 : index
    %c0_113 = arith.constant 0 : index
    %c1_114 = arith.constant 1 : index
    %c0_115 = arith.constant 0 : index
    %87 = vector.load %arg3[%c0_112, %c0_113, %c1_114, %c0_115] : memref<1x11x11x3xbf16, #tpu.memory_space<vmem>>, vector<1x8x8x3xbf16>
    %88 = vector.shape_cast %87 : vector<1x8x8x3xbf16> to vector<8x8x3xbf16>
    %89 = vector.shape_cast %88 : vector<8x8x3xbf16> to vector<64x3xbf16>
    %c0_116 = arith.constant 0 : index
    %c0_117 = arith.constant 0 : index
    %c2_118 = arith.constant 2 : index
    %c0_119 = arith.constant 0 : index
    %90 = vector.load %arg3[%c0_116, %c0_117, %c2_118, %c0_119] : memref<1x11x11x3xbf16, #tpu.memory_space<vmem>>, vector<1x8x8x3xbf16>
    %91 = vector.shape_cast %90 : vector<1x8x8x3xbf16> to vector<8x8x3xbf16>
    %92 = vector.shape_cast %91 : vector<8x8x3xbf16> to vector<64x3xbf16>
    %c0_120 = arith.constant 0 : index
    %c0_121 = arith.constant 0 : index
    %c3_122 = arith.constant 3 : index
    %c0_123 = arith.constant 0 : index
    %93 = vector.load %arg3[%c0_120, %c0_121, %c3_122, %c0_123] : memref<1x11x11x3xbf16, #tpu.memory_space<vmem>>, vector<1x8x8x3xbf16>
    %94 = vector.shape_cast %93 : vector<1x8x8x3xbf16> to vector<8x8x3xbf16>
    %95 = vector.shape_cast %94 : vector<8x8x3xbf16> to vector<64x3xbf16>
    %c0_124 = arith.constant 0 : index
    %c1_125 = arith.constant 1 : index
    %c0_126 = arith.constant 0 : index
    %c0_127 = arith.constant 0 : index
    %96 = vector.load %arg3[%c0_124, %c1_125, %c0_126, %c0_127] : memref<1x11x11x3xbf16, #tpu.memory_space<vmem>>, vector<1x8x8x3xbf16>
    %97 = vector.shape_cast %96 : vector<1x8x8x3xbf16> to vector<8x8x3xbf16>
    %98 = vector.shape_cast %97 : vector<8x8x3xbf16> to vector<64x3xbf16>
    %c0_128 = arith.constant 0 : index
    %c1_129 = arith.constant 1 : index
    %c1_130 = arith.constant 1 : index
    %c0_131 = arith.constant 0 : index
    %99 = vector.load %arg3[%c0_128, %c1_129, %c1_130, %c0_131] : memref<1x11x11x3xbf16, #tpu.memory_space<vmem>>, vector<1x8x8x3xbf16>
    %100 = vector.shape_cast %99 : vector<1x8x8x3xbf16> to vector<8x8x3xbf16>
    %101 = vector.shape_cast %100 : vector<8x8x3xbf16> to vector<64x3xbf16>
    %c0_132 = arith.constant 0 : index
    %c1_133 = arith.constant 1 : index
    %c2_134 = arith.constant 2 : index
    %c0_135 = arith.constant 0 : index
    %102 = vector.load %arg3[%c0_132, %c1_133, %c2_134, %c0_135] : memref<1x11x11x3xbf16, #tpu.memory_space<vmem>>, vector<1x8x8x3xbf16>
    %103 = vector.shape_cast %102 : vector<1x8x8x3xbf16> to vector<8x8x3xbf16>
    %104 = vector.shape_cast %103 : vector<8x8x3xbf16> to vector<64x3xbf16>
    %c0_136 = arith.constant 0 : index
    %c1_137 = arith.constant 1 : index
    %c3_138 = arith.constant 3 : index
    %c0_139 = arith.constant 0 : index
    %105 = vector.load %arg3[%c0_136, %c1_137, %c3_138, %c0_139] : memref<1x11x11x3xbf16, #tpu.memory_space<vmem>>, vector<1x8x8x3xbf16>
    %106 = vector.shape_cast %105 : vector<1x8x8x3xbf16> to vector<8x8x3xbf16>
    %107 = vector.shape_cast %106 : vector<8x8x3xbf16> to vector<64x3xbf16>
    %c0_140 = arith.constant 0 : index
    %c2_141 = arith.constant 2 : index
    %c0_142 = arith.constant 0 : index
    %c0_143 = arith.constant 0 : index
    %108 = vector.load %arg3[%c0_140, %c2_141, %c0_142, %c0_143] : memref<1x11x11x3xbf16, #tpu.memory_space<vmem>>, vector<1x8x8x3xbf16>
    %109 = vector.shape_cast %108 : vector<1x8x8x3xbf16> to vector<8x8x3xbf16>
    %110 = vector.shape_cast %109 : vector<8x8x3xbf16> to vector<64x3xbf16>
    %c0_144 = arith.constant 0 : index
    %c2_145 = arith.constant 2 : index
    %c1_146 = arith.constant 1 : index
    %c0_147 = arith.constant 0 : index
    %111 = vector.load %arg3[%c0_144, %c2_145, %c1_146, %c0_147] : memref<1x11x11x3xbf16, #tpu.memory_space<vmem>>, vector<1x8x8x3xbf16>
    %112 = vector.shape_cast %111 : vector<1x8x8x3xbf16> to vector<8x8x3xbf16>
    %113 = vector.shape_cast %112 : vector<8x8x3xbf16> to vector<64x3xbf16>
    %c0_148 = arith.constant 0 : index
    %c2_149 = arith.constant 2 : index
    %c2_150 = arith.constant 2 : index
    %c0_151 = arith.constant 0 : index
    %114 = vector.load %arg3[%c0_148, %c2_149, %c2_150, %c0_151] : memref<1x11x11x3xbf16, #tpu.memory_space<vmem>>, vector<1x8x8x3xbf16>
    %115 = vector.shape_cast %114 : vector<1x8x8x3xbf16> to vector<8x8x3xbf16>
    %116 = vector.shape_cast %115 : vector<8x8x3xbf16> to vector<64x3xbf16>
    %c0_152 = arith.constant 0 : index
    %c2_153 = arith.constant 2 : index
    %c3_154 = arith.constant 3 : index
    %c0_155 = arith.constant 0 : index
    %117 = vector.load %arg3[%c0_152, %c2_153, %c3_154, %c0_155] : memref<1x11x11x3xbf16, #tpu.memory_space<vmem>>, vector<1x8x8x3xbf16>
    %118 = vector.shape_cast %117 : vector<1x8x8x3xbf16> to vector<8x8x3xbf16>
    %119 = vector.shape_cast %118 : vector<8x8x3xbf16> to vector<64x3xbf16>
    %c0_156 = arith.constant 0 : index
    %c0_157 = arith.constant 0 : index
    %c0_158 = arith.constant 0 : index
    %c0_159 = arith.constant 0 : index
    %120 = vector.load %arg4[%c0_156, %c0_157, %c0_158, %c0_159] : memref<1x11x11x3xbf16, #tpu.memory_space<vmem>>, vector<1x8x8x3xbf16>
    %121 = vector.shape_cast %120 : vector<1x8x8x3xbf16> to vector<8x8x3xbf16>
    %122 = vector.shape_cast %121 : vector<8x8x3xbf16> to vector<64x3xbf16>
    %c0_160 = arith.constant 0 : index
    %c0_161 = arith.constant 0 : index
    %c1_162 = arith.constant 1 : index
    %c0_163 = arith.constant 0 : index
    %123 = vector.load %arg4[%c0_160, %c0_161, %c1_162, %c0_163] : memref<1x11x11x3xbf16, #tpu.memory_space<vmem>>, vector<1x8x8x3xbf16>
    %124 = vector.shape_cast %123 : vector<1x8x8x3xbf16> to vector<8x8x3xbf16>
    %125 = vector.shape_cast %124 : vector<8x8x3xbf16> to vector<64x3xbf16>
    %c0_164 = arith.constant 0 : index
    %c0_165 = arith.constant 0 : index
    %c2_166 = arith.constant 2 : index
    %c0_167 = arith.constant 0 : index
    %126 = vector.load %arg4[%c0_164, %c0_165, %c2_166, %c0_167] : memref<1x11x11x3xbf16, #tpu.memory_space<vmem>>, vector<1x8x8x3xbf16>
    %127 = vector.shape_cast %126 : vector<1x8x8x3xbf16> to vector<8x8x3xbf16>
    %128 = vector.shape_cast %127 : vector<8x8x3xbf16> to vector<64x3xbf16>
    %c0_168 = arith.constant 0 : index
    %c1_169 = arith.constant 1 : index
    %c0_170 = arith.constant 0 : index
    %c0_171 = arith.constant 0 : index
    %129 = vector.load %arg4[%c0_168, %c1_169, %c0_170, %c0_171] : memref<1x11x11x3xbf16, #tpu.memory_space<vmem>>, vector<1x8x8x3xbf16>
    %130 = vector.shape_cast %129 : vector<1x8x8x3xbf16> to vector<8x8x3xbf16>
    %131 = vector.shape_cast %130 : vector<8x8x3xbf16> to vector<64x3xbf16>
    %c0_172 = arith.constant 0 : index
    %c1_173 = arith.constant 1 : index
    %c1_174 = arith.constant 1 : index
    %c0_175 = arith.constant 0 : index
    %132 = vector.load %arg4[%c0_172, %c1_173, %c1_174, %c0_175] : memref<1x11x11x3xbf16, #tpu.memory_space<vmem>>, vector<1x8x8x3xbf16>
    %133 = vector.shape_cast %132 : vector<1x8x8x3xbf16> to vector<8x8x3xbf16>
    %134 = vector.shape_cast %133 : vector<8x8x3xbf16> to vector<64x3xbf16>
    %c0_176 = arith.constant 0 : index
    %c1_177 = arith.constant 1 : index
    %c2_178 = arith.constant 2 : index
    %c0_179 = arith.constant 0 : index
    %135 = vector.load %arg4[%c0_176, %c1_177, %c2_178, %c0_179] : memref<1x11x11x3xbf16, #tpu.memory_space<vmem>>, vector<1x8x8x3xbf16>
    %136 = vector.shape_cast %135 : vector<1x8x8x3xbf16> to vector<8x8x3xbf16>
    %137 = vector.shape_cast %136 : vector<8x8x3xbf16> to vector<64x3xbf16>
    %c0_180 = arith.constant 0 : index
    %c2_181 = arith.constant 2 : index
    %c0_182 = arith.constant 0 : index
    %c0_183 = arith.constant 0 : index
    %138 = vector.load %arg4[%c0_180, %c2_181, %c0_182, %c0_183] : memref<1x11x11x3xbf16, #tpu.memory_space<vmem>>, vector<1x8x8x3xbf16>
    %139 = vector.shape_cast %138 : vector<1x8x8x3xbf16> to vector<8x8x3xbf16>
    %140 = vector.shape_cast %139 : vector<8x8x3xbf16> to vector<64x3xbf16>
    %c0_184 = arith.constant 0 : index
    %c2_185 = arith.constant 2 : index
    %c1_186 = arith.constant 1 : index
    %c0_187 = arith.constant 0 : index
    %141 = vector.load %arg4[%c0_184, %c2_185, %c1_186, %c0_187] : memref<1x11x11x3xbf16, #tpu.memory_space<vmem>>, vector<1x8x8x3xbf16>
    %142 = vector.shape_cast %141 : vector<1x8x8x3xbf16> to vector<8x8x3xbf16>
    %143 = vector.shape_cast %142 : vector<8x8x3xbf16> to vector<64x3xbf16>
    %c0_188 = arith.constant 0 : index
    %c2_189 = arith.constant 2 : index
    %c2_190 = arith.constant 2 : index
    %c0_191 = arith.constant 0 : index
    %144 = vector.load %arg4[%c0_188, %c2_189, %c2_190, %c0_191] : memref<1x11x11x3xbf16, #tpu.memory_space<vmem>>, vector<1x8x8x3xbf16>
    %145 = vector.shape_cast %144 : vector<1x8x8x3xbf16> to vector<8x8x3xbf16>
    %146 = vector.shape_cast %145 : vector<8x8x3xbf16> to vector<64x3xbf16>
    %147 = tpu.concatenate %2, %5, %8, %11, %14, %17, %20, %23, %26, %29, %32, %35, %38, %41, %44, %47 in 1 : vector<64x3xbf16>, vector<64x3xbf16>, vector<64x3xbf16>, vector<64x3xbf16>, vector<64x3xbf16>, vector<64x3xbf16>, vector<64x3xbf16>, vector<64x3xbf16>, vector<64x3xbf16>, vector<64x3xbf16>, vector<64x3xbf16>, vector<64x3xbf16>, vector<64x3xbf16>, vector<64x3xbf16>, vector<64x3xbf16>, vector<64x3xbf16> -> vector<64x48xbf16>
    %148 = tpu.concatenate %50, %53, %56, %59, %62, %65, %68, %71, %74, %77, %80, %83, %86, %89, %92, %95 in 1 : vector<64x3xbf16>, vector<64x3xbf16>, vector<64x3xbf16>, vector<64x3xbf16>, vector<64x3xbf16>, vector<64x3xbf16>, vector<64x3xbf16>, vector<64x3xbf16>, vector<64x3xbf16>, vector<64x3xbf16>, vector<64x3xbf16>, vector<64x3xbf16>, vector<64x3xbf16>, vector<64x3xbf16>, vector<64x3xbf16>, vector<64x3xbf16> -> vector<64x48xbf16>
    %149 = tpu.concatenate %98, %101, %104, %107, %110, %113, %116, %119, %122, %125, %128, %131, %134, %137, %140, %143 in 1 : vector<64x3xbf16>, vector<64x3xbf16>, vector<64x3xbf16>, vector<64x3xbf16>, vector<64x3xbf16>, vector<64x3xbf16>, vector<64x3xbf16>, vector<64x3xbf16>, vector<64x3xbf16>, vector<64x3xbf16>, vector<64x3xbf16>, vector<64x3xbf16>, vector<64x3xbf16>, vector<64x3xbf16>, vector<64x3xbf16>, vector<64x3xbf16> -> vector<64x48xbf16>
    %150 = tpu.concatenate %147, %148, %149, %146 in 1 : vector<64x48xbf16>, vector<64x48xbf16>, vector<64x48xbf16>, vector<64x3xbf16> -> vector<64x147xbf16>
    %c0_192 = arith.constant 0 : index
    %c0_193 = arith.constant 0 : index
    %151 = vector.load %arg5[%c0_192, %c0_193] : memref<147x64xbf16, #tpu.memory_space<vmem>>, vector<147x64xbf16>
    %cst = arith.constant dense<0.000000e+00> : vector<64x64xf32>
    %152 = tpu.matmul %150, %151, %cst {dimension_numbers = #tpu.dot_dimension_numbers<[1], [0], [0], [1], [0, 0, 1, 1], [], []>} : vector<64x147xbf16>, vector<147x64xbf16>, vector<64x64xf32> -> vector<64x64xf32>
    %c0_194 = arith.constant 0 : index
    %c0_195 = arith.constant 0 : index
    %153 = vector.load %arg6[%c0_194, %c0_195] : memref<1x64xf32, #tpu.memory_space<vmem>>, vector<1x64xf32>
    %154 = vector.broadcast %153 : vector<1x64xf32> to vector<64x64xf32>
    %155 = arith.mulf %152, %154 : vector<64x64xf32>
    %c0_196 = arith.constant 0 : index
    %c0_197 = arith.constant 0 : index
    %156 = vector.load %arg7[%c0_196, %c0_197] : memref<1x64xf32, #tpu.memory_space<vmem>>, vector<1x64xf32>
    %157 = vector.broadcast %156 : vector<1x64xf32> to vector<64x64xf32>
    %158 = arith.addf %155, %157 : vector<64x64xf32>
    %cst_198 = arith.constant 0.000000e+00 : f32
    %159 = vector.broadcast %cst_198 : f32 to vector<64x64xf32>
    %160 = arith.maximumf %158, %159 : vector<64x64xf32>
    %161 = vector.shape_cast %160 : vector<64x64xf32> to vector<8x8x64xf32>
    %162 = arith.truncf %161 : vector<8x8x64xf32> to vector<8x8x64xbf16>
    %c0_199 = arith.constant 0 : index
    %c0_200 = arith.constant 0 : index
    %c0_201 = arith.constant 0 : index
    %c0_202 = arith.constant 0 : index
    %163 = vector.load %arg8[%c0_199, %c0_200, %c0_201, %c0_202] : memref<1x8x8x64xbf16, #tpu.memory_space<vmem>>, vector<1x8x8x64xbf16>
    %164 = vector.shape_cast %163 : vector<1x8x8x64xbf16> to vector<8x8x64xbf16>
    %165 = vector.shape_cast %162 : vector<8x8x64xbf16> to vector<1x8x8x64xbf16>
    tpu.vector_store %arg8[%c0_199, %c0_200, %c0_201, %c0_202], %165 {strides = array<i32>} : memref<1x8x8x64xbf16, #tpu.memory_space<vmem>>, vector<1x8x8x64xbf16>,
    return
  }
  func.func @transform_0(%arg0: i32) -> (i32, i32, i32, i32) {
    %c0_i32 = arith.constant 0 : i32
    %c0_i32_0 = arith.constant 0 : i32
    %c0_i32_1 = arith.constant 0 : i32
    %c0_i32_2 = arith.constant 0 : i32
    return %arg0, %c0_i32, %c0_i32_0, %c0_i32_1 : i32, i32, i32, i32
  }
  func.func @transform_1(%arg0: i32) -> (i32, i32, i32, i32) {
    %c0_i32 = arith.constant 0 : i32
    %c0_i32_0 = arith.constant 0 : i32
    %c0_i32_1 = arith.constant 0 : i32
    %c0_i32_2 = arith.constant 0 : i32
    return %arg0, %c0_i32, %c0_i32_0, %c0_i32_1 : i32, i32, i32, i32
  }
  func.func @transform_2(%arg0: i32) -> (i32, i32, i32, i32) {
    %c0_i32 = arith.constant 0 : i32
    %c0_i32_0 = arith.constant 0 : i32
    %c0_i32_1 = arith.constant 0 : i32
    %c0_i32_2 = arith.constant 0 : i32
    return %arg0, %c0_i32, %c0_i32_0, %c0_i32_1 : i32, i32, i32, i32
  }
  func.func @transform_3(%arg0: i32) -> (i32, i32, i32, i32) {
    %c0_i32 = arith.constant 0 : i32
    %c0_i32_0 = arith.constant 0 : i32
    %c0_i32_1 = arith.constant 0 : i32
    %c0_i32_2 = arith.constant 0 : i32
    return %arg0, %c0_i32, %c0_i32_0, %c0_i32_1 : i32, i32, i32, i32
  }
  func.func @transform_4(%arg0: i32) -> (i32, i32) {
    %c0_i32 = arith.constant 0 : i32
    %c0_i32_0 = arith.constant 0 : i32
    %c0_i32_1 = arith.constant 0 : i32
    return %c0_i32, %c0_i32_0 : i32, i32
  }
  func.func @transform_5(%arg0: i32) -> (i32, i32) {
    %c0_i32 = arith.constant 0 : i32
    %c0_i32_0 = arith.constant 0 : i32
    %c0_i32_1 = arith.constant 0 : i32
    return %c0_i32, %c0_i32_0 : i32, i32
  }
  func.func @transform_6(%arg0: i32) -> (i32, i32) {
    %c0_i32 = arith.constant 0 : i32
    %c0_i32_0 = arith.constant 0 : i32
    %c0_i32_1 = arith.constant 0 : i32
    return %c0_i32, %c0_i32_0 : i32, i32
  }
  func.func @transform_7(%arg0: i32) -> (i32, i32, i32, i32) {
    %c0_i32 = arith.constant 0 : i32
    %c0_i32_0 = arith.constant 0 : i32
    %c0_i32_1 = arith.constant 0 : i32
    %c0_i32_2 = arith.constant 0 : i32
    return %arg0, %c0_i32, %c0_i32_0, %c0_i32_1 : i32, i32, i32, i32
  }
}

</mosaic_0001>

<llo_original>
// kernel: tpu_custom_call.1
$region0: #{tpu_custom_call.1}
  #allocation0 [shape = 'u32[]', space=smem, size = 0x4, offset = 0x4, fixed_abs, tag = 'smem constant byte address 0x4 - core index']
  #allocation1 [shape = 'u32[72,128]{1,0:T(1,128)}', space=vmem, size = 0x9000, scoped, tag = 'internal scratch']
  %s0 = inlined_call_operand.vmem [shape: bf16[2,11,11,3], index: 0, kind: input, shape index: {}]
  %s1 = inlined_call_operand.vmem [shape: bf16[2,11,11,3], index: 1, kind: input, shape index: {}]
  %s2 = inlined_call_operand.vmem [shape: bf16[2,11,11,3], index: 2, kind: input, shape index: {}]
  %s3 = inlined_call_operand.vmem [shape: bf16[2,11,11,3], index: 3, kind: input, shape index: {}]
  %s4 = inlined_call_operand.vmem [shape: bf16[147,64], index: 4, kind: input, shape index: {}]
  %s5 = inlined_call_operand.vmem [shape: f32[1,64], index: 5, kind: input, shape index: {}]
  %s6 = inlined_call_operand.vmem [shape: f32[1,64], index: 6, kind: input, shape index: {}]
  %s7 = inlined_call_operand.hbm [shape: bf16[2,8,8,64], index: 7, kind: output, shape index: {}]
  %s8 = sld [smem:[#allocation0]]
  $region61: #{tpu_custom_call.1} parent=0
    _
  %s10 = ssub.s32 1, %s8
  %s11 = scalar_select 0, %s10, %s8
  $region1: #{tpu_custom_call.1} parent=0
    #allocation2 [shape = 'u8[32768]{0}', space=vmem, size = 0x8000, scoped, tag = 'output window, operand 0']
    #allocation3 [shape = 's32[2]{0}', space=sflag, size = 0x8, scoped, tag = 'scoped memory for tpu_custom_call.1']
    %12 = vsyncpa [#allocation3], 0
    %s13 = scalar_lea.sflag [#allocation3], 1
    %14 = vsyncpa %s13, 0
    loop: start=0, step=1, limit=4
    $region2: #{tpu_custom_call.1} parent=1 // loop_pre_header
      _
    $region3: #{tpu_custom_call.1} parent=1 // loop_header
      %s16 = sphi 0, %s20
      %p17 = scmp.ge.s32.totalorder %s16, 4
      %s26 = sphi 0, %s28
      %s29 = sphi 0, %s26
      %s30 = sphi 0, %s29
      %s46 = sphi 0, %s30
      %s52 = sphi 0, %s54
      %s55 = sphi 0, %s52
      %s56 = sphi 0, %s55
      %s72 = sphi 0, %s56
      %s78 = sphi 0, %s80
      %s81 = sphi 0, %s78
      %s82 = sphi 0, %s81
      %s98 = sphi 0, %s82
      %s104 = sphi 0, %s106
      %s107 = sphi 0, %s104
      %s108 = sphi 0, %s107
      %s124 = sphi 0, %s108
      %s128 = sphi 0, %s128
      %s130 = sphi 0, %s128
      %s131 = sphi 0, %s130
      %s145 = sphi 0, %s131
      %s149 = sphi 0, %s149
      %s151 = sphi 0, %s149
      %s152 = sphi 0, %s151
      %s166 = sphi 0, %s152
      %s170 = sphi 0, %s170
      %s172 = sphi 0, %s170
      %s173 = sphi 0, %s172
      %s187 = sphi 0, %s173
      %s193 = sphi 0, %s195
      %s196 = sphi 0, %s193
      %s197 = sphi 0, %s196
      %s213 = sphi 0, %s197
    $region4: #{tpu_custom_call.1} parent=1 // loop_header_branch
      %19 = sbr.rel (%p17) target = $region8
    $region5: #{tpu_custom_call.1} parent=1 // loop_body
      %s21 = ssub.s32 %s16, 1
      %s22 = ssub.s32 %s16, 2
      %s23 = sadd.s32 %s16, 1
      %s24 = ssub.s32 %s16, %s23
      %p25 = scmp.eq.s32.totalorder %s24, 0
      %s27 = sadd.s32 %s26, 1
      %s28 = scalar_select %p25, %s26, %s27
      %p31 = pneg %p25
      %p32 = scmp.eq.s32.totalorder %s16, 1
      %p33 = por %p31, %p32
      %p34 = scmp.ne.s32.totalorder %s26, %s29
      %p35 = scmp.eq.s32.totalorder %s16, 0
      %p36 = por %p34, %p35
      %p37 = scmp.ne.s32.totalorder %s26, %s29
      %p38 = scmp.eq.s32.totalorder %s21, 1
      %p39 = por %p37, %p38
      %p40 = scmp.ne.s32.totalorder %s29, %s30
      %p41 = scmp.eq.s32.totalorder %s21, 0
      %p42 = por %p40, %p41
      %p43 = scmp.ne.s32.totalorder %s29, %s30
      %p44 = scmp.eq.s32.totalorder %s22, 1
      %p45 = por %p43, %p44
      %p47 = scmp.ne.s32.totalorder %s30, %s46
      %p48 = scmp.eq.s32.totalorder %s22, 0
      %p49 = por %p47, %p48
      %s50 = ssub.s32 %s16, %s23
      %p51 = scmp.eq.s32.totalorder %s50, 0
      %s53 = sadd.s32 %s52, 1
      %s54 = scalar_select %p51, %s52, %s53
      %p57 = pneg %p51
      %p58 = scmp.eq.s32.totalorder %s16, 1
      %p59 = por %p57, %p58
      %p60 = scmp.ne.s32.totalorder %s52, %s55
      %p61 = scmp.eq.s32.totalorder %s16, 0
      %p62 = por %p60, %p61
      %p63 = scmp.ne.s32.totalorder %s52, %s55
      %p64 = scmp.eq.s32.totalorder %s21, 1
      %p65 = por %p63, %p64
      %p66 = scmp.ne.s32.totalorder %s55, %s56
      %p67 = scmp.eq.s32.totalorder %s21, 0
      %p68 = por %p66, %p67
      %p69 = scmp.ne.s32.totalorder %s55, %s56
      %p70 = scmp.eq.s32.totalorder %s22, 1
      %p71 = por %p69, %p70
      %p73 = scmp.ne.s32.totalorder %s56, %s72
      %p74 = scmp.eq.s32.totalorder %s22, 0
      %p75 = por %p73, %p74
      %s76 = ssub.s32 %s16, %s23
      %p77 = scmp.eq.s32.totalorder %s76, 0
      %s79 = sadd.s32 %s78, 1
      %s80 = scalar_select %p77, %s78, %s79
      %p83 = pneg %p77
      %p84 = scmp.eq.s32.totalorder %s16, 1
      %p85 = por %p83, %p84
      %p86 = scmp.ne.s32.totalorder %s78, %s81
      %p87 = scmp.eq.s32.totalorder %s16, 0
      %p88 = por %p86, %p87
      %p89 = scmp.ne.s32.totalorder %s78, %s81
      %p90 = scmp.eq.s32.totalorder %s21, 1
      %p91 = por %p89, %p90
      %p92 = scmp.ne.s32.totalorder %s81, %s82
      %p93 = scmp.eq.s32.totalorder %s21, 0
      %p94 = por %p92, %p93
      %p95 = scmp.ne.s32.totalorder %s81, %s82
      %p96 = scmp.eq.s32.totalorder %s22, 1
      %p97 = por %p95, %p96
      %p99 = scmp.ne.s32.totalorder %s82, %s98
      %p100 = scmp.eq.s32.totalorder %s22, 0
      %p101 = por %p99, %p100
      %s102 = ssub.s32 %s16, %s23
      %p103 = scmp.eq.s32.totalorder %s102, 0
      %s105 = sadd.s32 %s104, 1
      %s106 = scalar_select %p103, %s104, %s105
      %p109 = pneg %p103
      %p110 = scmp.eq.s32.totalorder %s16, 1
      %p111 = por %p109, %p110
      %p112 = scmp.ne.s32.totalorder %s104, %s107
      %p113 = scmp.eq.s32.totalorder %s16, 0
      %p114 = por %p112, %p113
      %p115 = scmp.ne.s32.totalorder %s104, %s107
      %p116 = scmp.eq.s32.totalorder %s21, 1
      %p117 = por %p115, %p116
      %p118 = scmp.ne.s32.totalorder %s107, %s108
      %p119 = scmp.eq.s32.totalorder %s21, 0
      %p120 = por %p118, %p119
      %p121 = scmp.ne.s32.totalorder %s107, %s108
      %p122 = scmp.eq.s32.totalorder %s22, 1
      %p123 = por %p121, %p122
      %p125 = scmp.ne.s32.totalorder %s108, %s124
      %p126 = scmp.eq.s32.totalorder %s22, 0
      %p127 = por %p125, %p126
      %s129 = sadd.s32 %s128, 1
      %p132 = scmp.eq.s32.totalorder %s16, 1
      %p133 = scmp.ne.s32.totalorder %s128, %s130
      %p134 = scmp.eq.s32.totalorder %s16, 0
      %p135 = por %p133, %p134
      %p136 = scmp.ne.s32.totalorder %s128, %s130
      %p137 = scmp.eq.s32.totalorder %s21, 1
      %p138 = por %p136, %p137
      %p139 = scmp.ne.s32.totalorder %s130, %s131
      %p140 = scmp.eq.s32.totalorder %s21, 0
      %p141 = por %p139, %p140
      %p142 = scmp.ne.s32.totalorder %s130, %s131
      %p143 = scmp.eq.s32.totalorder %s22, 1
      %p144 = por %p142, %p143
      %p146 = scmp.ne.s32.totalorder %s131, %s145
      %p147 = scmp.eq.s32.totalorder %s22, 0
      %p148 = por %p146, %p147
      %s150 = sadd.s32 %s149, 1
      %p153 = scmp.eq.s32.totalorder %s16, 1
      %p154 = scmp.ne.s32.totalorder %s149, %s151
      %p155 = scmp.eq.s32.totalorder %s16, 0
      %p156 = por %p154, %p155
      %p157 = scmp.ne.s32.totalorder %s149, %s151
      %p158 = scmp.eq.s32.totalorder %s21, 1
      %p159 = por %p157, %p158
      %p160 = scmp.ne.s32.totalorder %s151, %s152
      %p161 = scmp.eq.s32.totalorder %s21, 0
      %p162 = por %p160, %p161
      %p163 = scmp.ne.s32.totalorder %s151, %s152
      %p164 = scmp.eq.s32.totalorder %s22, 1
      %p165 = por %p163, %p164
      %p167 = scmp.ne.s32.totalorder %s152, %s166
      %p168 = scmp.eq.s32.totalorder %s22, 0
      %p169 = por %p167, %p168
      %s171 = sadd.s32 %s170, 1
      %p174 = scmp.eq.s32.totalorder %s16, 1
      %p175 = scmp.ne.s32.totalorder %s170, %s172
      %p176 = scmp.eq.s32.totalorder %s16, 0
      %p177 = por %p175, %p176
      %p178 = scmp.ne.s32.totalorder %s170, %s172
      %p179 = scmp.eq.s32.totalorder %s21, 1
      %p180 = por %p178, %p179
      %p181 = scmp.ne.s32.totalorder %s172, %s173
      %p182 = scmp.eq.s32.totalorder %s21, 0
      %p183 = por %p181, %p182
      %p184 = scmp.ne.s32.totalorder %s172, %s173
      %p185 = scmp.eq.s32.totalorder %s22, 1
      %p186 = por %p184, %p185
      %p188 = scmp.ne.s32.totalorder %s173, %s187
      %p189 = scmp.eq.s32.totalorder %s22, 0
      %p190 = por %p188, %p189
      %s191 = ssub.s32 %s16, %s23
      %p192 = scmp.eq.s32.totalorder %s191, 0
      %s194 = sadd.s32 %s193, 1
      %s195 = scalar_select %p192, %s193, %s194
      %p198 = pneg %p192
      %p199 = scmp.eq.s32.totalorder %s16, 1
      %p200 = por %p198, %p199
      %p201 = scmp.ne.s32.totalorder %s193, %s196
      %p202 = scmp.eq.s32.totalorder %s16, 0
      %p203 = por %p201, %p202
      %p204 = scmp.ne.s32.totalorder %s193, %s196
      %p205 = scmp.eq.s32.totalorder %s21, 1
      %p206 = por %p204, %p205
      %p207 = scmp.ne.s32.totalorder %s196, %s197
      %p208 = scmp.eq.s32.totalorder %s21, 0
      %p209 = por %p207, %p208
      %p210 = scmp.ne.s32.totalorder %s196, %s197
      %p211 = scmp.eq.s32.totalorder %s22, 1
      %p212 = por %p210, %p211
      %p214 = scmp.ne.s32.totalorder %s197, %s213
      %p215 = scmp.eq.s32.totalorder %s22, 0
      %p216 = por %p214, %p215
      %p217 = scmp.le.s32.totalorder 1, %s16
      %p218 = scmp.lt.s32.totalorder %s16, 3
      %p219 = pnand %p217, %p218
      %p220 = pneg %p219
      // Predicated region
      $region9: #{tpu_custom_call.1} parent=5 // pred_check
        _
      $region10: #{tpu_custom_call.1} parent=5 // pred_check_branch
        %222 = sbr.rel (%p219) target = $region12
      $region11: #{tpu_custom_call.1} parent=5 // pred_region
        %s223 = ssub.s32 %s16, 1
        // Predicated region
        $region13: #{tpu_custom_call.1} parent=11 // pred_check
          %p224 = pneg %p141
        $region14: #{tpu_custom_call.1} parent=11 // pred_check_branch
          %226 = sbr.rel (%p224) target = $region16
        $region15: #{tpu_custom_call.1} parent=11 // pred_region
          _
        $region16: #{tpu_custom_call.1} parent=11 // pred_fallthru
          _
        // Predicated region
        $region17: #{tpu_custom_call.1} parent=11 // pred_check
          %p227 = pneg %p162
        $region18: #{tpu_custom_call.1} parent=11 // pred_check_branch
          %229 = sbr.rel (%p227) target = $region20
        $region19: #{tpu_custom_call.1} parent=11 // pred_region
          _
        $region20: #{tpu_custom_call.1} parent=11 // pred_fallthru
          _
        // Predicated region
        $region21: #{tpu_custom_call.1} parent=11 // pred_check
          %p230 = pneg %p183
        $region22: #{tpu_custom_call.1} parent=11 // pred_check_branch
          %232 = sbr.rel (%p230) target = $region24
        $region23: #{tpu_custom_call.1} parent=11 // pred_region
          _
        $region24: #{tpu_custom_call.1} parent=11 // pred_fallthru
          _
      $region12: #{tpu_custom_call.1} parent=5 // pred_fallthru
        _
      %p233 = scmp.lt.s32.totalorder %s16, 2
      // Predicated region
      $region25: #{tpu_custom_call.1} parent=5 // pred_check
        %p234 = pneg %p233
      $region26: #{tpu_custom_call.1} parent=5 // pred_check_branch
        %236 = sbr.rel (%p234) target = $region28
      $region27: #{tpu_custom_call.1} parent=5 // pred_region
        // Predicated region
        $region29: #{tpu_custom_call.1} parent=27 // pred_check
          %p237 = pneg %p36
        $region30: #{tpu_custom_call.1} parent=27 // pred_check_branch
          %239 = sbr.rel (%p237) target = $region32
        $region31: #{tpu_custom_call.1} parent=27 // pred_region
          %p240 = scmp.lt.s32.totalorder %s16, 1
          %s241 = scalar_select %p240, %s16, 1
          %s242 = smul.addr %s241, 22
          %s243 = smul.addr %s242, 4
          %s244 = scalar_lea.vmem %s0, %s243
        $region32: #{tpu_custom_call.1} parent=27 // pred_fallthru
          _
        // Predicated region
        $region33: #{tpu_custom_call.1} parent=27 // pred_check
          %p245 = pneg %p62
        $region34: #{tpu_custom_call.1} parent=27 // pred_check_branch
          %247 = sbr.rel (%p245) target = $region36
        $region35: #{tpu_custom_call.1} parent=27 // pred_region
          %p248 = scmp.lt.s32.totalorder %s16, 1
          %s249 = scalar_select %p248, %s16, 1
          %s250 = smul.addr %s249, 22
          %s251 = smul.addr %s250, 4
          %s252 = scalar_lea.vmem %s1, %s251
        $region36: #{tpu_custom_call.1} parent=27 // pred_fallthru
          _
        // Predicated region
        $region37: #{tpu_custom_call.1} parent=27 // pred_check
          %p253 = pneg %p88
        $region38: #{tpu_custom_call.1} parent=27 // pred_check_branch
          %255 = sbr.rel (%p253) target = $region40
        $region39: #{tpu_custom_call.1} parent=27 // pred_region
          %p256 = scmp.lt.s32.totalorder %s16, 1
          %s257 = scalar_select %p256, %s16, 1
          %s258 = smul.addr %s257, 22
          %s259 = smul.addr %s258, 4
          %s260 = scalar_lea.vmem %s2, %s259
        $region40: #{tpu_custom_call.1} parent=27 // pred_fallthru
          _
        // Predicated region
        $region41: #{tpu_custom_call.1} parent=27 // pred_check
          %p261 = pneg %p114
        $region42: #{tpu_custom_call.1} parent=27 // pred_check_branch
          %263 = sbr.rel (%p261) target = $region44
        $region43: #{tpu_custom_call.1} parent=27 // pred_region
          %p264 = scmp.lt.s32.totalorder %s16, 1
          %s265 = scalar_select %p264, %s16, 1
          %s266 = smul.addr %s265, 22
          %s267 = smul.addr %s266, 4
          %s268 = scalar_lea.vmem %s3, %s267
        $region44: #{tpu_custom_call.1} parent=27 // pred_fallthru
          _
      $region28: #{tpu_custom_call.1} parent=5 // pred_fallthru
        _
      %p269 = scmp.le.s32.totalorder 1, %s16
      %p270 = scmp.lt.s32.totalorder %s16, 3
      %p271 = pnand %p269, %p270
      %p272 = pneg %p271
      // Predicated region
      $region45: #{tpu_custom_call.1} parent=5 // pred_check
        _
      $region46: #{tpu_custom_call.1} parent=5 // pred_check_branch
        %274 = sbr.rel (%p271) target = $region48
      $region47: #{tpu_custom_call.1} parent=5 // pred_region
        %s275 = ssub.s32 %s16, 1
        %p276 = scmp.lt.s32.totalorder %s21, 1
        %s277 = scalar_select %p276, %s21, 1
        %s278 = smul.addr %s277, 22
        %s279 = smul.addr %s278, 4
        %s280 = scalar_lea.vmem %s0, %s279
        %p281 = pneg %p42
        %p282 = pneg %p39
        %p283 = scmp.lt.s32.totalorder %s21, 1
        %s284 = scalar_select %p283, %s21, 1
        %s285 = smul.addr %s284, 22
        %s286 = smul.addr %s285, 4
        %s287 = scalar_lea.vmem %s1, %s286
        %p288 = pneg %p68
        %p289 = pneg %p65
        %p290 = scmp.lt.s32.totalorder %s21, 1
        %s291 = scalar_select %p290, %s21, 1
        %s292 = smul.addr %s291, 22
        %s293 = smul.addr %s292, 4
        %s294 = scalar_lea.vmem %s2, %s293
        %p295 = pneg %p94
        %p296 = pneg %p91
        %p297 = scmp.lt.s32.totalorder %s21, 1
        %s298 = scalar_select %p297, %s21, 1
        %s299 = smul.addr %s298, 22
        %s300 = smul.addr %s299, 4
        %s301 = scalar_lea.vmem %s3, %s300
        %p302 = pneg %p120
        %p303 = pneg %p117
        %p304 = pneg %p141
        %p305 = pneg %p138
        %p306 = pneg %p162
        %p307 = pneg %p159
        %p308 = pneg %p183
        %p309 = pneg %p180
        %p310 = pneg %p209
        %p311 = pneg %p206
        %s312 = sand.u32 %s196, 1
        %s313 = scalar_lea.sflag [#allocation3], %s312
        %s314 = sand.u32 %s196, 1
        %s315 = smul.addr %s314, 32
        %s316 = scalar_lea.vmem [#allocation2], %s315
        %p317 = scmp.lt.s32.totalorder %s21, 1
        %s318 = scalar_select %p317, %s21, 1
        %s319 = smul.addr %s318, 22
        %s320 = smul.addr %s319, 4
        %s321 = scalar_lea.vmem %s0, %s320
        %p322 = scmp.lt.s32.totalorder %s21, 1
        %s323 = scalar_select %p322, %s21, 1
        %s324 = smul.addr %s323, 22
        %s325 = smul.addr %s324, 4
        %s326 = scalar_lea.vmem %s1, %s325
        %p327 = scmp.lt.s32.totalorder %s21, 1
        %s328 = scalar_select %p327, %s21, 1
        %s329 = smul.addr %s328, 22
        %s330 = smul.addr %s329, 4
        %s331 = scalar_lea.vmem %s2, %s330
        %p332 = scmp.lt.s32.totalorder %s21, 1
        %s333 = scalar_select %p332, %s21, 1
        %s334 = smul.addr %s333, 22
        %s335 = smul.addr %s334, 4
        %s336 = scalar_lea.vmem %s3, %s335
        %v338 = vld [vmem:[%s321] sm:$0xf]
        %v339 = vld [vmem:[%s321 + $0x8] sm:$0xf]
        %v340 = vld [vmem:[%s321 + $0x10] sm:$0xf]
        %v341 = vld [vmem:[%s321 + $0x18] sm:$0xf]
        %v342 = vld [vmem:[%s321 + $0x20] sm:$0xf]
        %v343 = vld [vmem:[%s321 + $0x28] sm:$0xf]
        %v344 = vld [vmem:[%s321 + $0x30] sm:$0xf]
        %v345 = vld [vmem:[%s321 + $0x38] sm:$0xf]
        %v346 = vld [vmem:[%s321 + $0x4] sm:$0x1]
        %v347 = vld [vmem:[%s321 + $0xc] sm:$0x1]
        %v348 = vld [vmem:[%s321 + $0x14] sm:$0x1]
        %v349 = vld [vmem:[%s321 + $0x1c] sm:$0x1]
        %v350 = vld [vmem:[%s321 + $0x24] sm:$0x1]
        %v351 = vld [vmem:[%s321 + $0x2c] sm:$0x1]
        %v352 = vld [vmem:[%s321 + $0x34] sm:$0x1]
        %v353 = vld [vmem:[%s321 + $0x3c] sm:$0x1]
        %vm354 = vsmask.f32 3328
        %vm355 = vsmask.f32 7440
        %vm356 = vmor %vm354, %vm355
        %v358 = vshrl.u32 %v338, 16
        %v360 = vrot.slane %v358, 4
        %v361 = vshll.u32 %v338, 16
        %v363 = vrot.slane %v361, 5
        %v364 = vor.u32 %v360, %v363
        %v365 = vrot.slane %v364, 4
        %v367 = vshll.u32 %v346, 16
        %v369 = vrot.slane %v367, 5
        %v370 = vsel %vm356, %v365, %v369
        %v372 = vshrl.u32 %v339, 16
        %v374 = vrot.slane %v372, 4
        %v375 = vshll.u32 %v339, 16
        %v377 = vrot.slane %v375, 5
        %v378 = vor.u32 %v374, %v377
        %v379 = vrot.slane %v378, 4
        %v381 = vshll.u32 %v347, 16
        %v383 = vrot.slane %v381, 5
        %v384 = vsel %vm356, %v379, %v383
        %v386 = vshrl.u32 %v340, 16
        %v388 = vrot.slane %v386, 4
        %v389 = vshll.u32 %v340, 16
        %v391 = vrot.slane %v389, 5
        %v392 = vor.u32 %v388, %v391
        %v393 = vrot.slane %v392, 4
        %v395 = vshll.u32 %v348, 16
        %v397 = vrot.slane %v395, 5
        %v398 = vsel %vm356, %v393, %v397
        %v400 = vshrl.u32 %v341, 16
        %v402 = vrot.slane %v400, 4
        %v403 = vshll.u32 %v341, 16
        %v405 = vrot.slane %v403, 5
        %v406 = vor.u32 %v402, %v405
        %v407 = vrot.slane %v406, 4
        %v409 = vshll.u32 %v349, 16
        %v411 = vrot.slane %v409, 5
        %v412 = vsel %vm356, %v407, %v411
        %v414 = vshrl.u32 %v342, 16
        %v416 = vrot.slane %v414, 4
        %v417 = vshll.u32 %v342, 16
        %v419 = vrot.slane %v417, 5
        %v420 = vor.u32 %v416, %v419
        %v421 = vrot.slane %v420, 4
        %v423 = vshll.u32 %v350, 16
        %v425 = vrot.slane %v423, 5
        %v426 = vsel %vm356, %v421, %v425
        %v428 = vshrl.u32 %v343, 16
        %v430 = vrot.slane %v428, 4
        %v431 = vshll.u32 %v343, 16
        %v433 = vrot.slane %v431, 5
        %v434 = vor.u32 %v430, %v433
        %v435 = vrot.slane %v434, 4
        %v437 = vshll.u32 %v351, 16
        %v439 = vrot.slane %v437, 5
        %v440 = vsel %vm356, %v435, %v439
        %v442 = vshrl.u32 %v344, 16
        %v444 = vrot.slane %v442, 4
        %v445 = vshll.u32 %v344, 16
        %v447 = vrot.slane %v445, 5
        %v448 = vor.u32 %v444, %v447
        %v449 = vrot.slane %v448, 4
        %v451 = vshll.u32 %v352, 16
        %v453 = vrot.slane %v451, 5
        %v454 = vsel %vm356, %v449, %v453
        %v456 = vshrl.u32 %v345, 16
        %v458 = vrot.slane %v456, 4
        %v459 = vshll.u32 %v345, 16
        %v461 = vrot.slane %v459, 5
        %v462 = vor.u32 %v458, %v461
        %v463 = vrot.slane %v462, 4
        %v465 = vshll.u32 %v353, 16
        %v467 = vrot.slane %v465, 5
        %v468 = vsel %vm356, %v463, %v467
        %v469 = vld [vmem:[%s321] sm:$0xe]
        %v470 = vld [vmem:[%s321 + $0x8] sm:$0xe]
        %v471 = vld [vmem:[%s321 + $0x10] sm:$0xe]
        %v472 = vld [vmem:[%s321 + $0x18] sm:$0xe]
        %v473 = vld [vmem:[%s321 + $0x20] sm:$0xe]
        %v474 = vld [vmem:[%s321 + $0x28] sm:$0xe]
        %v475 = vld [vmem:[%s321 + $0x30] sm:$0xe]
        %v476 = vld [vmem:[%s321 + $0x38] sm:$0xe]
        %vm493 = vcmask 1042432
        %vm494 = vcmask 1046532
        %vm495 = vmor %vm493, %vm494
        %v496 = vrot.slane %v469, 5
        %v497 = vrot.slane %v496, 4
        %v498 = vrot.slane %v346, 5
        %v499 = vsel %vm495, %v497, %v498
        %v500 = vrot.slane %v470, 5
        %v501 = vrot.slane %v500, 4
        %v502 = vrot.slane %v347, 5
        %v503 = vsel %vm495, %v501, %v502
        %v504 = vrot.slane %v471, 5
        %v505 = vrot.slane %v504, 4
        %v506 = vrot.slane %v348, 5
        %v507 = vsel %vm495, %v505, %v506
        %v508 = vrot.slane %v472, 5
        %v509 = vrot.slane %v508, 4
        %v510 = vrot.slane %v349, 5
        %v511 = vsel %vm495, %v509, %v510
        %v512 = vrot.slane %v473, 5
        %v513 = vrot.slane %v512, 4
        %v514 = vrot.slane %v350, 5
        %v515 = vsel %vm495, %v513, %v514
        %v516 = vrot.slane %v474, 5
        %v517 = vrot.slane %v516, 4
        %v518 = vrot.slane %v351, 5
        %v519 = vsel %vm495, %v517, %v518
        %v520 = vrot.slane %v475, 5
        %v521 = vrot.slane %v520, 4
        %v522 = vrot.slane %v352, 5
        %v523 = vsel %vm495, %v521, %v522
        %v524 = vrot.slane %v476, 5
        %v525 = vrot.slane %v524, 4
        %v526 = vrot.slane %v353, 5
        %v527 = vsel %vm495, %v525, %v526
        %v528 = vld [vmem:[%s321 + $0x4] sm:$0x3]
        %v529 = vld [vmem:[%s321 + $0xc] sm:$0x3]
        %v530 = vld [vmem:[%s321 + $0x14] sm:$0x3]
        %v531 = vld [vmem:[%s321 + $0x1c] sm:$0x3]
        %v532 = vld [vmem:[%s321 + $0x24] sm:$0x3]
        %v533 = vld [vmem:[%s321 + $0x2c] sm:$0x3]
        %v534 = vld [vmem:[%s321 + $0x34] sm:$0x3]
        %v535 = vld [vmem:[%s321 + $0x3c] sm:$0x3]
        %vm536 = vsmask.f32 2304
        %vm537 = vsmask.f32 6416
        %vm538 = vmor %vm536, %vm537
        %v540 = vshrl.u32 %v469, 16
        %v542 = vrot.slane %v540, 5
        %v543 = vshll.u32 %v469, 16
        %v545 = vrot.slane %v543, 6
        %v546 = vor.u32 %v542, %v545
        %v547 = vrot.slane %v546, 4
        %v549 = vshrl.u32 %v528, 16
        %v551 = vrot.slane %v549, 5
        %v552 = vshll.u32 %v528, 16
        %v554 = vrot.slane %v552, 6
        %v555 = vor.u32 %v551, %v554
        %v556 = vsel %vm538, %v547, %v555
        %v558 = vshrl.u32 %v470, 16
        %v560 = vrot.slane %v558, 5
        %v561 = vshll.u32 %v470, 16
        %v563 = vrot.slane %v561, 6
        %v564 = vor.u32 %v560, %v563
        %v565 = vrot.slane %v564, 4
        %v567 = vshrl.u32 %v529, 16
        %v569 = vrot.slane %v567, 5
        %v570 = vshll.u32 %v529, 16
        %v572 = vrot.slane %v570, 6
        %v573 = vor.u32 %v569, %v572
        %v574 = vsel %vm538, %v565, %v573
        %v576 = vshrl.u32 %v471, 16
        %v578 = vrot.slane %v576, 5
        %v579 = vshll.u32 %v471, 16
        %v581 = vrot.slane %v579, 6
        %v582 = vor.u32 %v578, %v581
        %v583 = vrot.slane %v582, 4
        %v585 = vshrl.u32 %v530, 16
        %v587 = vrot.slane %v585, 5
        %v588 = vshll.u32 %v530, 16
        %v590 = vrot.slane %v588, 6
        %v591 = vor.u32 %v587, %v590
        %v592 = vsel %vm538, %v583, %v591
        %v594 = vshrl.u32 %v472, 16
        %v596 = vrot.slane %v594, 5
        %v597 = vshll.u32 %v472, 16
        %v599 = vrot.slane %v597, 6
        %v600 = vor.u32 %v596, %v599
        %v601 = vrot.slane %v600, 4
        %v603 = vshrl.u32 %v531, 16
        %v605 = vrot.slane %v603, 5
        %v606 = vshll.u32 %v531, 16
        %v608 = vrot.slane %v606, 6
        %v609 = vor.u32 %v605, %v608
        %v610 = vsel %vm538, %v601, %v609
        %v612 = vshrl.u32 %v473, 16
        %v614 = vrot.slane %v612, 5
        %v615 = vshll.u32 %v473, 16
        %v617 = vrot.slane %v615, 6
        %v618 = vor.u32 %v614, %v617
        %v619 = vrot.slane %v618, 4
        %v621 = vshrl.u32 %v532, 16
        %v623 = vrot.slane %v621, 5
        %v624 = vshll.u32 %v532, 16
        %v626 = vrot.slane %v624, 6
        %v627 = vor.u32 %v623, %v626
        %v628 = vsel %vm538, %v619, %v627
        %v630 = vshrl.u32 %v474, 16
        %v632 = vrot.slane %v630, 5
        %v633 = vshll.u32 %v474, 16
        %v635 = vrot.slane %v633, 6
        %v636 = vor.u32 %v632, %v635
        %v637 = vrot.slane %v636, 4
        %v639 = vshrl.u32 %v533, 16
        %v641 = vrot.slane %v639, 5
        %v642 = vshll.u32 %v533, 16
        %v644 = vrot.slane %v642, 6
        %v645 = vor.u32 %v641, %v644
        %v646 = vsel %vm538, %v637, %v645
        %v648 = vshrl.u32 %v475, 16
        %v650 = vrot.slane %v648, 5
        %v651 = vshll.u32 %v475, 16
        %v653 = vrot.slane %v651, 6
        %v654 = vor.u32 %v650, %v653
        %v655 = vrot.slane %v654, 4
        %v657 = vshrl.u32 %v534, 16
        %v659 = vrot.slane %v657, 5
        %v660 = vshll.u32 %v534, 16
        %v662 = vrot.slane %v660, 6
        %v663 = vor.u32 %v659, %v662
        %v664 = vsel %vm538, %v655, %v663
        %v666 = vshrl.u32 %v476, 16
        %v668 = vrot.slane %v666, 5
        %v669 = vshll.u32 %v476, 16
        %v671 = vrot.slane %v669, 6
        %v672 = vor.u32 %v668, %v671
        %v673 = vrot.slane %v672, 4
        %v675 = vshrl.u32 %v535, 16
        %v677 = vrot.slane %v675, 5
        %v678 = vshll.u32 %v535, 16
        %v680 = vrot.slane %v678, 6
        %v681 = vor.u32 %v677, %v680
        %v682 = vsel %vm538, %v673, %v681
        %s683 = scalar_lea.vmem %s321, 8
        %v684 = vld [vmem:[%s683] sm:$0xf]
        %v685 = vld [vmem:[%s683 + $0x8] sm:$0xf]
        %v686 = vld [vmem:[%s683 + $0x10] sm:$0xf]
        %v687 = vld [vmem:[%s683 + $0x18] sm:$0xf]
        %v688 = vld [vmem:[%s683 + $0x20] sm:$0xf]
        %v689 = vld [vmem:[%s683 + $0x28] sm:$0xf]
        %v690 = vld [vmem:[%s683 + $0x30] sm:$0xf]
        %v691 = vld [vmem:[%s683 + $0x38] sm:$0xf]
        %v692 = vld [vmem:[%s683 + $0x4] sm:$0x1]
        %v693 = vld [vmem:[%s683 + $0xc] sm:$0x1]
        %v694 = vld [vmem:[%s683 + $0x14] sm:$0x1]
        %v695 = vld [vmem:[%s683 + $0x1c] sm:$0x1]
        %v696 = vld [vmem:[%s683 + $0x24] sm:$0x1]
        %v697 = vld [vmem:[%s683 + $0x2c] sm:$0x1]
        %v698 = vld [vmem:[%s683 + $0x34] sm:$0x1]
        %v699 = vld [vmem:[%s683 + $0x3c] sm:$0x1]
        %v701 = vshrl.u32 %v684, 16
        %v703 = vrot.slane %v701, 4
        %v704 = vshll.u32 %v684, 16
        %v706 = vrot.slane %v704, 5
        %v707 = vor.u32 %v703, %v706
        %v708 = vrot.slane %v707, 4
        %v710 = vshll.u32 %v692, 16
        %v712 = vrot.slane %v710, 5
        %v713 = vsel %vm356, %v708, %v712
        %v715 = vshrl.u32 %v685, 16
        %v717 = vrot.slane %v715, 4
        %v718 = vshll.u32 %v685, 16
        %v720 = vrot.slane %v718, 5
        %v721 = vor.u32 %v717, %v720
        %v722 = vrot.slane %v721, 4
        %v724 = vshll.u32 %v693, 16
        %v726 = vrot.slane %v724, 5
        %v727 = vsel %vm356, %v722, %v726
        %v729 = vshrl.u32 %v686, 16
        %v731 = vrot.slane %v729, 4
        %v732 = vshll.u32 %v686, 16
        %v734 = vrot.slane %v732, 5
        %v735 = vor.u32 %v731, %v734
        %v736 = vrot.slane %v735, 4
        %v738 = vshll.u32 %v694, 16
        %v740 = vrot.slane %v738, 5
        %v741 = vsel %vm356, %v736, %v740
        %v743 = vshrl.u32 %v687, 16
        %v745 = vrot.slane %v743, 4
        %v746 = vshll.u32 %v687, 16
        %v748 = vrot.slane %v746, 5
        %v749 = vor.u32 %v745, %v748
        %v750 = vrot.slane %v749, 4
        %v752 = vshll.u32 %v695, 16
        %v754 = vrot.slane %v752, 5
        %v755 = vsel %vm356, %v750, %v754
        %v757 = vshrl.u32 %v688, 16
        %v759 = vrot.slane %v757, 4
        %v760 = vshll.u32 %v688, 16
        %v762 = vrot.slane %v760, 5
        %v763 = vor.u32 %v759, %v762
        %v764 = vrot.slane %v763, 4
        %v766 = vshll.u32 %v696, 16
        %v768 = vrot.slane %v766, 5
        %v769 = vsel %vm356, %v764, %v768
        %v771 = vshrl.u32 %v689, 16
        %v773 = vrot.slane %v771, 4
        %v774 = vshll.u32 %v689, 16
        %v776 = vrot.slane %v774, 5
        %v777 = vor.u32 %v773, %v776
        %v778 = vrot.slane %v777, 4
        %v780 = vshll.u32 %v697, 16
        %v782 = vrot.slane %v780, 5
        %v783 = vsel %vm356, %v778, %v782
        %v785 = vshrl.u32 %v690, 16
        %v787 = vrot.slane %v785, 4
        %v788 = vshll.u32 %v690, 16
        %v790 = vrot.slane %v788, 5
        %v791 = vor.u32 %v787, %v790
        %v792 = vrot.slane %v791, 4
        %v794 = vshll.u32 %v698, 16
        %v796 = vrot.slane %v794, 5
        %v797 = vsel %vm356, %v792, %v796
        %v799 = vshrl.u32 %v691, 16
        %v801 = vrot.slane %v799, 4
        %v802 = vshll.u32 %v691, 16
        %v804 = vrot.slane %v802, 5
        %v805 = vor.u32 %v801, %v804
        %v806 = vrot.slane %v805, 4
        %v808 = vshll.u32 %v699, 16
        %v810 = vrot.slane %v808, 5
        %v811 = vsel %vm356, %v806, %v810
        %v812 = vld [vmem:[%s683] sm:$0xe]
        %v813 = vld [vmem:[%s683 + $0x8] sm:$0xe]
        %v814 = vld [vmem:[%s683 + $0x10] sm:$0xe]
        %v815 = vld [vmem:[%s683 + $0x18] sm:$0xe]
        %v816 = vld [vmem:[%s683 + $0x20] sm:$0xe]
        %v817 = vld [vmem:[%s683 + $0x28] sm:$0xe]
        %v818 = vld [vmem:[%s683 + $0x30] sm:$0xe]
        %v819 = vld [vmem:[%s683 + $0x38] sm:$0xe]
        %v836 = vrot.slane %v812, 5
        %v837 = vrot.slane %v836, 4
        %v838 = vrot.slane %v692, 5
        %v839 = vsel %vm495, %v837, %v838
        %v840 = vrot.slane %v813, 5
        %v841 = vrot.slane %v840, 4
        %v842 = vrot.slane %v693, 5
        %v843 = vsel %vm495, %v841, %v842
        %v844 = vrot.slane %v814, 5
        %v845 = vrot.slane %v844, 4
        %v846 = vrot.slane %v694, 5
        %v847 = vsel %vm495, %v845, %v846
        %v848 = vrot.slane %v815, 5
        %v849 = vrot.slane %v848, 4
        %v850 = vrot.slane %v695, 5
        %v851 = vsel %vm495, %v849, %v850
        %v852 = vrot.slane %v816, 5
        %v853 = vrot.slane %v852, 4
        %v854 = vrot.slane %v696, 5
        %v855 = vsel %vm495, %v853, %v854
        %v856 = vrot.slane %v817, 5
        %v857 = vrot.slane %v856, 4
        %v858 = vrot.slane %v697, 5
        %v859 = vsel %vm495, %v857, %v858
        %v860 = vrot.slane %v818, 5
        %v861 = vrot.slane %v860, 4
        %v862 = vrot.slane %v698, 5
        %v863 = vsel %vm495, %v861, %v862
        %v864 = vrot.slane %v819, 5
        %v865 = vrot.slane %v864, 4
        %v866 = vrot.slane %v699, 5
        %v867 = vsel %vm495, %v865, %v866
        %v868 = vld [vmem:[%s683 + $0x4] sm:$0x3]
        %v869 = vld [vmem:[%s683 + $0xc] sm:$0x3]
        %v870 = vld [vmem:[%s683 + $0x14] sm:$0x3]
        %v871 = vld [vmem:[%s683 + $0x1c] sm:$0x3]
        %v872 = vld [vmem:[%s683 + $0x24] sm:$0x3]
        %v873 = vld [vmem:[%s683 + $0x2c] sm:$0x3]
        %v874 = vld [vmem:[%s683 + $0x34] sm:$0x3]
        %v875 = vld [vmem:[%s683 + $0x3c] sm:$0x3]
        %v877 = vshrl.u32 %v812, 16
        %v879 = vrot.slane %v877, 5
        %v880 = vshll.u32 %v812, 16
        %v882 = vrot.slane %v880, 6
        %v883 = vor.u32 %v879, %v882
        %v884 = vrot.slane %v883, 4
        %v886 = vshrl.u32 %v868, 16
        %v888 = vrot.slane %v886, 5
        %v889 = vshll.u32 %v868, 16
        %v891 = vrot.slane %v889, 6
        %v892 = vor.u32 %v888, %v891
        %v893 = vsel %vm538, %v884, %v892
        %v895 = vshrl.u32 %v813, 16
        %v897 = vrot.slane %v895, 5
        %v898 = vshll.u32 %v813, 16
        %v900 = vrot.slane %v898, 6
        %v901 = vor.u32 %v897, %v900
        %v902 = vrot.slane %v901, 4
        %v904 = vshrl.u32 %v869, 16
        %v906 = vrot.slane %v904, 5
        %v907 = vshll.u32 %v869, 16
        %v909 = vrot.slane %v907, 6
        %v910 = vor.u32 %v906, %v909
        %v911 = vsel %vm538, %v902, %v910
        %v913 = vshrl.u32 %v814, 16
        %v915 = vrot.slane %v913, 5
        %v916 = vshll.u32 %v814, 16
        %v918 = vrot.slane %v916, 6
        %v919 = vor.u32 %v915, %v918
        %v920 = vrot.slane %v919, 4
        %v922 = vshrl.u32 %v870, 16
        %v924 = vrot.slane %v922, 5
        %v925 = vshll.u32 %v870, 16
        %v927 = vrot.slane %v925, 6
        %v928 = vor.u32 %v924, %v927
        %v929 = vsel %vm538, %v920, %v928
        %v931 = vshrl.u32 %v815, 16
        %v933 = vrot.slane %v931, 5
        %v934 = vshll.u32 %v815, 16
        %v936 = vrot.slane %v934, 6
        %v937 = vor.u32 %v933, %v936
        %v938 = vrot.slane %v937, 4
        %v940 = vshrl.u32 %v871, 16
        %v942 = vrot.slane %v940, 5
        %v943 = vshll.u32 %v871, 16
        %v945 = vrot.slane %v943, 6
        %v946 = vor.u32 %v942, %v945
        %v947 = vsel %vm538, %v938, %v946
        %v949 = vshrl.u32 %v816, 16
        %v951 = vrot.slane %v949, 5
        %v952 = vshll.u32 %v816, 16
        %v954 = vrot.slane %v952, 6
        %v955 = vor.u32 %v951, %v954
        %v956 = vrot.slane %v955, 4
        %v958 = vshrl.u32 %v872, 16
        %v960 = vrot.slane %v958, 5
        %v961 = vshll.u32 %v872, 16
        %v963 = vrot.slane %v961, 6
        %v964 = vor.u32 %v960, %v963
        %v965 = vsel %vm538, %v956, %v964
        %v967 = vshrl.u32 %v817, 16
        %v969 = vrot.slane %v967, 5
        %v970 = vshll.u32 %v817, 16
        %v972 = vrot.slane %v970, 6
        %v973 = vor.u32 %v969, %v972
        %v974 = vrot.slane %v973, 4
        %v976 = vshrl.u32 %v873, 16
        %v978 = vrot.slane %v976, 5
        %v979 = vshll.u32 %v873, 16
        %v981 = vrot.slane %v979, 6
        %v982 = vor.u32 %v978, %v981
        %v983 = vsel %vm538, %v974, %v982
        %v985 = vshrl.u32 %v818, 16
        %v987 = vrot.slane %v985, 5
        %v988 = vshll.u32 %v818, 16
        %v990 = vrot.slane %v988, 6
        %v991 = vor.u32 %v987, %v990
        %v992 = vrot.slane %v991, 4
        %v994 = vshrl.u32 %v874, 16
        %v996 = vrot.slane %v994, 5
        %v997 = vshll.u32 %v874, 16
        %v999 = vrot.slane %v997, 6
        %v1000 = vor.u32 %v996, %v999
        %v1001 = vsel %vm538, %v992, %v1000
        %v1003 = vshrl.u32 %v819, 16
        %v1005 = vrot.slane %v1003, 5
        %v1006 = vshll.u32 %v819, 16
        %v1008 = vrot.slane %v1006, 6
        %v1009 = vor.u32 %v1005, %v1008
        %v1010 = vrot.slane %v1009, 4
        %v1012 = vshrl.u32 %v875, 16
        %v1014 = vrot.slane %v1012, 5
        %v1015 = vshll.u32 %v875, 16
        %v1017 = vrot.slane %v1015, 6
        %v1018 = vor.u32 %v1014, %v1017
        %v1019 = vsel %vm538, %v1010, %v1018
        %s1020 = scalar_lea.vmem %s321, 16
        %v1021 = vld [vmem:[%s1020] sm:$0xf]
        %v1022 = vld [vmem:[%s1020 + $0x8] sm:$0xf]
        %v1023 = vld [vmem:[%s1020 + $0x10] sm:$0xf]
        %v1024 = vld [vmem:[%s1020 + $0x18] sm:$0xf]
        %v1025 = vld [vmem:[%s1020 + $0x20] sm:$0xf]
        %v1026 = vld [vmem:[%s1020 + $0x28] sm:$0xf]
        %v1027 = vld [vmem:[%s1020 + $0x30] sm:$0xf]
        %v1028 = vld [vmem:[%s1020 + $0x38] sm:$0xf]
        %v1029 = vld [vmem:[%s1020 + $0x4] sm:$0x1]
        %v1030 = vld [vmem:[%s1020 + $0xc] sm:$0x1]
        %v1031 = vld [vmem:[%s1020 + $0x14] sm:$0x1]
        %v1032 = vld [vmem:[%s1020 + $0x1c] sm:$0x1]
        %v1033 = vld [vmem:[%s1020 + $0x24] sm:$0x1]
        %v1034 = vld [vmem:[%s1020 + $0x2c] sm:$0x1]
        %v1035 = vld [vmem:[%s1020 + $0x34] sm:$0x1]
        %v1036 = vld [vmem:[%s1020 + $0x3c] sm:$0x1]
        %v1038 = vshrl.u32 %v1021, 16
        %v1040 = vrot.slane %v1038, 4
        %v1041 = vshll.u32 %v1021, 16
        %v1043 = vrot.slane %v1041, 5
        %v1044 = vor.u32 %v1040, %v1043
        %v1045 = vrot.slane %v1044, 4
        %v1047 = vshll.u32 %v1029, 16
        %v1049 = vrot.slane %v1047, 5
        %v1050 = vsel %vm356, %v1045, %v1049
        %v1052 = vshrl.u32 %v1022, 16
        %v1054 = vrot.slane %v1052, 4
        %v1055 = vshll.u32 %v1022, 16
        %v1057 = vrot.slane %v1055, 5
        %v1058 = vor.u32 %v1054, %v1057
        %v1059 = vrot.slane %v1058, 4
        %v1061 = vshll.u32 %v1030, 16
        %v1063 = vrot.slane %v1061, 5
        %v1064 = vsel %vm356, %v1059, %v1063
        %v1066 = vshrl.u32 %v1023, 16
        %v1068 = vrot.slane %v1066, 4
        %v1069 = vshll.u32 %v1023, 16
        %v1071 = vrot.slane %v1069, 5
        %v1072 = vor.u32 %v1068, %v1071
        %v1073 = vrot.slane %v1072, 4
        %v1075 = vshll.u32 %v1031, 16
        %v1077 = vrot.slane %v1075, 5
        %v1078 = vsel %vm356, %v1073, %v1077
        %v1080 = vshrl.u32 %v1024, 16
        %v1082 = vrot.slane %v1080, 4
        %v1083 = vshll.u32 %v1024, 16
        %v1085 = vrot.slane %v1083, 5
        %v1086 = vor.u32 %v1082, %v1085
        %v1087 = vrot.slane %v1086, 4
        %v1089 = vshll.u32 %v1032, 16
        %v1091 = vrot.slane %v1089, 5
        %v1092 = vsel %vm356, %v1087, %v1091
        %v1094 = vshrl.u32 %v1025, 16
        %v1096 = vrot.slane %v1094, 4
        %v1097 = vshll.u32 %v1025, 16
        %v1099 = vrot.slane %v1097, 5
        %v1100 = vor.u32 %v1096, %v1099
        %v1101 = vrot.slane %v1100, 4
        %v1103 = vshll.u32 %v1033, 16
        %v1105 = vrot.slane %v1103, 5
        %v1106 = vsel %vm356, %v1101, %v1105
        %v1108 = vshrl.u32 %v1026, 16
        %v1110 = vrot.slane %v1108, 4
        %v1111 = vshll.u32 %v1026, 16
        %v1113 = vrot.slane %v1111, 5
        %v1114 = vor.u32 %v1110, %v1113
        %v1115 = vrot.slane %v1114, 4
        %v1117 = vshll.u32 %v1034, 16
        %v1119 = vrot.slane %v1117, 5
        %v1120 = vsel %vm356, %v1115, %v1119
        %v1122 = vshrl.u32 %v1027, 16
        %v1124 = vrot.slane %v1122, 4
        %v1125 = vshll.u32 %v1027, 16
        %v1127 = vrot.slane %v1125, 5
        %v1128 = vor.u32 %v1124, %v1127
        %v1129 = vrot.slane %v1128, 4
        %v1131 = vshll.u32 %v1035, 16
        %v1133 = vrot.slane %v1131, 5
        %v1134 = vsel %vm356, %v1129, %v1133
        %v1136 = vshrl.u32 %v1028, 16
        %v1138 = vrot.slane %v1136, 4
        %v1139 = vshll.u32 %v1028, 16
        %v1141 = vrot.slane %v1139, 5
        %v1142 = vor.u32 %v1138, %v1141
        %v1143 = vrot.slane %v1142, 4
        %v1145 = vshll.u32 %v1036, 16
        %v1147 = vrot.slane %v1145, 5
        %v1148 = vsel %vm356, %v1143, %v1147
        %v1149 = vld [vmem:[%s1020] sm:$0xe]
        %v1150 = vld [vmem:[%s1020 + $0x8] sm:$0xe]
        %v1151 = vld [vmem:[%s1020 + $0x10] sm:$0xe]
        %v1152 = vld [vmem:[%s1020 + $0x18] sm:$0xe]
        %v1153 = vld [vmem:[%s1020 + $0x20] sm:$0xe]
        %v1154 = vld [vmem:[%s1020 + $0x28] sm:$0xe]
        %v1155 = vld [vmem:[%s1020 + $0x30] sm:$0xe]
        %v1156 = vld [vmem:[%s1020 + $0x38] sm:$0xe]
        %v1173 = vrot.slane %v1149, 5
        %v1174 = vrot.slane %v1173, 4
        %v1175 = vrot.slane %v1029, 5
        %v1176 = vsel %vm495, %v1174, %v1175
        %v1177 = vrot.slane %v1150, 5
        %v1178 = vrot.slane %v1177, 4
        %v1179 = vrot.slane %v1030, 5
        %v1180 = vsel %vm495, %v1178, %v1179
        %v1181 = vrot.slane %v1151, 5
        %v1182 = vrot.slane %v1181, 4
        %v1183 = vrot.slane %v1031, 5
        %v1184 = vsel %vm495, %v1182, %v1183
        %v1185 = vrot.slane %v1152, 5
        %v1186 = vrot.slane %v1185, 4
        %v1187 = vrot.slane %v1032, 5
        %v1188 = vsel %vm495, %v1186, %v1187
        %v1189 = vrot.slane %v1153, 5
        %v1190 = vrot.slane %v1189, 4
        %v1191 = vrot.slane %v1033, 5
        %v1192 = vsel %vm495, %v1190, %v1191
        %v1193 = vrot.slane %v1154, 5
        %v1194 = vrot.slane %v1193, 4
        %v1195 = vrot.slane %v1034, 5
        %v1196 = vsel %vm495, %v1194, %v1195
        %v1197 = vrot.slane %v1155, 5
        %v1198 = vrot.slane %v1197, 4
        %v1199 = vrot.slane %v1035, 5
        %v1200 = vsel %vm495, %v1198, %v1199
        %v1201 = vrot.slane %v1156, 5
        %v1202 = vrot.slane %v1201, 4
        %v1203 = vrot.slane %v1036, 5
        %v1204 = vsel %vm495, %v1202, %v1203
        %v1205 = vld [vmem:[%s1020 + $0x4] sm:$0x3]
        %v1206 = vld [vmem:[%s1020 + $0xc] sm:$0x3]
        %v1207 = vld [vmem:[%s1020 + $0x14] sm:$0x3]
        %v1208 = vld [vmem:[%s1020 + $0x1c] sm:$0x3]
        %v1209 = vld [vmem:[%s1020 + $0x24] sm:$0x3]
        %v1210 = vld [vmem:[%s1020 + $0x2c] sm:$0x3]
        %v1211 = vld [vmem:[%s1020 + $0x34] sm:$0x3]
        %v1212 = vld [vmem:[%s1020 + $0x3c] sm:$0x3]
        %v1214 = vshrl.u32 %v1149, 16
        %v1216 = vrot.slane %v1214, 5
        %v1217 = vshll.u32 %v1149, 16
        %v1219 = vrot.slane %v1217, 6
        %v1220 = vor.u32 %v1216, %v1219
        %v1221 = vrot.slane %v1220, 4
        %v1223 = vshrl.u32 %v1205, 16
        %v1225 = vrot.slane %v1223, 5
        %v1226 = vshll.u32 %v1205, 16
        %v1228 = vrot.slane %v1226, 6
        %v1229 = vor.u32 %v1225, %v1228
        %v1230 = vsel %vm538, %v1221, %v1229
        %v1232 = vshrl.u32 %v1150, 16
        %v1234 = vrot.slane %v1232, 5
        %v1235 = vshll.u32 %v1150, 16
        %v1237 = vrot.slane %v1235, 6
        %v1238 = vor.u32 %v1234, %v1237
        %v1239 = vrot.slane %v1238, 4
        %v1241 = vshrl.u32 %v1206, 16
        %v1243 = vrot.slane %v1241, 5
        %v1244 = vshll.u32 %v1206, 16
        %v1246 = vrot.slane %v1244, 6
        %v1247 = vor.u32 %v1243, %v1246
        %v1248 = vsel %vm538, %v1239, %v1247
        %v1250 = vshrl.u32 %v1151, 16
        %v1252 = vrot.slane %v1250, 5
        %v1253 = vshll.u32 %v1151, 16
        %v1255 = vrot.slane %v1253, 6
        %v1256 = vor.u32 %v1252, %v1255
        %v1257 = vrot.slane %v1256, 4
        %v1259 = vshrl.u32 %v1207, 16
        %v1261 = vrot.slane %v1259, 5
        %v1262 = vshll.u32 %v1207, 16
        %v1264 = vrot.slane %v1262, 6
        %v1265 = vor.u32 %v1261, %v1264
        %v1266 = vsel %vm538, %v1257, %v1265
        %v1268 = vshrl.u32 %v1152, 16
        %v1270 = vrot.slane %v1268, 5
        %v1271 = vshll.u32 %v1152, 16
        %v1273 = vrot.slane %v1271, 6
        %v1274 = vor.u32 %v1270, %v1273
        %v1275 = vrot.slane %v1274, 4
        %v1277 = vshrl.u32 %v1208, 16
        %v1279 = vrot.slane %v1277, 5
        %v1280 = vshll.u32 %v1208, 16
        %v1282 = vrot.slane %v1280, 6
        %v1283 = vor.u32 %v1279, %v1282
        %v1284 = vsel %vm538, %v1275, %v1283
        %v1286 = vshrl.u32 %v1153, 16
        %v1288 = vrot.slane %v1286, 5
        %v1289 = vshll.u32 %v1153, 16
        %v1291 = vrot.slane %v1289, 6
        %v1292 = vor.u32 %v1288, %v1291
        %v1293 = vrot.slane %v1292, 4
        %v1295 = vshrl.u32 %v1209, 16
        %v1297 = vrot.slane %v1295, 5
        %v1298 = vshll.u32 %v1209, 16
        %v1300 = vrot.slane %v1298, 6
        %v1301 = vor.u32 %v1297, %v1300
        %v1302 = vsel %vm538, %v1293, %v1301
        %v1304 = vshrl.u32 %v1154, 16
        %v1306 = vrot.slane %v1304, 5
        %v1307 = vshll.u32 %v1154, 16
        %v1309 = vrot.slane %v1307, 6
        %v1310 = vor.u32 %v1306, %v1309
        %v1311 = vrot.slane %v1310, 4
        %v1313 = vshrl.u32 %v1210, 16
        %v1315 = vrot.slane %v1313, 5
        %v1316 = vshll.u32 %v1210, 16
        %v1318 = vrot.slane %v1316, 6
        %v1319 = vor.u32 %v1315, %v1318
        %v1320 = vsel %vm538, %v1311, %v1319
        %v1322 = vshrl.u32 %v1155, 16
        %v1324 = vrot.slane %v1322, 5
        %v1325 = vshll.u32 %v1155, 16
        %v1327 = vrot.slane %v1325, 6
        %v1328 = vor.u32 %v1324, %v1327
        %v1329 = vrot.slane %v1328, 4
        %v1331 = vshrl.u32 %v1211, 16
        %v1333 = vrot.slane %v1331, 5
        %v1334 = vshll.u32 %v1211, 16
        %v1336 = vrot.slane %v1334, 6
        %v1337 = vor.u32 %v1333, %v1336
        %v1338 = vsel %vm538, %v1329, %v1337
        %v1340 = vshrl.u32 %v1156, 16
        %v1342 = vrot.slane %v1340, 5
        %v1343 = vshll.u32 %v1156, 16
        %v1345 = vrot.slane %v1343, 6
        %v1346 = vor.u32 %v1342, %v1345
        %v1347 = vrot.slane %v1346, 4
        %v1349 = vshrl.u32 %v1212, 16
        %v1351 = vrot.slane %v1349, 5
        %v1352 = vshll.u32 %v1212, 16
        %v1354 = vrot.slane %v1352, 6
        %v1355 = vor.u32 %v1351, %v1354
        %v1356 = vsel %vm538, %v1347, %v1355
        %s1357 = scalar_lea.vmem %s321, 24
        %v1358 = vld [vmem:[%s1357] sm:$0xf]
        %v1359 = vld [vmem:[%s1357 + $0x8] sm:$0xf]
        %v1360 = vld [vmem:[%s1357 + $0x10] sm:$0xf]
        %v1361 = vld [vmem:[%s1357 + $0x18] sm:$0xf]
        %v1362 = vld [vmem:[%s1357 + $0x20] sm:$0xf]
        %v1363 = vld [vmem:[%s1357 + $0x28] sm:$0xf]
        %v1364 = vld [vmem:[%s1357 + $0x30] sm:$0xf]
        %v1365 = vld [vmem:[%s1357 + $0x38] sm:$0xf]
        %v1366 = vld [vmem:[%s1357 + $0x4] sm:$0x1]
        %v1367 = vld [vmem:[%s1357 + $0xc] sm:$0x1]
        %v1368 = vld [vmem:[%s1357 + $0x14] sm:$0x1]
        %v1369 = vld [vmem:[%s1357 + $0x1c] sm:$0x1]
        %v1370 = vld [vmem:[%s1357 + $0x24] sm:$0x1]
        %v1371 = vld [vmem:[%s1357 + $0x2c] sm:$0x1]
        %v1372 = vld [vmem:[%s1357 + $0x34] sm:$0x1]
        %v1373 = vld [vmem:[%s1357 + $0x3c] sm:$0x1]
        %v1375 = vshrl.u32 %v1358, 16
        %v1377 = vrot.slane %v1375, 4
        %v1378 = vshll.u32 %v1358, 16
        %v1380 = vrot.slane %v1378, 5
        %v1381 = vor.u32 %v1377, %v1380
        %v1382 = vrot.slane %v1381, 4
        %v1384 = vshll.u32 %v1366, 16
        %v1386 = vrot.slane %v1384, 5
        %v1387 = vsel %vm356, %v1382, %v1386
        %v1389 = vshrl.u32 %v1359, 16
        %v1391 = vrot.slane %v1389, 4
        %v1392 = vshll.u32 %v1359, 16
        %v1394 = vrot.slane %v1392, 5
        %v1395 = vor.u32 %v1391, %v1394
        %v1396 = vrot.slane %v1395, 4
        %v1398 = vshll.u32 %v1367, 16
        %v1400 = vrot.slane %v1398, 5
        %v1401 = vsel %vm356, %v1396, %v1400
        %v1403 = vshrl.u32 %v1360, 16
        %v1405 = vrot.slane %v1403, 4
        %v1406 = vshll.u32 %v1360, 16
        %v1408 = vrot.slane %v1406, 5
        %v1409 = vor.u32 %v1405, %v1408
        %v1410 = vrot.slane %v1409, 4
        %v1412 = vshll.u32 %v1368, 16
        %v1414 = vrot.slane %v1412, 5
        %v1415 = vsel %vm356, %v1410, %v1414
        %v1417 = vshrl.u32 %v1361, 16
        %v1419 = vrot.slane %v1417, 4
        %v1420 = vshll.u32 %v1361, 16
        %v1422 = vrot.slane %v1420, 5
        %v1423 = vor.u32 %v1419, %v1422
        %v1424 = vrot.slane %v1423, 4
        %v1426 = vshll.u32 %v1369, 16
        %v1428 = vrot.slane %v1426, 5
        %v1429 = vsel %vm356, %v1424, %v1428
        %v1431 = vshrl.u32 %v1362, 16
        %v1433 = vrot.slane %v1431, 4
        %v1434 = vshll.u32 %v1362, 16
        %v1436 = vrot.slane %v1434, 5
        %v1437 = vor.u32 %v1433, %v1436
        %v1438 = vrot.slane %v1437, 4
        %v1440 = vshll.u32 %v1370, 16
        %v1442 = vrot.slane %v1440, 5
        %v1443 = vsel %vm356, %v1438, %v1442
        %v1445 = vshrl.u32 %v1363, 16
        %v1447 = vrot.slane %v1445, 4
        %v1448 = vshll.u32 %v1363, 16
        %v1450 = vrot.slane %v1448, 5
        %v1451 = vor.u32 %v1447, %v1450
        %v1452 = vrot.slane %v1451, 4
        %v1454 = vshll.u32 %v1371, 16
        %v1456 = vrot.slane %v1454, 5
        %v1457 = vsel %vm356, %v1452, %v1456
        %v1459 = vshrl.u32 %v1364, 16
        %v1461 = vrot.slane %v1459, 4
        %v1462 = vshll.u32 %v1364, 16
        %v1464 = vrot.slane %v1462, 5
        %v1465 = vor.u32 %v1461, %v1464
        %v1466 = vrot.slane %v1465, 4
        %v1468 = vshll.u32 %v1372, 16
        %v1470 = vrot.slane %v1468, 5
        %v1471 = vsel %vm356, %v1466, %v1470
        %v1473 = vshrl.u32 %v1365, 16
        %v1475 = vrot.slane %v1473, 4
        %v1476 = vshll.u32 %v1365, 16
        %v1478 = vrot.slane %v1476, 5
        %v1479 = vor.u32 %v1475, %v1478
        %v1480 = vrot.slane %v1479, 4
        %v1482 = vshll.u32 %v1373, 16
        %v1484 = vrot.slane %v1482, 5
        %v1485 = vsel %vm356, %v1480, %v1484
        %v1486 = vld [vmem:[%s1357] sm:$0xe]
        %v1487 = vld [vmem:[%s1357 + $0x8] sm:$0xe]
        %v1488 = vld [vmem:[%s1357 + $0x10] sm:$0xe]
        %v1489 = vld [vmem:[%s1357 + $0x18] sm:$0xe]
        %v1490 = vld [vmem:[%s1357 + $0x20] sm:$0xe]
        %v1491 = vld [vmem:[%s1357 + $0x28] sm:$0xe]
        %v1492 = vld [vmem:[%s1357 + $0x30] sm:$0xe]
        %v1493 = vld [vmem:[%s1357 + $0x38] sm:$0xe]
        %v1510 = vrot.slane %v1486, 5
        %v1511 = vrot.slane %v1510, 4
        %v1512 = vrot.slane %v1366, 5
        %v1513 = vsel %vm495, %v1511, %v1512
        %v1514 = vrot.slane %v1487, 5
        %v1515 = vrot.slane %v1514, 4
        %v1516 = vrot.slane %v1367, 5
        %v1517 = vsel %vm495, %v1515, %v1516
        %v1518 = vrot.slane %v1488, 5
        %v1519 = vrot.slane %v1518, 4
        %v1520 = vrot.slane %v1368, 5
        %v1521 = vsel %vm495, %v1519, %v1520
        %v1522 = vrot.slane %v1489, 5
        %v1523 = vrot.slane %v1522, 4
        %v1524 = vrot.slane %v1369, 5
        %v1525 = vsel %vm495, %v1523, %v1524
        %v1526 = vrot.slane %v1490, 5
        %v1527 = vrot.slane %v1526, 4
        %v1528 = vrot.slane %v1370, 5
        %v1529 = vsel %vm495, %v1527, %v1528
        %v1530 = vrot.slane %v1491, 5
        %v1531 = vrot.slane %v1530, 4
        %v1532 = vrot.slane %v1371, 5
        %v1533 = vsel %vm495, %v1531, %v1532
        %v1534 = vrot.slane %v1492, 5
        %v1535 = vrot.slane %v1534, 4
        %v1536 = vrot.slane %v1372, 5
        %v1537 = vsel %vm495, %v1535, %v1536
        %v1538 = vrot.slane %v1493, 5
        %v1539 = vrot.slane %v1538, 4
        %v1540 = vrot.slane %v1373, 5
        %v1541 = vsel %vm495, %v1539, %v1540
        %v1542 = vld [vmem:[%s1357 + $0x4] sm:$0x3]
        %v1543 = vld [vmem:[%s1357 + $0xc] sm:$0x3]
        %v1544 = vld [vmem:[%s1357 + $0x14] sm:$0x3]
        %v1545 = vld [vmem:[%s1357 + $0x1c] sm:$0x3]
        %v1546 = vld [vmem:[%s1357 + $0x24] sm:$0x3]
        %v1547 = vld [vmem:[%s1357 + $0x2c] sm:$0x3]
        %v1548 = vld [vmem:[%s1357 + $0x34] sm:$0x3]
        %v1549 = vld [vmem:[%s1357 + $0x3c] sm:$0x3]
        %v1551 = vshrl.u32 %v1486, 16
        %v1553 = vrot.slane %v1551, 5
        %v1554 = vshll.u32 %v1486, 16
        %v1556 = vrot.slane %v1554, 6
        %v1557 = vor.u32 %v1553, %v1556
        %v1558 = vrot.slane %v1557, 4
        %v1560 = vshrl.u32 %v1542, 16
        %v1562 = vrot.slane %v1560, 5
        %v1563 = vshll.u32 %v1542, 16
        %v1565 = vrot.slane %v1563, 6
        %v1566 = vor.u32 %v1562, %v1565
        %v1567 = vsel %vm538, %v1558, %v1566
        %v1569 = vshrl.u32 %v1487, 16
        %v1571 = vrot.slane %v1569, 5
        %v1572 = vshll.u32 %v1487, 16
        %v1574 = vrot.slane %v1572, 6
        %v1575 = vor.u32 %v1571, %v1574
        %v1576 = vrot.slane %v1575, 4
        %v1578 = vshrl.u32 %v1543, 16
        %v1580 = vrot.slane %v1578, 5
        %v1581 = vshll.u32 %v1543, 16
        %v1583 = vrot.slane %v1581, 6
        %v1584 = vor.u32 %v1580, %v1583
        %v1585 = vsel %vm538, %v1576, %v1584
        %v1587 = vshrl.u32 %v1488, 16
        %v1589 = vrot.slane %v1587, 5
        %v1590 = vshll.u32 %v1488, 16
        %v1592 = vrot.slane %v1590, 6
        %v1593 = vor.u32 %v1589, %v1592
        %v1594 = vrot.slane %v1593, 4
        %v1596 = vshrl.u32 %v1544, 16
        %v1598 = vrot.slane %v1596, 5
        %v1599 = vshll.u32 %v1544, 16
        %v1601 = vrot.slane %v1599, 6
        %v1602 = vor.u32 %v1598, %v1601
        %v1603 = vsel %vm538, %v1594, %v1602
        %v1605 = vshrl.u32 %v1489, 16
        %v1607 = vrot.slane %v1605, 5
        %v1608 = vshll.u32 %v1489, 16
        %v1610 = vrot.slane %v1608, 6
        %v1611 = vor.u32 %v1607, %v1610
        %v1612 = vrot.slane %v1611, 4
        %v1614 = vshrl.u32 %v1545, 16
        %v1616 = vrot.slane %v1614, 5
        %v1617 = vshll.u32 %v1545, 16
        %v1619 = vrot.slane %v1617, 6
        %v1620 = vor.u32 %v1616, %v1619
        %v1621 = vsel %vm538, %v1612, %v1620
        %v1623 = vshrl.u32 %v1490, 16
        %v1625 = vrot.slane %v1623, 5
        %v1626 = vshll.u32 %v1490, 16
        %v1628 = vrot.slane %v1626, 6
        %v1629 = vor.u32 %v1625, %v1628
        %v1630 = vrot.slane %v1629, 4
        %v1632 = vshrl.u32 %v1546, 16
        %v1634 = vrot.slane %v1632, 5
        %v1635 = vshll.u32 %v1546, 16
        %v1637 = vrot.slane %v1635, 6
        %v1638 = vor.u32 %v1634, %v1637
        %v1639 = vsel %vm538, %v1630, %v1638
        %v1641 = vshrl.u32 %v1491, 16
        %v1643 = vrot.slane %v1641, 5
        %v1644 = vshll.u32 %v1491, 16
        %v1646 = vrot.slane %v1644, 6
        %v1647 = vor.u32 %v1643, %v1646
        %v1648 = vrot.slane %v1647, 4
        %v1650 = vshrl.u32 %v1547, 16
        %v1652 = vrot.slane %v1650, 5
        %v1653 = vshll.u32 %v1547, 16
        %v1655 = vrot.slane %v1653, 6
        %v1656 = vor.u32 %v1652, %v1655
        %v1657 = vsel %vm538, %v1648, %v1656
        %v1659 = vshrl.u32 %v1492, 16
        %v1661 = vrot.slane %v1659, 5
        %v1662 = vshll.u32 %v1492, 16
        %v1664 = vrot.slane %v1662, 6
        %v1665 = vor.u32 %v1661, %v1664
        %v1666 = vrot.slane %v1665, 4
        %v1668 = vshrl.u32 %v1548, 16
        %v1670 = vrot.slane %v1668, 5
        %v1671 = vshll.u32 %v1548, 16
        %v1673 = vrot.slane %v1671, 6
        %v1674 = vor.u32 %v1670, %v1673
        %v1675 = vsel %vm538, %v1666, %v1674
        %v1677 = vshrl.u32 %v1493, 16
        %v1679 = vrot.slane %v1677, 5
        %v1680 = vshll.u32 %v1493, 16
        %v1682 = vrot.slane %v1680, 6
        %v1683 = vor.u32 %v1679, %v1682
        %v1684 = vrot.slane %v1683, 4
        %v1686 = vshrl.u32 %v1549, 16
        %v1688 = vrot.slane %v1686, 5
        %v1689 = vshll.u32 %v1549, 16
        %v1691 = vrot.slane %v1689, 6
        %v1692 = vor.u32 %v1688, %v1691
        %v1693 = vsel %vm538, %v1684, %v1692
        %v1694 = vld [vmem:[%s326] sm:$0xf]
        %v1695 = vld [vmem:[%s326 + $0x8] sm:$0xf]
        %v1696 = vld [vmem:[%s326 + $0x10] sm:$0xf]
        %v1697 = vld [vmem:[%s326 + $0x18] sm:$0xf]
        %v1698 = vld [vmem:[%s326 + $0x20] sm:$0xf]
        %v1699 = vld [vmem:[%s326 + $0x28] sm:$0xf]
        %v1700 = vld [vmem:[%s326 + $0x30] sm:$0xf]
        %v1701 = vld [vmem:[%s326 + $0x38] sm:$0xf]
        %v1702 = vld [vmem:[%s326 + $0x4] sm:$0x1]
        %v1703 = vld [vmem:[%s326 + $0xc] sm:$0x1]
        %v1704 = vld [vmem:[%s326 + $0x14] sm:$0x1]
        %v1705 = vld [vmem:[%s326 + $0x1c] sm:$0x1]
        %v1706 = vld [vmem:[%s326 + $0x24] sm:$0x1]
        %v1707 = vld [vmem:[%s326 + $0x2c] sm:$0x1]
        %v1708 = vld [vmem:[%s326 + $0x34] sm:$0x1]
        %v1709 = vld [vmem:[%s326 + $0x3c] sm:$0x1]
        %v1711 = vshrl.u32 %v1694, 16
        %v1713 = vrot.slane %v1711, 4
        %v1714 = vshll.u32 %v1694, 16
        %v1716 = vrot.slane %v1714, 5
        %v1717 = vor.u32 %v1713, %v1716
        %v1718 = vrot.slane %v1717, 4
        %v1720 = vshll.u32 %v1702, 16
        %v1722 = vrot.slane %v1720, 5
        %v1723 = vsel %vm356, %v1718, %v1722
        %v1725 = vshrl.u32 %v1695, 16
        %v1727 = vrot.slane %v1725, 4
        %v1728 = vshll.u32 %v1695, 16
        %v1730 = vrot.slane %v1728, 5
        %v1731 = vor.u32 %v1727, %v1730
        %v1732 = vrot.slane %v1731, 4
        %v1734 = vshll.u32 %v1703, 16
        %v1736 = vrot.slane %v1734, 5
        %v1737 = vsel %vm356, %v1732, %v1736
        %v1739 = vshrl.u32 %v1696, 16
        %v1741 = vrot.slane %v1739, 4
        %v1742 = vshll.u32 %v1696, 16
        %v1744 = vrot.slane %v1742, 5
        %v1745 = vor.u32 %v1741, %v1744
        %v1746 = vrot.slane %v1745, 4
        %v1748 = vshll.u32 %v1704, 16
        %v1750 = vrot.slane %v1748, 5
        %v1751 = vsel %vm356, %v1746, %v1750
        %v1753 = vshrl.u32 %v1697, 16
        %v1755 = vrot.slane %v1753, 4
        %v1756 = vshll.u32 %v1697, 16
        %v1758 = vrot.slane %v1756, 5
        %v1759 = vor.u32 %v1755, %v1758
        %v1760 = vrot.slane %v1759, 4
        %v1762 = vshll.u32 %v1705, 16
        %v1764 = vrot.slane %v1762, 5
        %v1765 = vsel %vm356, %v1760, %v1764
        %v1767 = vshrl.u32 %v1698, 16
        %v1769 = vrot.slane %v1767, 4
        %v1770 = vshll.u32 %v1698, 16
        %v1772 = vrot.slane %v1770, 5
        %v1773 = vor.u32 %v1769, %v1772
        %v1774 = vrot.slane %v1773, 4
        %v1776 = vshll.u32 %v1706, 16
        %v1778 = vrot.slane %v1776, 5
        %v1779 = vsel %vm356, %v1774, %v1778
        %v1781 = vshrl.u32 %v1699, 16
        %v1783 = vrot.slane %v1781, 4
        %v1784 = vshll.u32 %v1699, 16
        %v1786 = vrot.slane %v1784, 5
        %v1787 = vor.u32 %v1783, %v1786
        %v1788 = vrot.slane %v1787, 4
        %v1790 = vshll.u32 %v1707, 16
        %v1792 = vrot.slane %v1790, 5
        %v1793 = vsel %vm356, %v1788, %v1792
        %v1795 = vshrl.u32 %v1700, 16
        %v1797 = vrot.slane %v1795, 4
        %v1798 = vshll.u32 %v1700, 16
        %v1800 = vrot.slane %v1798, 5
        %v1801 = vor.u32 %v1797, %v1800
        %v1802 = vrot.slane %v1801, 4
        %v1804 = vshll.u32 %v1708, 16
        %v1806 = vrot.slane %v1804, 5
        %v1807 = vsel %vm356, %v1802, %v1806
        %v1809 = vshrl.u32 %v1701, 16
        %v1811 = vrot.slane %v1809, 4
        %v1812 = vshll.u32 %v1701, 16
        %v1814 = vrot.slane %v1812, 5
        %v1815 = vor.u32 %v1811, %v1814
        %v1816 = vrot.slane %v1815, 4
        %v1818 = vshll.u32 %v1709, 16
        %v1820 = vrot.slane %v1818, 5
        %v1821 = vsel %vm356, %v1816, %v1820
        %v1822 = vld [vmem:[%s326] sm:$0xe]
        %v1823 = vld [vmem:[%s326 + $0x8] sm:$0xe]
        %v1824 = vld [vmem:[%s326 + $0x10] sm:$0xe]
        %v1825 = vld [vmem:[%s326 + $0x18] sm:$0xe]
        %v1826 = vld [vmem:[%s326 + $0x20] sm:$0xe]
        %v1827 = vld [vmem:[%s326 + $0x28] sm:$0xe]
        %v1828 = vld [vmem:[%s326 + $0x30] sm:$0xe]
        %v1829 = vld [vmem:[%s326 + $0x38] sm:$0xe]
        %v1846 = vrot.slane %v1822, 5
        %v1847 = vrot.slane %v1846, 4
        %v1848 = vrot.slane %v1702, 5
        %v1849 = vsel %vm495, %v1847, %v1848
        %v1850 = vrot.slane %v1823, 5
        %v1851 = vrot.slane %v1850, 4
        %v1852 = vrot.slane %v1703, 5
        %v1853 = vsel %vm495, %v1851, %v1852
        %v1854 = vrot.slane %v1824, 5
        %v1855 = vrot.slane %v1854, 4
        %v1856 = vrot.slane %v1704, 5
        %v1857 = vsel %vm495, %v1855, %v1856
        %v1858 = vrot.slane %v1825, 5
        %v1859 = vrot.slane %v1858, 4
        %v1860 = vrot.slane %v1705, 5
        %v1861 = vsel %vm495, %v1859, %v1860
        %v1862 = vrot.slane %v1826, 5
        %v1863 = vrot.slane %v1862, 4
        %v1864 = vrot.slane %v1706, 5
        %v1865 = vsel %vm495, %v1863, %v1864
        %v1866 = vrot.slane %v1827, 5
        %v1867 = vrot.slane %v1866, 4
        %v1868 = vrot.slane %v1707, 5
        %v1869 = vsel %vm495, %v1867, %v1868
        %v1870 = vrot.slane %v1828, 5
        %v1871 = vrot.slane %v1870, 4
        %v1872 = vrot.slane %v1708, 5
        %v1873 = vsel %vm495, %v1871, %v1872
        %v1874 = vrot.slane %v1829, 5
        %v1875 = vrot.slane %v1874, 4
        %v1876 = vrot.slane %v1709, 5
        %v1877 = vsel %vm495, %v1875, %v1876
        %s1878 = scalar_lea.vmem %s326, 8
        %v1879 = vld [vmem:[%s1878] sm:$0xf]
        %v1880 = vld [vmem:[%s1878 + $0x8] sm:$0xf]
        %v1881 = vld [vmem:[%s1878 + $0x10] sm:$0xf]
        %v1882 = vld [vmem:[%s1878 + $0x18] sm:$0xf]
        %v1883 = vld [vmem:[%s1878 + $0x20] sm:$0xf]
        %v1884 = vld [vmem:[%s1878 + $0x28] sm:$0xf]
        %v1885 = vld [vmem:[%s1878 + $0x30] sm:$0xf]
        %v1886 = vld [vmem:[%s1878 + $0x38] sm:$0xf]
        %v1887 = vld [vmem:[%s1878 + $0x4] sm:$0x1]
        %v1888 = vld [vmem:[%s1878 + $0xc] sm:$0x1]
        %v1889 = vld [vmem:[%s1878 + $0x14] sm:$0x1]
        %v1890 = vld [vmem:[%s1878 + $0x1c] sm:$0x1]
        %v1891 = vld [vmem:[%s1878 + $0x24] sm:$0x1]
        %v1892 = vld [vmem:[%s1878 + $0x2c] sm:$0x1]
        %v1893 = vld [vmem:[%s1878 + $0x34] sm:$0x1]
        %v1894 = vld [vmem:[%s1878 + $0x3c] sm:$0x1]
        %v1896 = vshrl.u32 %v1879, 16
        %v1898 = vrot.slane %v1896, 4
        %v1899 = vshll.u32 %v1879, 16
        %v1901 = vrot.slane %v1899, 5
        %v1902 = vor.u32 %v1898, %v1901
        %v1903 = vrot.slane %v1902, 4
        %v1905 = vshll.u32 %v1887, 16
        %v1907 = vrot.slane %v1905, 5
        %v1908 = vsel %vm356, %v1903, %v1907
        %v1910 = vshrl.u32 %v1880, 16
        %v1912 = vrot.slane %v1910, 4
        %v1913 = vshll.u32 %v1880, 16
        %v1915 = vrot.slane %v1913, 5
        %v1916 = vor.u32 %v1912, %v1915
        %v1917 = vrot.slane %v1916, 4
        %v1919 = vshll.u32 %v1888, 16
        %v1921 = vrot.slane %v1919, 5
        %v1922 = vsel %vm356, %v1917, %v1921
        %v1924 = vshrl.u32 %v1881, 16
        %v1926 = vrot.slane %v1924, 4
        %v1927 = vshll.u32 %v1881, 16
        %v1929 = vrot.slane %v1927, 5
        %v1930 = vor.u32 %v1926, %v1929
        %v1931 = vrot.slane %v1930, 4
        %v1933 = vshll.u32 %v1889, 16
        %v1935 = vrot.slane %v1933, 5
        %v1936 = vsel %vm356, %v1931, %v1935
        %v1938 = vshrl.u32 %v1882, 16
        %v1940 = vrot.slane %v1938, 4
        %v1941 = vshll.u32 %v1882, 16
        %v1943 = vrot.slane %v1941, 5
        %v1944 = vor.u32 %v1940, %v1943
        %v1945 = vrot.slane %v1944, 4
        %v1947 = vshll.u32 %v1890, 16
        %v1949 = vrot.slane %v1947, 5
        %v1950 = vsel %vm356, %v1945, %v1949
        %v1952 = vshrl.u32 %v1883, 16
        %v1954 = vrot.slane %v1952, 4
        %v1955 = vshll.u32 %v1883, 16
        %v1957 = vrot.slane %v1955, 5
        %v1958 = vor.u32 %v1954, %v1957
        %v1959 = vrot.slane %v1958, 4
        %v1961 = vshll.u32 %v1891, 16
        %v1963 = vrot.slane %v1961, 5
        %v1964 = vsel %vm356, %v1959, %v1963
        %v1966 = vshrl.u32 %v1884, 16
        %v1968 = vrot.slane %v1966, 4
        %v1969 = vshll.u32 %v1884, 16
        %v1971 = vrot.slane %v1969, 5
        %v1972 = vor.u32 %v1968, %v1971
        %v1973 = vrot.slane %v1972, 4
        %v1975 = vshll.u32 %v1892, 16
        %v1977 = vrot.slane %v1975, 5
        %v1978 = vsel %vm356, %v1973, %v1977
        %v1980 = vshrl.u32 %v1885, 16
        %v1982 = vrot.slane %v1980, 4
        %v1983 = vshll.u32 %v1885, 16
        %v1985 = vrot.slane %v1983, 5
        %v1986 = vor.u32 %v1982, %v1985
        %v1987 = vrot.slane %v1986, 4
        %v1989 = vshll.u32 %v1893, 16
        %v1991 = vrot.slane %v1989, 5
        %v1992 = vsel %vm356, %v1987, %v1991
        %v1994 = vshrl.u32 %v1886, 16
        %v1996 = vrot.slane %v1994, 4
        %v1997 = vshll.u32 %v1886, 16
        %v1999 = vrot.slane %v1997, 5
        %v2000 = vor.u32 %v1996, %v1999
        %v2001 = vrot.slane %v2000, 4
        %v2003 = vshll.u32 %v1894, 16
        %v2005 = vrot.slane %v2003, 5
        %v2006 = vsel %vm356, %v2001, %v2005
        %v2007 = vld [vmem:[%s1878] sm:$0xe]
        %v2008 = vld [vmem:[%s1878 + $0x8] sm:$0xe]
        %v2009 = vld [vmem:[%s1878 + $0x10] sm:$0xe]
        %v2010 = vld [vmem:[%s1878 + $0x18] sm:$0xe]
        %v2011 = vld [vmem:[%s1878 + $0x20] sm:$0xe]
        %v2012 = vld [vmem:[%s1878 + $0x28] sm:$0xe]
        %v2013 = vld [vmem:[%s1878 + $0x30] sm:$0xe]
        %v2014 = vld [vmem:[%s1878 + $0x38] sm:$0xe]
        %v2031 = vrot.slane %v2007, 5
        %v2032 = vrot.slane %v2031, 4
        %v2033 = vrot.slane %v1887, 5
        %v2034 = vsel %vm495, %v2032, %v2033
        %v2035 = vrot.slane %v2008, 5
        %v2036 = vrot.slane %v2035, 4
        %v2037 = vrot.slane %v1888, 5
        %v2038 = vsel %vm495, %v2036, %v2037
        %v2039 = vrot.slane %v2009, 5
        %v2040 = vrot.slane %v2039, 4
        %v2041 = vrot.slane %v1889, 5
        %v2042 = vsel %vm495, %v2040, %v2041
        %v2043 = vrot.slane %v2010, 5
        %v2044 = vrot.slane %v2043, 4
        %v2045 = vrot.slane %v1890, 5
        %v2046 = vsel %vm495, %v2044, %v2045
        %v2047 = vrot.slane %v2011, 5
        %v2048 = vrot.slane %v2047, 4
        %v2049 = vrot.slane %v1891, 5
        %v2050 = vsel %vm495, %v2048, %v2049
        %v2051 = vrot.slane %v2012, 5
        %v2052 = vrot.slane %v2051, 4
        %v2053 = vrot.slane %v1892, 5
        %v2054 = vsel %vm495, %v2052, %v2053
        %v2055 = vrot.slane %v2013, 5
        %v2056 = vrot.slane %v2055, 4
        %v2057 = vrot.slane %v1893, 5
        %v2058 = vsel %vm495, %v2056, %v2057
        %v2059 = vrot.slane %v2014, 5
        %v2060 = vrot.slane %v2059, 4
        %v2061 = vrot.slane %v1894, 5
        %v2062 = vsel %vm495, %v2060, %v2061
        %s2063 = scalar_lea.vmem %s326, 16
        %v2064 = vld [vmem:[%s2063] sm:$0xf]
        %v2065 = vld [vmem:[%s2063 + $0x8] sm:$0xf]
        %v2066 = vld [vmem:[%s2063 + $0x10] sm:$0xf]
        %v2067 = vld [vmem:[%s2063 + $0x18] sm:$0xf]
        %v2068 = vld [vmem:[%s2063 + $0x20] sm:$0xf]
        %v2069 = vld [vmem:[%s2063 + $0x28] sm:$0xf]
        %v2070 = vld [vmem:[%s2063 + $0x30] sm:$0xf]
        %v2071 = vld [vmem:[%s2063 + $0x38] sm:$0xf]
        %v2072 = vld [vmem:[%s2063 + $0x4] sm:$0x1]
        %v2073 = vld [vmem:[%s2063 + $0xc] sm:$0x1]
        %v2074 = vld [vmem:[%s2063 + $0x14] sm:$0x1]
        %v2075 = vld [vmem:[%s2063 + $0x1c] sm:$0x1]
        %v2076 = vld [vmem:[%s2063 + $0x24] sm:$0x1]
        %v2077 = vld [vmem:[%s2063 + $0x2c] sm:$0x1]
        %v2078 = vld [vmem:[%s2063 + $0x34] sm:$0x1]
        %v2079 = vld [vmem:[%s2063 + $0x3c] sm:$0x1]
        %v2081 = vshrl.u32 %v2064, 16
        %v2083 = vrot.slane %v2081, 4
        %v2084 = vshll.u32 %v2064, 16
        %v2086 = vrot.slane %v2084, 5
        %v2087 = vor.u32 %v2083, %v2086
        %v2088 = vrot.slane %v2087, 4
        %v2090 = vshll.u32 %v2072, 16
        %v2092 = vrot.slane %v2090, 5
        %v2093 = vsel %vm356, %v2088, %v2092
        %v2095 = vshrl.u32 %v2065, 16
        %v2097 = vrot.slane %v2095, 4
        %v2098 = vshll.u32 %v2065, 16
        %v2100 = vrot.slane %v2098, 5
        %v2101 = vor.u32 %v2097, %v2100
        %v2102 = vrot.slane %v2101, 4
        %v2104 = vshll.u32 %v2073, 16
        %v2106 = vrot.slane %v2104, 5
        %v2107 = vsel %vm356, %v2102, %v2106
        %v2109 = vshrl.u32 %v2066, 16
        %v2111 = vrot.slane %v2109, 4
        %v2112 = vshll.u32 %v2066, 16
        %v2114 = vrot.slane %v2112, 5
        %v2115 = vor.u32 %v2111, %v2114
        %v2116 = vrot.slane %v2115, 4
        %v2118 = vshll.u32 %v2074, 16
        %v2120 = vrot.slane %v2118, 5
        %v2121 = vsel %vm356, %v2116, %v2120
        %v2123 = vshrl.u32 %v2067, 16
        %v2125 = vrot.slane %v2123, 4
        %v2126 = vshll.u32 %v2067, 16
        %v2128 = vrot.slane %v2126, 5
        %v2129 = vor.u32 %v2125, %v2128
        %v2130 = vrot.slane %v2129, 4
        %v2132 = vshll.u32 %v2075, 16
        %v2134 = vrot.slane %v2132, 5
        %v2135 = vsel %vm356, %v2130, %v2134
        %v2137 = vshrl.u32 %v2068, 16
        %v2139 = vrot.slane %v2137, 4
        %v2140 = vshll.u32 %v2068, 16
        %v2142 = vrot.slane %v2140, 5
        %v2143 = vor.u32 %v2139, %v2142
        %v2144 = vrot.slane %v2143, 4
        %v2146 = vshll.u32 %v2076, 16
        %v2148 = vrot.slane %v2146, 5
        %v2149 = vsel %vm356, %v2144, %v2148
        %v2151 = vshrl.u32 %v2069, 16
        %v2153 = vrot.slane %v2151, 4
        %v2154 = vshll.u32 %v2069, 16
        %v2156 = vrot.slane %v2154, 5
        %v2157 = vor.u32 %v2153, %v2156
        %v2158 = vrot.slane %v2157, 4
        %v2160 = vshll.u32 %v2077, 16
        %v2162 = vrot.slane %v2160, 5
        %v2163 = vsel %vm356, %v2158, %v2162
        %v2165 = vshrl.u32 %v2070, 16
        %v2167 = vrot.slane %v2165, 4
        %v2168 = vshll.u32 %v2070, 16
        %v2170 = vrot.slane %v2168, 5
        %v2171 = vor.u32 %v2167, %v2170
        %v2172 = vrot.slane %v2171, 4
        %v2174 = vshll.u32 %v2078, 16
        %v2176 = vrot.slane %v2174, 5
        %v2177 = vsel %vm356, %v2172, %v2176
        %v2179 = vshrl.u32 %v2071, 16
        %v2181 = vrot.slane %v2179, 4
        %v2182 = vshll.u32 %v2071, 16
        %v2184 = vrot.slane %v2182, 5
        %v2185 = vor.u32 %v2181, %v2184
        %v2186 = vrot.slane %v2185, 4
        %v2188 = vshll.u32 %v2079, 16
        %v2190 = vrot.slane %v2188, 5
        %v2191 = vsel %vm356, %v2186, %v2190
        %v2192 = vld [vmem:[%s2063] sm:$0xe]
        %v2193 = vld [vmem:[%s2063 + $0x8] sm:$0xe]
        %v2194 = vld [vmem:[%s2063 + $0x10] sm:$0xe]
        %v2195 = vld [vmem:[%s2063 + $0x18] sm:$0xe]
        %v2196 = vld [vmem:[%s2063 + $0x20] sm:$0xe]
        %v2197 = vld [vmem:[%s2063 + $0x28] sm:$0xe]
        %v2198 = vld [vmem:[%s2063 + $0x30] sm:$0xe]
        %v2199 = vld [vmem:[%s2063 + $0x38] sm:$0xe]
        %v2216 = vrot.slane %v2192, 5
        %v2217 = vrot.slane %v2216, 4
        %v2218 = vrot.slane %v2072, 5
        %v2219 = vsel %vm495, %v2217, %v2218
        %v2220 = vrot.slane %v2193, 5
        %v2221 = vrot.slane %v2220, 4
        %v2222 = vrot.slane %v2073, 5
        %v2223 = vsel %vm495, %v2221, %v2222
        %v2224 = vrot.slane %v2194, 5
        %v2225 = vrot.slane %v2224, 4
        %v2226 = vrot.slane %v2074, 5
        %v2227 = vsel %vm495, %v2225, %v2226
        %v2228 = vrot.slane %v2195, 5
        %v2229 = vrot.slane %v2228, 4
        %v2230 = vrot.slane %v2075, 5
        %v2231 = vsel %vm495, %v2229, %v2230
        %v2232 = vrot.slane %v2196, 5
        %v2233 = vrot.slane %v2232, 4
        %v2234 = vrot.slane %v2076, 5
        %v2235 = vsel %vm495, %v2233, %v2234
        %v2236 = vrot.slane %v2197, 5
        %v2237 = vrot.slane %v2236, 4
        %v2238 = vrot.slane %v2077, 5
        %v2239 = vsel %vm495, %v2237, %v2238
        %v2240 = vrot.slane %v2198, 5
        %v2241 = vrot.slane %v2240, 4
        %v2242 = vrot.slane %v2078, 5
        %v2243 = vsel %vm495, %v2241, %v2242
        %v2244 = vrot.slane %v2199, 5
        %v2245 = vrot.slane %v2244, 4
        %v2246 = vrot.slane %v2079, 5
        %v2247 = vsel %vm495, %v2245, %v2246
        %s2248 = scalar_lea.vmem %s326, 24
        %v2249 = vld [vmem:[%s2248] sm:$0xf]
        %v2250 = vld [vmem:[%s2248 + $0x8] sm:$0xf]
        %v2251 = vld [vmem:[%s2248 + $0x10] sm:$0xf]
        %v2252 = vld [vmem:[%s2248 + $0x18] sm:$0xf]
        %v2253 = vld [vmem:[%s2248 + $0x20] sm:$0xf]
        %v2254 = vld [vmem:[%s2248 + $0x28] sm:$0xf]
        %v2255 = vld [vmem:[%s2248 + $0x30] sm:$0xf]
        %v2256 = vld [vmem:[%s2248 + $0x38] sm:$0xf]
        %v2257 = vld [vmem:[%s2248 + $0x4] sm:$0x1]
        %v2258 = vld [vmem:[%s2248 + $0xc] sm:$0x1]
        %v2259 = vld [vmem:[%s2248 + $0x14] sm:$0x1]
        %v2260 = vld [vmem:[%s2248 + $0x1c] sm:$0x1]
        %v2261 = vld [vmem:[%s2248 + $0x24] sm:$0x1]
        %v2262 = vld [vmem:[%s2248 + $0x2c] sm:$0x1]
        %v2263 = vld [vmem:[%s2248 + $0x34] sm:$0x1]
        %v2264 = vld [vmem:[%s2248 + $0x3c] sm:$0x1]
        %v2266 = vshrl.u32 %v2249, 16
        %v2268 = vrot.slane %v2266, 4
        %v2269 = vshll.u32 %v2249, 16
        %v2271 = vrot.slane %v2269, 5
        %v2272 = vor.u32 %v2268, %v2271
        %v2273 = vrot.slane %v2272, 4
        %v2275 = vshll.u32 %v2257, 16
        %v2277 = vrot.slane %v2275, 5
        %v2278 = vsel %vm356, %v2273, %v2277
        %v2280 = vshrl.u32 %v2250, 16
        %v2282 = vrot.slane %v2280, 4
        %v2283 = vshll.u32 %v2250, 16
        %v2285 = vrot.slane %v2283, 5
        %v2286 = vor.u32 %v2282, %v2285
        %v2287 = vrot.slane %v2286, 4
        %v2289 = vshll.u32 %v2258, 16
        %v2291 = vrot.slane %v2289, 5
        %v2292 = vsel %vm356, %v2287, %v2291
        %v2294 = vshrl.u32 %v2251, 16
        %v2296 = vrot.slane %v2294, 4
        %v2297 = vshll.u32 %v2251, 16
        %v2299 = vrot.slane %v2297, 5
        %v2300 = vor.u32 %v2296, %v2299
        %v2301 = vrot.slane %v2300, 4
        %v2303 = vshll.u32 %v2259, 16
        %v2305 = vrot.slane %v2303, 5
        %v2306 = vsel %vm356, %v2301, %v2305
        %v2308 = vshrl.u32 %v2252, 16
        %v2310 = vrot.slane %v2308, 4
        %v2311 = vshll.u32 %v2252, 16
        %v2313 = vrot.slane %v2311, 5
        %v2314 = vor.u32 %v2310, %v2313
        %v2315 = vrot.slane %v2314, 4
        %v2317 = vshll.u32 %v2260, 16
        %v2319 = vrot.slane %v2317, 5
        %v2320 = vsel %vm356, %v2315, %v2319
        %v2322 = vshrl.u32 %v2253, 16
        %v2324 = vrot.slane %v2322, 4
        %v2325 = vshll.u32 %v2253, 16
        %v2327 = vrot.slane %v2325, 5
        %v2328 = vor.u32 %v2324, %v2327
        %v2329 = vrot.slane %v2328, 4
        %v2331 = vshll.u32 %v2261, 16
        %v2333 = vrot.slane %v2331, 5
        %v2334 = vsel %vm356, %v2329, %v2333
        %v2336 = vshrl.u32 %v2254, 16
        %v2338 = vrot.slane %v2336, 4
        %v2339 = vshll.u32 %v2254, 16
        %v2341 = vrot.slane %v2339, 5
        %v2342 = vor.u32 %v2338, %v2341
        %v2343 = vrot.slane %v2342, 4
        %v2345 = vshll.u32 %v2262, 16
        %v2347 = vrot.slane %v2345, 5
        %v2348 = vsel %vm356, %v2343, %v2347
        %v2350 = vshrl.u32 %v2255, 16
        %v2352 = vrot.slane %v2350, 4
        %v2353 = vshll.u32 %v2255, 16
        %v2355 = vrot.slane %v2353, 5
        %v2356 = vor.u32 %v2352, %v2355
        %v2357 = vrot.slane %v2356, 4
        %v2359 = vshll.u32 %v2263, 16
        %v2361 = vrot.slane %v2359, 5
        %v2362 = vsel %vm356, %v2357, %v2361
        %v2364 = vshrl.u32 %v2256, 16
        %v2366 = vrot.slane %v2364, 4
        %v2367 = vshll.u32 %v2256, 16
        %v2369 = vrot.slane %v2367, 5
        %v2370 = vor.u32 %v2366, %v2369
        %v2371 = vrot.slane %v2370, 4
        %v2373 = vshll.u32 %v2264, 16
        %v2375 = vrot.slane %v2373, 5
        %v2376 = vsel %vm356, %v2371, %v2375
        %v2377 = vld [vmem:[%s2248] sm:$0xe]
        %v2378 = vld [vmem:[%s2248 + $0x8] sm:$0xe]
        %v2379 = vld [vmem:[%s2248 + $0x10] sm:$0xe]
        %v2380 = vld [vmem:[%s2248 + $0x18] sm:$0xe]
        %v2381 = vld [vmem:[%s2248 + $0x20] sm:$0xe]
        %v2382 = vld [vmem:[%s2248 + $0x28] sm:$0xe]
        %v2383 = vld [vmem:[%s2248 + $0x30] sm:$0xe]
        %v2384 = vld [vmem:[%s2248 + $0x38] sm:$0xe]
        %v2401 = vrot.slane %v2377, 5
        %v2402 = vrot.slane %v2401, 4
        %v2403 = vrot.slane %v2257, 5
        %v2404 = vsel %vm495, %v2402, %v2403
        %v2405 = vrot.slane %v2378, 5
        %v2406 = vrot.slane %v2405, 4
        %v2407 = vrot.slane %v2258, 5
        %v2408 = vsel %vm495, %v2406, %v2407
        %v2409 = vrot.slane %v2379, 5
        %v2410 = vrot.slane %v2409, 4
        %v2411 = vrot.slane %v2259, 5
        %v2412 = vsel %vm495, %v2410, %v2411
        %v2413 = vrot.slane %v2380, 5
        %v2414 = vrot.slane %v2413, 4
        %v2415 = vrot.slane %v2260, 5
        %v2416 = vsel %vm495, %v2414, %v2415
        %v2417 = vrot.slane %v2381, 5
        %v2418 = vrot.slane %v2417, 4
        %v2419 = vrot.slane %v2261, 5
        %v2420 = vsel %vm495, %v2418, %v2419
        %v2421 = vrot.slane %v2382, 5
        %v2422 = vrot.slane %v2421, 4
        %v2423 = vrot.slane %v2262, 5
        %v2424 = vsel %vm495, %v2422, %v2423
        %v2425 = vrot.slane %v2383, 5
        %v2426 = vrot.slane %v2425, 4
        %v2427 = vrot.slane %v2263, 5
        %v2428 = vsel %vm495, %v2426, %v2427
        %v2429 = vrot.slane %v2384, 5
        %v2430 = vrot.slane %v2429, 4
        %v2431 = vrot.slane %v2264, 5
        %v2432 = vsel %vm495, %v2430, %v2431
        %v2433 = vld [vmem:[%s331] sm:$0xf]
        %v2434 = vld [vmem:[%s331 + $0x8] sm:$0xf]
        %v2435 = vld [vmem:[%s331 + $0x10] sm:$0xf]
        %v2436 = vld [vmem:[%s331 + $0x18] sm:$0xf]
        %v2437 = vld [vmem:[%s331 + $0x20] sm:$0xf]
        %v2438 = vld [vmem:[%s331 + $0x28] sm:$0xf]
        %v2439 = vld [vmem:[%s331 + $0x30] sm:$0xf]
        %v2440 = vld [vmem:[%s331 + $0x38] sm:$0xf]
        %v2441 = vld [vmem:[%s331 + $0x4] sm:$0x1]
        %v2442 = vld [vmem:[%s331 + $0xc] sm:$0x1]
        %v2443 = vld [vmem:[%s331 + $0x14] sm:$0x1]
        %v2444 = vld [vmem:[%s331 + $0x1c] sm:$0x1]
        %v2445 = vld [vmem:[%s331 + $0x24] sm:$0x1]
        %v2446 = vld [vmem:[%s331 + $0x2c] sm:$0x1]
        %v2447 = vld [vmem:[%s331 + $0x34] sm:$0x1]
        %v2448 = vld [vmem:[%s331 + $0x3c] sm:$0x1]
        %v2450 = vshrl.u32 %v2433, 16
        %v2452 = vrot.slane %v2450, 4
        %v2453 = vshll.u32 %v2433, 16
        %v2455 = vrot.slane %v2453, 5
        %v2456 = vor.u32 %v2452, %v2455
        %v2457 = vrot.slane %v2456, 4
        %v2459 = vshll.u32 %v2441, 16
        %v2461 = vrot.slane %v2459, 5
        %v2462 = vsel %vm356, %v2457, %v2461
        %v2464 = vshrl.u32 %v2434, 16
        %v2466 = vrot.slane %v2464, 4
        %v2467 = vshll.u32 %v2434, 16
        %v2469 = vrot.slane %v2467, 5
        %v2470 = vor.u32 %v2466, %v2469
        %v2471 = vrot.slane %v2470, 4
        %v2473 = vshll.u32 %v2442, 16
        %v2475 = vrot.slane %v2473, 5
        %v2476 = vsel %vm356, %v2471, %v2475
        %v2478 = vshrl.u32 %v2435, 16
        %v2480 = vrot.slane %v2478, 4
        %v2481 = vshll.u32 %v2435, 16
        %v2483 = vrot.slane %v2481, 5
        %v2484 = vor.u32 %v2480, %v2483
        %v2485 = vrot.slane %v2484, 4
        %v2487 = vshll.u32 %v2443, 16
        %v2489 = vrot.slane %v2487, 5
        %v2490 = vsel %vm356, %v2485, %v2489
        %v2492 = vshrl.u32 %v2436, 16
        %v2494 = vrot.slane %v2492, 4
        %v2495 = vshll.u32 %v2436, 16
        %v2497 = vrot.slane %v2495, 5
        %v2498 = vor.u32 %v2494, %v2497
        %v2499 = vrot.slane %v2498, 4
        %v2501 = vshll.u32 %v2444, 16
        %v2503 = vrot.slane %v2501, 5
        %v2504 = vsel %vm356, %v2499, %v2503
        %v2506 = vshrl.u32 %v2437, 16
        %v2508 = vrot.slane %v2506, 4
        %v2509 = vshll.u32 %v2437, 16
        %v2511 = vrot.slane %v2509, 5
        %v2512 = vor.u32 %v2508, %v2511
        %v2513 = vrot.slane %v2512, 4
        %v2515 = vshll.u32 %v2445, 16
        %v2517 = vrot.slane %v2515, 5
        %v2518 = vsel %vm356, %v2513, %v2517
        %v2520 = vshrl.u32 %v2438, 16
        %v2522 = vrot.slane %v2520, 4
        %v2523 = vshll.u32 %v2438, 16
        %v2525 = vrot.slane %v2523, 5
        %v2526 = vor.u32 %v2522, %v2525
        %v2527 = vrot.slane %v2526, 4
        %v2529 = vshll.u32 %v2446, 16
        %v2531 = vrot.slane %v2529, 5
        %v2532 = vsel %vm356, %v2527, %v2531
        %v2534 = vshrl.u32 %v2439, 16
        %v2536 = vrot.slane %v2534, 4
        %v2537 = vshll.u32 %v2439, 16
        %v2539 = vrot.slane %v2537, 5
        %v2540 = vor.u32 %v2536, %v2539
        %v2541 = vrot.slane %v2540, 4
        %v2543 = vshll.u32 %v2447, 16
        %v2545 = vrot.slane %v2543, 5
        %v2546 = vsel %vm356, %v2541, %v2545
        %v2548 = vshrl.u32 %v2440, 16
        %v2550 = vrot.slane %v2548, 4
        %v2551 = vshll.u32 %v2440, 16
        %v2553 = vrot.slane %v2551, 5
        %v2554 = vor.u32 %v2550, %v2553
        %v2555 = vrot.slane %v2554, 4
        %v2557 = vshll.u32 %v2448, 16
        %v2559 = vrot.slane %v2557, 5
        %v2560 = vsel %vm356, %v2555, %v2559
        %v2561 = vld [vmem:[%s331] sm:$0xe]
        %v2562 = vld [vmem:[%s331 + $0x8] sm:$0xe]
        %v2563 = vld [vmem:[%s331 + $0x10] sm:$0xe]
        %v2564 = vld [vmem:[%s331 + $0x18] sm:$0xe]
        %v2565 = vld [vmem:[%s331 + $0x20] sm:$0xe]
        %v2566 = vld [vmem:[%s331 + $0x28] sm:$0xe]
        %v2567 = vld [vmem:[%s331 + $0x30] sm:$0xe]
        %v2568 = vld [vmem:[%s331 + $0x38] sm:$0xe]
        %v2585 = vrot.slane %v2561, 5
        %v2586 = vrot.slane %v2585, 4
        %v2587 = vrot.slane %v2441, 5
        %v2588 = vsel %vm495, %v2586, %v2587
        %v2589 = vrot.slane %v2562, 5
        %v2590 = vrot.slane %v2589, 4
        %v2591 = vrot.slane %v2442, 5
        %v2592 = vsel %vm495, %v2590, %v2591
        %v2593 = vrot.slane %v2563, 5
        %v2594 = vrot.slane %v2593, 4
        %v2595 = vrot.slane %v2443, 5
        %v2596 = vsel %vm495, %v2594, %v2595
        %v2597 = vrot.slane %v2564, 5
        %v2598 = vrot.slane %v2597, 4
        %v2599 = vrot.slane %v2444, 5
        %v2600 = vsel %vm495, %v2598, %v2599
        %v2601 = vrot.slane %v2565, 5
        %v2602 = vrot.slane %v2601, 4
        %v2603 = vrot.slane %v2445, 5
        %v2604 = vsel %vm495, %v2602, %v2603
        %v2605 = vrot.slane %v2566, 5
        %v2606 = vrot.slane %v2605, 4
        %v2607 = vrot.slane %v2446, 5
        %v2608 = vsel %vm495, %v2606, %v2607
        %v2609 = vrot.slane %v2567, 5
        %v2610 = vrot.slane %v2609, 4
        %v2611 = vrot.slane %v2447, 5
        %v2612 = vsel %vm495, %v2610, %v2611
        %v2613 = vrot.slane %v2568, 5
        %v2614 = vrot.slane %v2613, 4
        %v2615 = vrot.slane %v2448, 5
        %v2616 = vsel %vm495, %v2614, %v2615
        %v2617 = vld [vmem:[%s331 + $0x4] sm:$0x3]
        %v2618 = vld [vmem:[%s331 + $0xc] sm:$0x3]
        %v2619 = vld [vmem:[%s331 + $0x14] sm:$0x3]
        %v2620 = vld [vmem:[%s331 + $0x1c] sm:$0x3]
        %v2621 = vld [vmem:[%s331 + $0x24] sm:$0x3]
        %v2622 = vld [vmem:[%s331 + $0x2c] sm:$0x3]
        %v2623 = vld [vmem:[%s331 + $0x34] sm:$0x3]
        %v2624 = vld [vmem:[%s331 + $0x3c] sm:$0x3]
        %v2626 = vshrl.u32 %v2561, 16
        %v2628 = vrot.slane %v2626, 5
        %v2629 = vshll.u32 %v2561, 16
        %v2631 = vrot.slane %v2629, 6
        %v2632 = vor.u32 %v2628, %v2631
        %v2633 = vrot.slane %v2632, 4
        %v2635 = vshrl.u32 %v2617, 16
        %v2637 = vrot.slane %v2635, 5
        %v2638 = vshll.u32 %v2617, 16
        %v2640 = vrot.slane %v2638, 6
        %v2641 = vor.u32 %v2637, %v2640
        %v2642 = vsel %vm538, %v2633, %v2641
        %v2644 = vshrl.u32 %v2562, 16
        %v2646 = vrot.slane %v2644, 5
        %v2647 = vshll.u32 %v2562, 16
        %v2649 = vrot.slane %v2647, 6
        %v2650 = vor.u32 %v2646, %v2649
        %v2651 = vrot.slane %v2650, 4
        %v2653 = vshrl.u32 %v2618, 16
        %v2655 = vrot.slane %v2653, 5
        %v2656 = vshll.u32 %v2618, 16
        %v2658 = vrot.slane %v2656, 6
        %v2659 = vor.u32 %v2655, %v2658
        %v2660 = vsel %vm538, %v2651, %v2659
        %v2662 = vshrl.u32 %v2563, 16
        %v2664 = vrot.slane %v2662, 5
        %v2665 = vshll.u32 %v2563, 16
        %v2667 = vrot.slane %v2665, 6
        %v2668 = vor.u32 %v2664, %v2667
        %v2669 = vrot.slane %v2668, 4
        %v2671 = vshrl.u32 %v2619, 16
        %v2673 = vrot.slane %v2671, 5
        %v2674 = vshll.u32 %v2619, 16
        %v2676 = vrot.slane %v2674, 6
        %v2677 = vor.u32 %v2673, %v2676
        %v2678 = vsel %vm538, %v2669, %v2677
        %v2680 = vshrl.u32 %v2564, 16
        %v2682 = vrot.slane %v2680, 5
        %v2683 = vshll.u32 %v2564, 16
        %v2685 = vrot.slane %v2683, 6
        %v2686 = vor.u32 %v2682, %v2685
        %v2687 = vrot.slane %v2686, 4
        %v2689 = vshrl.u32 %v2620, 16
        %v2691 = vrot.slane %v2689, 5
        %v2692 = vshll.u32 %v2620, 16
        %v2694 = vrot.slane %v2692, 6
        %v2695 = vor.u32 %v2691, %v2694
        %v2696 = vsel %vm538, %v2687, %v2695
        %v2698 = vshrl.u32 %v2565, 16
        %v2700 = vrot.slane %v2698, 5
        %v2701 = vshll.u32 %v2565, 16
        %v2703 = vrot.slane %v2701, 6
        %v2704 = vor.u32 %v2700, %v2703
        %v2705 = vrot.slane %v2704, 4
        %v2707 = vshrl.u32 %v2621, 16
        %v2709 = vrot.slane %v2707, 5
        %v2710 = vshll.u32 %v2621, 16
        %v2712 = vrot.slane %v2710, 6
        %v2713 = vor.u32 %v2709, %v2712
        %v2714 = vsel %vm538, %v2705, %v2713
        %v2716 = vshrl.u32 %v2566, 16
        %v2718 = vrot.slane %v2716, 5
        %v2719 = vshll.u32 %v2566, 16
        %v2721 = vrot.slane %v2719, 6
        %v2722 = vor.u32 %v2718, %v2721
        %v2723 = vrot.slane %v2722, 4
        %v2725 = vshrl.u32 %v2622, 16
        %v2727 = vrot.slane %v2725, 5
        %v2728 = vshll.u32 %v2622, 16
        %v2730 = vrot.slane %v2728, 6
        %v2731 = vor.u32 %v2727, %v2730
        %v2732 = vsel %vm538, %v2723, %v2731
        %v2734 = vshrl.u32 %v2567, 16
        %v2736 = vrot.slane %v2734, 5
        %v2737 = vshll.u32 %v2567, 16
        %v2739 = vrot.slane %v2737, 6
        %v2740 = vor.u32 %v2736, %v2739
        %v2741 = vrot.slane %v2740, 4
        %v2743 = vshrl.u32 %v2623, 16
        %v2745 = vrot.slane %v2743, 5
        %v2746 = vshll.u32 %v2623, 16
        %v2748 = vrot.slane %v2746, 6
        %v2749 = vor.u32 %v2745, %v2748
        %v2750 = vsel %vm538, %v2741, %v2749
        %v2752 = vshrl.u32 %v2568, 16
        %v2754 = vrot.slane %v2752, 5
        %v2755 = vshll.u32 %v2568, 16
        %v2757 = vrot.slane %v2755, 6
        %v2758 = vor.u32 %v2754, %v2757
        %v2759 = vrot.slane %v2758, 4
        %v2761 = vshrl.u32 %v2624, 16
        %v2763 = vrot.slane %v2761, 5
        %v2764 = vshll.u32 %v2624, 16
        %v2766 = vrot.slane %v2764, 6
        %v2767 = vor.u32 %v2763, %v2766
        %v2768 = vsel %vm538, %v2759, %v2767
        %s2769 = scalar_lea.vmem %s331, 8
        %v2770 = vld [vmem:[%s2769] sm:$0xf]
        %v2771 = vld [vmem:[%s2769 + $0x8] sm:$0xf]
        %v2772 = vld [vmem:[%s2769 + $0x10] sm:$0xf]
        %v2773 = vld [vmem:[%s2769 + $0x18] sm:$0xf]
        %v2774 = vld [vmem:[%s2769 + $0x20] sm:$0xf]
        %v2775 = vld [vmem:[%s2769 + $0x28] sm:$0xf]
        %v2776 = vld [vmem:[%s2769 + $0x30] sm:$0xf]
        %v2777 = vld [vmem:[%s2769 + $0x38] sm:$0xf]
        %v2778 = vld [vmem:[%s2769 + $0x4] sm:$0x1]
        %v2779 = vld [vmem:[%s2769 + $0xc] sm:$0x1]
        %v2780 = vld [vmem:[%s2769 + $0x14] sm:$0x1]
        %v2781 = vld [vmem:[%s2769 + $0x1c] sm:$0x1]
        %v2782 = vld [vmem:[%s2769 + $0x24] sm:$0x1]
        %v2783 = vld [vmem:[%s2769 + $0x2c] sm:$0x1]
        %v2784 = vld [vmem:[%s2769 + $0x34] sm:$0x1]
        %v2785 = vld [vmem:[%s2769 + $0x3c] sm:$0x1]
        %v2787 = vshrl.u32 %v2770, 16
        %v2789 = vrot.slane %v2787, 4
        %v2790 = vshll.u32 %v2770, 16
        %v2792 = vrot.slane %v2790, 5
        %v2793 = vor.u32 %v2789, %v2792
        %v2794 = vrot.slane %v2793, 4
        %v2796 = vshll.u32 %v2778, 16
        %v2798 = vrot.slane %v2796, 5
        %v2799 = vsel %vm356, %v2794, %v2798
        %v2801 = vshrl.u32 %v2771, 16
        %v2803 = vrot.slane %v2801, 4
        %v2804 = vshll.u32 %v2771, 16
        %v2806 = vrot.slane %v2804, 5
        %v2807 = vor.u32 %v2803, %v2806
        %v2808 = vrot.slane %v2807, 4
        %v2810 = vshll.u32 %v2779, 16
        %v2812 = vrot.slane %v2810, 5
        %v2813 = vsel %vm356, %v2808, %v2812
        %v2815 = vshrl.u32 %v2772, 16
        %v2817 = vrot.slane %v2815, 4
        %v2818 = vshll.u32 %v2772, 16
        %v2820 = vrot.slane %v2818, 5
        %v2821 = vor.u32 %v2817, %v2820
        %v2822 = vrot.slane %v2821, 4
        %v2824 = vshll.u32 %v2780, 16
        %v2826 = vrot.slane %v2824, 5
        %v2827 = vsel %vm356, %v2822, %v2826
        %v2829 = vshrl.u32 %v2773, 16
        %v2831 = vrot.slane %v2829, 4
        %v2832 = vshll.u32 %v2773, 16
        %v2834 = vrot.slane %v2832, 5
        %v2835 = vor.u32 %v2831, %v2834
        %v2836 = vrot.slane %v2835, 4
        %v2838 = vshll.u32 %v2781, 16
        %v2840 = vrot.slane %v2838, 5
        %v2841 = vsel %vm356, %v2836, %v2840
        %v2843 = vshrl.u32 %v2774, 16
        %v2845 = vrot.slane %v2843, 4
        %v2846 = vshll.u32 %v2774, 16
        %v2848 = vrot.slane %v2846, 5
        %v2849 = vor.u32 %v2845, %v2848
        %v2850 = vrot.slane %v2849, 4
        %v2852 = vshll.u32 %v2782, 16
        %v2854 = vrot.slane %v2852, 5
        %v2855 = vsel %vm356, %v2850, %v2854
        %v2857 = vshrl.u32 %v2775, 16
        %v2859 = vrot.slane %v2857, 4
        %v2860 = vshll.u32 %v2775, 16
        %v2862 = vrot.slane %v2860, 5
        %v2863 = vor.u32 %v2859, %v2862
        %v2864 = vrot.slane %v2863, 4
        %v2866 = vshll.u32 %v2783, 16
        %v2868 = vrot.slane %v2866, 5
        %v2869 = vsel %vm356, %v2864, %v2868
        %v2871 = vshrl.u32 %v2776, 16
        %v2873 = vrot.slane %v2871, 4
        %v2874 = vshll.u32 %v2776, 16
        %v2876 = vrot.slane %v2874, 5
        %v2877 = vor.u32 %v2873, %v2876
        %v2878 = vrot.slane %v2877, 4
        %v2880 = vshll.u32 %v2784, 16
        %v2882 = vrot.slane %v2880, 5
        %v2883 = vsel %vm356, %v2878, %v2882
        %v2885 = vshrl.u32 %v2777, 16
        %v2887 = vrot.slane %v2885, 4
        %v2888 = vshll.u32 %v2777, 16
        %v2890 = vrot.slane %v2888, 5
        %v2891 = vor.u32 %v2887, %v2890
        %v2892 = vrot.slane %v2891, 4
        %v2894 = vshll.u32 %v2785, 16
        %v2896 = vrot.slane %v2894, 5
        %v2897 = vsel %vm356, %v2892, %v2896
        %v2898 = vld [vmem:[%s2769] sm:$0xe]
        %v2899 = vld [vmem:[%s2769 + $0x8] sm:$0xe]
        %v2900 = vld [vmem:[%s2769 + $0x10] sm:$0xe]
        %v2901 = vld [vmem:[%s2769 + $0x18] sm:$0xe]
        %v2902 = vld [vmem:[%s2769 + $0x20] sm:$0xe]
        %v2903 = vld [vmem:[%s2769 + $0x28] sm:$0xe]
        %v2904 = vld [vmem:[%s2769 + $0x30] sm:$0xe]
        %v2905 = vld [vmem:[%s2769 + $0x38] sm:$0xe]
        %v2922 = vrot.slane %v2898, 5
        %v2923 = vrot.slane %v2922, 4
        %v2924 = vrot.slane %v2778, 5
        %v2925 = vsel %vm495, %v2923, %v2924
        %v2926 = vrot.slane %v2899, 5
        %v2927 = vrot.slane %v2926, 4
        %v2928 = vrot.slane %v2779, 5
        %v2929 = vsel %vm495, %v2927, %v2928
        %v2930 = vrot.slane %v2900, 5
        %v2931 = vrot.slane %v2930, 4
        %v2932 = vrot.slane %v2780, 5
        %v2933 = vsel %vm495, %v2931, %v2932
        %v2934 = vrot.slane %v2901, 5
        %v2935 = vrot.slane %v2934, 4
        %v2936 = vrot.slane %v2781, 5
        %v2937 = vsel %vm495, %v2935, %v2936
        %v2938 = vrot.slane %v2902, 5
        %v2939 = vrot.slane %v2938, 4
        %v2940 = vrot.slane %v2782, 5
        %v2941 = vsel %vm495, %v2939, %v2940
        %v2942 = vrot.slane %v2903, 5
        %v2943 = vrot.slane %v2942, 4
        %v2944 = vrot.slane %v2783, 5
        %v2945 = vsel %vm495, %v2943, %v2944
        %v2946 = vrot.slane %v2904, 5
        %v2947 = vrot.slane %v2946, 4
        %v2948 = vrot.slane %v2784, 5
        %v2949 = vsel %vm495, %v2947, %v2948
        %v2950 = vrot.slane %v2905, 5
        %v2951 = vrot.slane %v2950, 4
        %v2952 = vrot.slane %v2785, 5
        %v2953 = vsel %vm495, %v2951, %v2952
        %v2954 = vld [vmem:[%s2769 + $0x4] sm:$0x3]
        %v2955 = vld [vmem:[%s2769 + $0xc] sm:$0x3]
        %v2956 = vld [vmem:[%s2769 + $0x14] sm:$0x3]
        %v2957 = vld [vmem:[%s2769 + $0x1c] sm:$0x3]
        %v2958 = vld [vmem:[%s2769 + $0x24] sm:$0x3]
        %v2959 = vld [vmem:[%s2769 + $0x2c] sm:$0x3]
        %v2960 = vld [vmem:[%s2769 + $0x34] sm:$0x3]
        %v2961 = vld [vmem:[%s2769 + $0x3c] sm:$0x3]
        %v2963 = vshrl.u32 %v2898, 16
        %v2965 = vrot.slane %v2963, 5
        %v2966 = vshll.u32 %v2898, 16
        %v2968 = vrot.slane %v2966, 6
        %v2969 = vor.u32 %v2965, %v2968
        %v2970 = vrot.slane %v2969, 4
        %v2972 = vshrl.u32 %v2954, 16
        %v2974 = vrot.slane %v2972, 5
        %v2975 = vshll.u32 %v2954, 16
        %v2977 = vrot.slane %v2975, 6
        %v2978 = vor.u32 %v2974, %v2977
        %v2979 = vsel %vm538, %v2970, %v2978
        %v2981 = vshrl.u32 %v2899, 16
        %v2983 = vrot.slane %v2981, 5
        %v2984 = vshll.u32 %v2899, 16
        %v2986 = vrot.slane %v2984, 6
        %v2987 = vor.u32 %v2983, %v2986
        %v2988 = vrot.slane %v2987, 4
        %v2990 = vshrl.u32 %v2955, 16
        %v2992 = vrot.slane %v2990, 5
        %v2993 = vshll.u32 %v2955, 16
        %v2995 = vrot.slane %v2993, 6
        %v2996 = vor.u32 %v2992, %v2995
        %v2997 = vsel %vm538, %v2988, %v2996
        %v2999 = vshrl.u32 %v2900, 16
        %v3001 = vrot.slane %v2999, 5
        %v3002 = vshll.u32 %v2900, 16
        %v3004 = vrot.slane %v3002, 6
        %v3005 = vor.u32 %v3001, %v3004
        %v3006 = vrot.slane %v3005, 4
        %v3008 = vshrl.u32 %v2956, 16
        %v3010 = vrot.slane %v3008, 5
        %v3011 = vshll.u32 %v2956, 16
        %v3013 = vrot.slane %v3011, 6
        %v3014 = vor.u32 %v3010, %v3013
        %v3015 = vsel %vm538, %v3006, %v3014
        %v3017 = vshrl.u32 %v2901, 16
        %v3019 = vrot.slane %v3017, 5
        %v3020 = vshll.u32 %v2901, 16
        %v3022 = vrot.slane %v3020, 6
        %v3023 = vor.u32 %v3019, %v3022
        %v3024 = vrot.slane %v3023, 4
        %v3026 = vshrl.u32 %v2957, 16
        %v3028 = vrot.slane %v3026, 5
        %v3029 = vshll.u32 %v2957, 16
        %v3031 = vrot.slane %v3029, 6
        %v3032 = vor.u32 %v3028, %v3031
        %v3033 = vsel %vm538, %v3024, %v3032
        %v3035 = vshrl.u32 %v2902, 16
        %v3037 = vrot.slane %v3035, 5
        %v3038 = vshll.u32 %v2902, 16
        %v3040 = vrot.slane %v3038, 6
        %v3041 = vor.u32 %v3037, %v3040
        %v3042 = vrot.slane %v3041, 4
        %v3044 = vshrl.u32 %v2958, 16
        %v3046 = vrot.slane %v3044, 5
        %v3047 = vshll.u32 %v2958, 16
        %v3049 = vrot.slane %v3047, 6
        %v3050 = vor.u32 %v3046, %v3049
        %v3051 = vsel %vm538, %v3042, %v3050
        %v3053 = vshrl.u32 %v2903, 16
        %v3055 = vrot.slane %v3053, 5
        %v3056 = vshll.u32 %v2903, 16
        %v3058 = vrot.slane %v3056, 6
        %v3059 = vor.u32 %v3055, %v3058
        %v3060 = vrot.slane %v3059, 4
        %v3062 = vshrl.u32 %v2959, 16
        %v3064 = vrot.slane %v3062, 5
        %v3065 = vshll.u32 %v2959, 16
        %v3067 = vrot.slane %v3065, 6
        %v3068 = vor.u32 %v3064, %v3067
        %v3069 = vsel %vm538, %v3060, %v3068
        %v3071 = vshrl.u32 %v2904, 16
        %v3073 = vrot.slane %v3071, 5
        %v3074 = vshll.u32 %v2904, 16
        %v3076 = vrot.slane %v3074, 6
        %v3077 = vor.u32 %v3073, %v3076
        %v3078 = vrot.slane %v3077, 4
        %v3080 = vshrl.u32 %v2960, 16
        %v3082 = vrot.slane %v3080, 5
        %v3083 = vshll.u32 %v2960, 16
        %v3085 = vrot.slane %v3083, 6
        %v3086 = vor.u32 %v3082, %v3085
        %v3087 = vsel %vm538, %v3078, %v3086
        %v3089 = vshrl.u32 %v2905, 16
        %v3091 = vrot.slane %v3089, 5
        %v3092 = vshll.u32 %v2905, 16
        %v3094 = vrot.slane %v3092, 6
        %v3095 = vor.u32 %v3091, %v3094
        %v3096 = vrot.slane %v3095, 4
        %v3098 = vshrl.u32 %v2961, 16
        %v3100 = vrot.slane %v3098, 5
        %v3101 = vshll.u32 %v2961, 16
        %v3103 = vrot.slane %v3101, 6
        %v3104 = vor.u32 %v3100, %v3103
        %v3105 = vsel %vm538, %v3096, %v3104
        %s3106 = scalar_lea.vmem %s331, 16
        %v3107 = vld [vmem:[%s3106] sm:$0xf]
        %v3108 = vld [vmem:[%s3106 + $0x8] sm:$0xf]
        %v3109 = vld [vmem:[%s3106 + $0x10] sm:$0xf]
        %v3110 = vld [vmem:[%s3106 + $0x18] sm:$0xf]
        %v3111 = vld [vmem:[%s3106 + $0x20] sm:$0xf]
        %v3112 = vld [vmem:[%s3106 + $0x28] sm:$0xf]
        %v3113 = vld [vmem:[%s3106 + $0x30] sm:$0xf]
        %v3114 = vld [vmem:[%s3106 + $0x38] sm:$0xf]
        %v3115 = vld [vmem:[%s3106 + $0x4] sm:$0x1]
        %v3116 = vld [vmem:[%s3106 + $0xc] sm:$0x1]
        %v3117 = vld [vmem:[%s3106 + $0x14] sm:$0x1]
        %v3118 = vld [vmem:[%s3106 + $0x1c] sm:$0x1]
        %v3119 = vld [vmem:[%s3106 + $0x24] sm:$0x1]
        %v3120 = vld [vmem:[%s3106 + $0x2c] sm:$0x1]
        %v3121 = vld [vmem:[%s3106 + $0x34] sm:$0x1]
        %v3122 = vld [vmem:[%s3106 + $0x3c] sm:$0x1]
        %v3124 = vshrl.u32 %v3107, 16
        %v3126 = vrot.slane %v3124, 4
        %v3127 = vshll.u32 %v3107, 16
        %v3129 = vrot.slane %v3127, 5
        %v3130 = vor.u32 %v3126, %v3129
        %v3131 = vrot.slane %v3130, 4
        %v3133 = vshll.u32 %v3115, 16
        %v3135 = vrot.slane %v3133, 5
        %v3136 = vsel %vm356, %v3131, %v3135
        %v3138 = vshrl.u32 %v3108, 16
        %v3140 = vrot.slane %v3138, 4
        %v3141 = vshll.u32 %v3108, 16
        %v3143 = vrot.slane %v3141, 5
        %v3144 = vor.u32 %v3140, %v3143
        %v3145 = vrot.slane %v3144, 4
        %v3147 = vshll.u32 %v3116, 16
        %v3149 = vrot.slane %v3147, 5
        %v3150 = vsel %vm356, %v3145, %v3149
        %v3152 = vshrl.u32 %v3109, 16
        %v3154 = vrot.slane %v3152, 4
        %v3155 = vshll.u32 %v3109, 16
        %v3157 = vrot.slane %v3155, 5
        %v3158 = vor.u32 %v3154, %v3157
        %v3159 = vrot.slane %v3158, 4
        %v3161 = vshll.u32 %v3117, 16
        %v3163 = vrot.slane %v3161, 5
        %v3164 = vsel %vm356, %v3159, %v3163
        %v3166 = vshrl.u32 %v3110, 16
        %v3168 = vrot.slane %v3166, 4
        %v3169 = vshll.u32 %v3110, 16
        %v3171 = vrot.slane %v3169, 5
        %v3172 = vor.u32 %v3168, %v3171
        %v3173 = vrot.slane %v3172, 4
        %v3175 = vshll.u32 %v3118, 16
        %v3177 = vrot.slane %v3175, 5
        %v3178 = vsel %vm356, %v3173, %v3177
        %v3180 = vshrl.u32 %v3111, 16
        %v3182 = vrot.slane %v3180, 4
        %v3183 = vshll.u32 %v3111, 16
        %v3185 = vrot.slane %v3183, 5
        %v3186 = vor.u32 %v3182, %v3185
        %v3187 = vrot.slane %v3186, 4
        %v3189 = vshll.u32 %v3119, 16
        %v3191 = vrot.slane %v3189, 5
        %v3192 = vsel %vm356, %v3187, %v3191
        %v3194 = vshrl.u32 %v3112, 16
        %v3196 = vrot.slane %v3194, 4
        %v3197 = vshll.u32 %v3112, 16
        %v3199 = vrot.slane %v3197, 5
        %v3200 = vor.u32 %v3196, %v3199
        %v3201 = vrot.slane %v3200, 4
        %v3203 = vshll.u32 %v3120, 16
        %v3205 = vrot.slane %v3203, 5
        %v3206 = vsel %vm356, %v3201, %v3205
        %v3208 = vshrl.u32 %v3113, 16
        %v3210 = vrot.slane %v3208, 4
        %v3211 = vshll.u32 %v3113, 16
        %v3213 = vrot.slane %v3211, 5
        %v3214 = vor.u32 %v3210, %v3213
        %v3215 = vrot.slane %v3214, 4
        %v3217 = vshll.u32 %v3121, 16
        %v3219 = vrot.slane %v3217, 5
        %v3220 = vsel %vm356, %v3215, %v3219
        %v3222 = vshrl.u32 %v3114, 16
        %v3224 = vrot.slane %v3222, 4
        %v3225 = vshll.u32 %v3114, 16
        %v3227 = vrot.slane %v3225, 5
        %v3228 = vor.u32 %v3224, %v3227
        %v3229 = vrot.slane %v3228, 4
        %v3231 = vshll.u32 %v3122, 16
        %v3233 = vrot.slane %v3231, 5
        %v3234 = vsel %vm356, %v3229, %v3233
        %v3235 = vld [vmem:[%s3106] sm:$0xe]
        %v3236 = vld [vmem:[%s3106 + $0x8] sm:$0xe]
        %v3237 = vld [vmem:[%s3106 + $0x10] sm:$0xe]
        %v3238 = vld [vmem:[%s3106 + $0x18] sm:$0xe]
        %v3239 = vld [vmem:[%s3106 + $0x20] sm:$0xe]
        %v3240 = vld [vmem:[%s3106 + $0x28] sm:$0xe]
        %v3241 = vld [vmem:[%s3106 + $0x30] sm:$0xe]
        %v3242 = vld [vmem:[%s3106 + $0x38] sm:$0xe]
        %v3259 = vrot.slane %v3235, 5
        %v3260 = vrot.slane %v3259, 4
        %v3261 = vrot.slane %v3115, 5
        %v3262 = vsel %vm495, %v3260, %v3261
        %v3263 = vrot.slane %v3236, 5
        %v3264 = vrot.slane %v3263, 4
        %v3265 = vrot.slane %v3116, 5
        %v3266 = vsel %vm495, %v3264, %v3265
        %v3267 = vrot.slane %v3237, 5
        %v3268 = vrot.slane %v3267, 4
        %v3269 = vrot.slane %v3117, 5
        %v3270 = vsel %vm495, %v3268, %v3269
        %v3271 = vrot.slane %v3238, 5
        %v3272 = vrot.slane %v3271, 4
        %v3273 = vrot.slane %v3118, 5
        %v3274 = vsel %vm495, %v3272, %v3273
        %v3275 = vrot.slane %v3239, 5
        %v3276 = vrot.slane %v3275, 4
        %v3277 = vrot.slane %v3119, 5
        %v3278 = vsel %vm495, %v3276, %v3277
        %v3279 = vrot.slane %v3240, 5
        %v3280 = vrot.slane %v3279, 4
        %v3281 = vrot.slane %v3120, 5
        %v3282 = vsel %vm495, %v3280, %v3281
        %v3283 = vrot.slane %v3241, 5
        %v3284 = vrot.slane %v3283, 4
        %v3285 = vrot.slane %v3121, 5
        %v3286 = vsel %vm495, %v3284, %v3285
        %v3287 = vrot.slane %v3242, 5
        %v3288 = vrot.slane %v3287, 4
        %v3289 = vrot.slane %v3122, 5
        %v3290 = vsel %vm495, %v3288, %v3289
        %v3291 = vld [vmem:[%s3106 + $0x4] sm:$0x3]
        %v3292 = vld [vmem:[%s3106 + $0xc] sm:$0x3]
        %v3293 = vld [vmem:[%s3106 + $0x14] sm:$0x3]
        %v3294 = vld [vmem:[%s3106 + $0x1c] sm:$0x3]
        %v3295 = vld [vmem:[%s3106 + $0x24] sm:$0x3]
        %v3296 = vld [vmem:[%s3106 + $0x2c] sm:$0x3]
        %v3297 = vld [vmem:[%s3106 + $0x34] sm:$0x3]
        %v3298 = vld [vmem:[%s3106 + $0x3c] sm:$0x3]
        %v3300 = vshrl.u32 %v3235, 16
        %v3302 = vrot.slane %v3300, 5
        %v3303 = vshll.u32 %v3235, 16
        %v3305 = vrot.slane %v3303, 6
        %v3306 = vor.u32 %v3302, %v3305
        %v3307 = vrot.slane %v3306, 4
        %v3309 = vshrl.u32 %v3291, 16
        %v3311 = vrot.slane %v3309, 5
        %v3312 = vshll.u32 %v3291, 16
        %v3314 = vrot.slane %v3312, 6
        %v3315 = vor.u32 %v3311, %v3314
        %v3316 = vsel %vm538, %v3307, %v3315
        %v3318 = vshrl.u32 %v3236, 16
        %v3320 = vrot.slane %v3318, 5
        %v3321 = vshll.u32 %v3236, 16
        %v3323 = vrot.slane %v3321, 6
        %v3324 = vor.u32 %v3320, %v3323
        %v3325 = vrot.slane %v3324, 4
        %v3327 = vshrl.u32 %v3292, 16
        %v3329 = vrot.slane %v3327, 5
        %v3330 = vshll.u32 %v3292, 16
        %v3332 = vrot.slane %v3330, 6
        %v3333 = vor.u32 %v3329, %v3332
        %v3334 = vsel %vm538, %v3325, %v3333
        %v3336 = vshrl.u32 %v3237, 16
        %v3338 = vrot.slane %v3336, 5
        %v3339 = vshll.u32 %v3237, 16
        %v3341 = vrot.slane %v3339, 6
        %v3342 = vor.u32 %v3338, %v3341
        %v3343 = vrot.slane %v3342, 4
        %v3345 = vshrl.u32 %v3293, 16
        %v3347 = vrot.slane %v3345, 5
        %v3348 = vshll.u32 %v3293, 16
        %v3350 = vrot.slane %v3348, 6
        %v3351 = vor.u32 %v3347, %v3350
        %v3352 = vsel %vm538, %v3343, %v3351
        %v3354 = vshrl.u32 %v3238, 16
        %v3356 = vrot.slane %v3354, 5
        %v3357 = vshll.u32 %v3238, 16
        %v3359 = vrot.slane %v3357, 6
        %v3360 = vor.u32 %v3356, %v3359
        %v3361 = vrot.slane %v3360, 4
        %v3363 = vshrl.u32 %v3294, 16
        %v3365 = vrot.slane %v3363, 5
        %v3366 = vshll.u32 %v3294, 16
        %v3368 = vrot.slane %v3366, 6
        %v3369 = vor.u32 %v3365, %v3368
        %v3370 = vsel %vm538, %v3361, %v3369
        %v3372 = vshrl.u32 %v3239, 16
        %v3374 = vrot.slane %v3372, 5
        %v3375 = vshll.u32 %v3239, 16
        %v3377 = vrot.slane %v3375, 6
        %v3378 = vor.u32 %v3374, %v3377
        %v3379 = vrot.slane %v3378, 4
        %v3381 = vshrl.u32 %v3295, 16
        %v3383 = vrot.slane %v3381, 5
        %v3384 = vshll.u32 %v3295, 16
        %v3386 = vrot.slane %v3384, 6
        %v3387 = vor.u32 %v3383, %v3386
        %v3388 = vsel %vm538, %v3379, %v3387
        %v3390 = vshrl.u32 %v3240, 16
        %v3392 = vrot.slane %v3390, 5
        %v3393 = vshll.u32 %v3240, 16
        %v3395 = vrot.slane %v3393, 6
        %v3396 = vor.u32 %v3392, %v3395
        %v3397 = vrot.slane %v3396, 4
        %v3399 = vshrl.u32 %v3296, 16
        %v3401 = vrot.slane %v3399, 5
        %v3402 = vshll.u32 %v3296, 16
        %v3404 = vrot.slane %v3402, 6
        %v3405 = vor.u32 %v3401, %v3404
        %v3406 = vsel %vm538, %v3397, %v3405
        %v3408 = vshrl.u32 %v3241, 16
        %v3410 = vrot.slane %v3408, 5
        %v3411 = vshll.u32 %v3241, 16
        %v3413 = vrot.slane %v3411, 6
        %v3414 = vor.u32 %v3410, %v3413
        %v3415 = vrot.slane %v3414, 4
        %v3417 = vshrl.u32 %v3297, 16
        %v3419 = vrot.slane %v3417, 5
        %v3420 = vshll.u32 %v3297, 16
        %v3422 = vrot.slane %v3420, 6
        %v3423 = vor.u32 %v3419, %v3422
        %v3424 = vsel %vm538, %v3415, %v3423
        %v3426 = vshrl.u32 %v3242, 16
        %v3428 = vrot.slane %v3426, 5
        %v3429 = vshll.u32 %v3242, 16
        %v3431 = vrot.slane %v3429, 6
        %v3432 = vor.u32 %v3428, %v3431
        %v3433 = vrot.slane %v3432, 4
        %v3435 = vshrl.u32 %v3298, 16
        %v3437 = vrot.slane %v3435, 5
        %v3438 = vshll.u32 %v3298, 16
        %v3440 = vrot.slane %v3438, 6
        %v3441 = vor.u32 %v3437, %v3440
        %v3442 = vsel %vm538, %v3433, %v3441
        %v3443 = vld [vmem:[%s336] sm:$0xf]
        %v3444 = vld [vmem:[%s336 + $0x8] sm:$0xf]
        %v3445 = vld [vmem:[%s336 + $0x10] sm:$0xf]
        %v3446 = vld [vmem:[%s336 + $0x18] sm:$0xf]
        %v3447 = vld [vmem:[%s336 + $0x20] sm:$0xf]
        %v3448 = vld [vmem:[%s336 + $0x28] sm:$0xf]
        %v3449 = vld [vmem:[%s336 + $0x30] sm:$0xf]
        %v3450 = vld [vmem:[%s336 + $0x38] sm:$0xf]
        %v3451 = vld [vmem:[%s336 + $0x4] sm:$0x1]
        %v3452 = vld [vmem:[%s336 + $0xc] sm:$0x1]
        %v3453 = vld [vmem:[%s336 + $0x14] sm:$0x1]
        %v3454 = vld [vmem:[%s336 + $0x1c] sm:$0x1]
        %v3455 = vld [vmem:[%s336 + $0x24] sm:$0x1]
        %v3456 = vld [vmem:[%s336 + $0x2c] sm:$0x1]
        %v3457 = vld [vmem:[%s336 + $0x34] sm:$0x1]
        %v3458 = vld [vmem:[%s336 + $0x3c] sm:$0x1]
        %v3460 = vshrl.u32 %v3443, 16
        %v3462 = vrot.slane %v3460, 4
        %v3463 = vshll.u32 %v3443, 16
        %v3465 = vrot.slane %v3463, 5
        %v3466 = vor.u32 %v3462, %v3465
        %v3467 = vrot.slane %v3466, 4
        %v3469 = vshll.u32 %v3451, 16
        %v3471 = vrot.slane %v3469, 5
        %v3472 = vsel %vm356, %v3467, %v3471
        %v3474 = vshrl.u32 %v3444, 16
        %v3476 = vrot.slane %v3474, 4
        %v3477 = vshll.u32 %v3444, 16
        %v3479 = vrot.slane %v3477, 5
        %v3480 = vor.u32 %v3476, %v3479
        %v3481 = vrot.slane %v3480, 4
        %v3483 = vshll.u32 %v3452, 16
        %v3485 = vrot.slane %v3483, 5
        %v3486 = vsel %vm356, %v3481, %v3485
        %v3488 = vshrl.u32 %v3445, 16
        %v3490 = vrot.slane %v3488, 4
        %v3491 = vshll.u32 %v3445, 16
        %v3493 = vrot.slane %v3491, 5
        %v3494 = vor.u32 %v3490, %v3493
        %v3495 = vrot.slane %v3494, 4
        %v3497 = vshll.u32 %v3453, 16
        %v3499 = vrot.slane %v3497, 5
        %v3500 = vsel %vm356, %v3495, %v3499
        %v3502 = vshrl.u32 %v3446, 16
        %v3504 = vrot.slane %v3502, 4
        %v3505 = vshll.u32 %v3446, 16
        %v3507 = vrot.slane %v3505, 5
        %v3508 = vor.u32 %v3504, %v3507
        %v3509 = vrot.slane %v3508, 4
        %v3511 = vshll.u32 %v3454, 16
        %v3513 = vrot.slane %v3511, 5
        %v3514 = vsel %vm356, %v3509, %v3513
        %v3516 = vshrl.u32 %v3447, 16
        %v3518 = vrot.slane %v3516, 4
        %v3519 = vshll.u32 %v3447, 16
        %v3521 = vrot.slane %v3519, 5
        %v3522 = vor.u32 %v3518, %v3521
        %v3523 = vrot.slane %v3522, 4
        %v3525 = vshll.u32 %v3455, 16
        %v3527 = vrot.slane %v3525, 5
        %v3528 = vsel %vm356, %v3523, %v3527
        %v3530 = vshrl.u32 %v3448, 16
        %v3532 = vrot.slane %v3530, 4
        %v3533 = vshll.u32 %v3448, 16
        %v3535 = vrot.slane %v3533, 5
        %v3536 = vor.u32 %v3532, %v3535
        %v3537 = vrot.slane %v3536, 4
        %v3539 = vshll.u32 %v3456, 16
        %v3541 = vrot.slane %v3539, 5
        %v3542 = vsel %vm356, %v3537, %v3541
        %v3544 = vshrl.u32 %v3449, 16
        %v3546 = vrot.slane %v3544, 4
        %v3547 = vshll.u32 %v3449, 16
        %v3549 = vrot.slane %v3547, 5
        %v3550 = vor.u32 %v3546, %v3549
        %v3551 = vrot.slane %v3550, 4
        %v3553 = vshll.u32 %v3457, 16
        %v3555 = vrot.slane %v3553, 5
        %v3556 = vsel %vm356, %v3551, %v3555
        %v3558 = vshrl.u32 %v3450, 16
        %v3560 = vrot.slane %v3558, 4
        %v3561 = vshll.u32 %v3450, 16
        %v3563 = vrot.slane %v3561, 5
        %v3564 = vor.u32 %v3560, %v3563
        %v3565 = vrot.slane %v3564, 4
        %v3567 = vshll.u32 %v3458, 16
        %v3569 = vrot.slane %v3567, 5
        %v3570 = vsel %vm356, %v3565, %v3569
        %v3571 = vld [vmem:[%s336] sm:$0xe]
        %v3572 = vld [vmem:[%s336 + $0x8] sm:$0xe]
        %v3573 = vld [vmem:[%s336 + $0x10] sm:$0xe]
        %v3574 = vld [vmem:[%s336 + $0x18] sm:$0xe]
        %v3575 = vld [vmem:[%s336 + $0x20] sm:$0xe]
        %v3576 = vld [vmem:[%s336 + $0x28] sm:$0xe]
        %v3577 = vld [vmem:[%s336 + $0x30] sm:$0xe]
        %v3578 = vld [vmem:[%s336 + $0x38] sm:$0xe]
        %v3595 = vrot.slane %v3571, 5
        %v3596 = vrot.slane %v3595, 4
        %v3597 = vrot.slane %v3451, 5
        %v3598 = vsel %vm495, %v3596, %v3597
        %v3599 = vrot.slane %v3572, 5
        %v3600 = vrot.slane %v3599, 4
        %v3601 = vrot.slane %v3452, 5
        %v3602 = vsel %vm495, %v3600, %v3601
        %v3603 = vrot.slane %v3573, 5
        %v3604 = vrot.slane %v3603, 4
        %v3605 = vrot.slane %v3453, 5
        %v3606 = vsel %vm495, %v3604, %v3605
        %v3607 = vrot.slane %v3574, 5
        %v3608 = vrot.slane %v3607, 4
        %v3609 = vrot.slane %v3454, 5
        %v3610 = vsel %vm495, %v3608, %v3609
        %v3611 = vrot.slane %v3575, 5
        %v3612 = vrot.slane %v3611, 4
        %v3613 = vrot.slane %v3455, 5
        %v3614 = vsel %vm495, %v3612, %v3613
        %v3615 = vrot.slane %v3576, 5
        %v3616 = vrot.slane %v3615, 4
        %v3617 = vrot.slane %v3456, 5
        %v3618 = vsel %vm495, %v3616, %v3617
        %v3619 = vrot.slane %v3577, 5
        %v3620 = vrot.slane %v3619, 4
        %v3621 = vrot.slane %v3457, 5
        %v3622 = vsel %vm495, %v3620, %v3621
        %v3623 = vrot.slane %v3578, 5
        %v3624 = vrot.slane %v3623, 4
        %v3625 = vrot.slane %v3458, 5
        %v3626 = vsel %vm495, %v3624, %v3625
        %s3627 = scalar_lea.vmem %s336, 8
        %v3628 = vld [vmem:[%s3627] sm:$0xf]
        %v3629 = vld [vmem:[%s3627 + $0x8] sm:$0xf]
        %v3630 = vld [vmem:[%s3627 + $0x10] sm:$0xf]
        %v3631 = vld [vmem:[%s3627 + $0x18] sm:$0xf]
        %v3632 = vld [vmem:[%s3627 + $0x20] sm:$0xf]
        %v3633 = vld [vmem:[%s3627 + $0x28] sm:$0xf]
        %v3634 = vld [vmem:[%s3627 + $0x30] sm:$0xf]
        %v3635 = vld [vmem:[%s3627 + $0x38] sm:$0xf]
        %v3636 = vld [vmem:[%s3627 + $0x4] sm:$0x1]
        %v3637 = vld [vmem:[%s3627 + $0xc] sm:$0x1]
        %v3638 = vld [vmem:[%s3627 + $0x14] sm:$0x1]
        %v3639 = vld [vmem:[%s3627 + $0x1c] sm:$0x1]
        %v3640 = vld [vmem:[%s3627 + $0x24] sm:$0x1]
        %v3641 = vld [vmem:[%s3627 + $0x2c] sm:$0x1]
        %v3642 = vld [vmem:[%s3627 + $0x34] sm:$0x1]
        %v3643 = vld [vmem:[%s3627 + $0x3c] sm:$0x1]
        %v3645 = vshrl.u32 %v3628, 16
        %v3647 = vrot.slane %v3645, 4
        %v3648 = vshll.u32 %v3628, 16
        %v3650 = vrot.slane %v3648, 5
        %v3651 = vor.u32 %v3647, %v3650
        %v3652 = vrot.slane %v3651, 4
        %v3654 = vshll.u32 %v3636, 16
        %v3656 = vrot.slane %v3654, 5
        %v3657 = vsel %vm356, %v3652, %v3656
        %v3659 = vshrl.u32 %v3629, 16
        %v3661 = vrot.slane %v3659, 4
        %v3662 = vshll.u32 %v3629, 16
        %v3664 = vrot.slane %v3662, 5
        %v3665 = vor.u32 %v3661, %v3664
        %v3666 = vrot.slane %v3665, 4
        %v3668 = vshll.u32 %v3637, 16
        %v3670 = vrot.slane %v3668, 5
        %v3671 = vsel %vm356, %v3666, %v3670
        %v3673 = vshrl.u32 %v3630, 16
        %v3675 = vrot.slane %v3673, 4
        %v3676 = vshll.u32 %v3630, 16
        %v3678 = vrot.slane %v3676, 5
        %v3679 = vor.u32 %v3675, %v3678
        %v3680 = vrot.slane %v3679, 4
        %v3682 = vshll.u32 %v3638, 16
        %v3684 = vrot.slane %v3682, 5
        %v3685 = vsel %vm356, %v3680, %v3684
        %v3687 = vshrl.u32 %v3631, 16
        %v3689 = vrot.slane %v3687, 4
        %v3690 = vshll.u32 %v3631, 16
        %v3692 = vrot.slane %v3690, 5
        %v3693 = vor.u32 %v3689, %v3692
        %v3694 = vrot.slane %v3693, 4
        %v3696 = vshll.u32 %v3639, 16
        %v3698 = vrot.slane %v3696, 5
        %v3699 = vsel %vm356, %v3694, %v3698
        %v3701 = vshrl.u32 %v3632, 16
        %v3703 = vrot.slane %v3701, 4
        %v3704 = vshll.u32 %v3632, 16
        %v3706 = vrot.slane %v3704, 5
        %v3707 = vor.u32 %v3703, %v3706
        %v3708 = vrot.slane %v3707, 4
        %v3710 = vshll.u32 %v3640, 16
        %v3712 = vrot.slane %v3710, 5
        %v3713 = vsel %vm356, %v3708, %v3712
        %v3715 = vshrl.u32 %v3633, 16
        %v3717 = vrot.slane %v3715, 4
        %v3718 = vshll.u32 %v3633, 16
        %v3720 = vrot.slane %v3718, 5
        %v3721 = vor.u32 %v3717, %v3720
        %v3722 = vrot.slane %v3721, 4
        %v3724 = vshll.u32 %v3641, 16
        %v3726 = vrot.slane %v3724, 5
        %v3727 = vsel %vm356, %v3722, %v3726
        %v3729 = vshrl.u32 %v3634, 16
        %v3731 = vrot.slane %v3729, 4
        %v3732 = vshll.u32 %v3634, 16
        %v3734 = vrot.slane %v3732, 5
        %v3735 = vor.u32 %v3731, %v3734
        %v3736 = vrot.slane %v3735, 4
        %v3738 = vshll.u32 %v3642, 16
        %v3740 = vrot.slane %v3738, 5
        %v3741 = vsel %vm356, %v3736, %v3740
        %v3743 = vshrl.u32 %v3635, 16
        %v3745 = vrot.slane %v3743, 4
        %v3746 = vshll.u32 %v3635, 16
        %v3748 = vrot.slane %v3746, 5
        %v3749 = vor.u32 %v3745, %v3748
        %v3750 = vrot.slane %v3749, 4
        %v3752 = vshll.u32 %v3643, 16
        %v3754 = vrot.slane %v3752, 5
        %v3755 = vsel %vm356, %v3750, %v3754
        %v3756 = vld [vmem:[%s3627] sm:$0xe]
        %v3757 = vld [vmem:[%s3627 + $0x8] sm:$0xe]
        %v3758 = vld [vmem:[%s3627 + $0x10] sm:$0xe]
        %v3759 = vld [vmem:[%s3627 + $0x18] sm:$0xe]
        %v3760 = vld [vmem:[%s3627 + $0x20] sm:$0xe]
        %v3761 = vld [vmem:[%s3627 + $0x28] sm:$0xe]
        %v3762 = vld [vmem:[%s3627 + $0x30] sm:$0xe]
        %v3763 = vld [vmem:[%s3627 + $0x38] sm:$0xe]
        %v3780 = vrot.slane %v3756, 5
        %v3781 = vrot.slane %v3780, 4
        %v3782 = vrot.slane %v3636, 5
        %v3783 = vsel %vm495, %v3781, %v3782
        %v3784 = vrot.slane %v3757, 5
        %v3785 = vrot.slane %v3784, 4
        %v3786 = vrot.slane %v3637, 5
        %v3787 = vsel %vm495, %v3785, %v3786
        %v3788 = vrot.slane %v3758, 5
        %v3789 = vrot.slane %v3788, 4
        %v3790 = vrot.slane %v3638, 5
        %v3791 = vsel %vm495, %v3789, %v3790
        %v3792 = vrot.slane %v3759, 5
        %v3793 = vrot.slane %v3792, 4
        %v3794 = vrot.slane %v3639, 5
        %v3795 = vsel %vm495, %v3793, %v3794
        %v3796 = vrot.slane %v3760, 5
        %v3797 = vrot.slane %v3796, 4
        %v3798 = vrot.slane %v3640, 5
        %v3799 = vsel %vm495, %v3797, %v3798
        %v3800 = vrot.slane %v3761, 5
        %v3801 = vrot.slane %v3800, 4
        %v3802 = vrot.slane %v3641, 5
        %v3803 = vsel %vm495, %v3801, %v3802
        %v3804 = vrot.slane %v3762, 5
        %v3805 = vrot.slane %v3804, 4
        %v3806 = vrot.slane %v3642, 5
        %v3807 = vsel %vm495, %v3805, %v3806
        %v3808 = vrot.slane %v3763, 5
        %v3809 = vrot.slane %v3808, 4
        %v3810 = vrot.slane %v3643, 5
        %v3811 = vsel %vm495, %v3809, %v3810
        %s3812 = scalar_lea.vmem %s336, 16
        %v3813 = vld [vmem:[%s3812] sm:$0xf]
        %v3814 = vld [vmem:[%s3812 + $0x8] sm:$0xf]
        %v3815 = vld [vmem:[%s3812 + $0x10] sm:$0xf]
        %v3816 = vld [vmem:[%s3812 + $0x18] sm:$0xf]
        %v3817 = vld [vmem:[%s3812 + $0x20] sm:$0xf]
        %v3818 = vld [vmem:[%s3812 + $0x28] sm:$0xf]
        %v3819 = vld [vmem:[%s3812 + $0x30] sm:$0xf]
        %v3820 = vld [vmem:[%s3812 + $0x38] sm:$0xf]
        %v3821 = vld [vmem:[%s3812 + $0x4] sm:$0x1]
        %v3822 = vld [vmem:[%s3812 + $0xc] sm:$0x1]
        %v3823 = vld [vmem:[%s3812 + $0x14] sm:$0x1]
        %v3824 = vld [vmem:[%s3812 + $0x1c] sm:$0x1]
        %v3825 = vld [vmem:[%s3812 + $0x24] sm:$0x1]
        %v3826 = vld [vmem:[%s3812 + $0x2c] sm:$0x1]
        %v3827 = vld [vmem:[%s3812 + $0x34] sm:$0x1]
        %v3828 = vld [vmem:[%s3812 + $0x3c] sm:$0x1]
        %v3830 = vshrl.u32 %v3813, 16
        %v3832 = vrot.slane %v3830, 4
        %v3833 = vshll.u32 %v3813, 16
        %v3835 = vrot.slane %v3833, 5
        %v3836 = vor.u32 %v3832, %v3835
        %v3837 = vrot.slane %v3836, 4
        %v3839 = vshll.u32 %v3821, 16
        %v3841 = vrot.slane %v3839, 5
        %v3842 = vsel %vm356, %v3837, %v3841
        %v3844 = vshrl.u32 %v3814, 16
        %v3846 = vrot.slane %v3844, 4
        %v3847 = vshll.u32 %v3814, 16
        %v3849 = vrot.slane %v3847, 5
        %v3850 = vor.u32 %v3846, %v3849
        %v3851 = vrot.slane %v3850, 4
        %v3853 = vshll.u32 %v3822, 16
        %v3855 = vrot.slane %v3853, 5
        %v3856 = vsel %vm356, %v3851, %v3855
        %v3858 = vshrl.u32 %v3815, 16
        %v3860 = vrot.slane %v3858, 4
        %v3861 = vshll.u32 %v3815, 16
        %v3863 = vrot.slane %v3861, 5
        %v3864 = vor.u32 %v3860, %v3863
        %v3865 = vrot.slane %v3864, 4
        %v3867 = vshll.u32 %v3823, 16
        %v3869 = vrot.slane %v3867, 5
        %v3870 = vsel %vm356, %v3865, %v3869
        %v3872 = vshrl.u32 %v3816, 16
        %v3874 = vrot.slane %v3872, 4
        %v3875 = vshll.u32 %v3816, 16
        %v3877 = vrot.slane %v3875, 5
        %v3878 = vor.u32 %v3874, %v3877
        %v3879 = vrot.slane %v3878, 4
        %v3881 = vshll.u32 %v3824, 16
        %v3883 = vrot.slane %v3881, 5
        %v3884 = vsel %vm356, %v3879, %v3883
        %v3886 = vshrl.u32 %v3817, 16
        %v3888 = vrot.slane %v3886, 4
        %v3889 = vshll.u32 %v3817, 16
        %v3891 = vrot.slane %v3889, 5
        %v3892 = vor.u32 %v3888, %v3891
        %v3893 = vrot.slane %v3892, 4
        %v3895 = vshll.u32 %v3825, 16
        %v3897 = vrot.slane %v3895, 5
        %v3898 = vsel %vm356, %v3893, %v3897
        %v3900 = vshrl.u32 %v3818, 16
        %v3902 = vrot.slane %v3900, 4
        %v3903 = vshll.u32 %v3818, 16
        %v3905 = vrot.slane %v3903, 5
        %v3906 = vor.u32 %v3902, %v3905
        %v3907 = vrot.slane %v3906, 4
        %v3909 = vshll.u32 %v3826, 16
        %v3911 = vrot.slane %v3909, 5
        %v3912 = vsel %vm356, %v3907, %v3911
        %v3914 = vshrl.u32 %v3819, 16
        %v3916 = vrot.slane %v3914, 4
        %v3917 = vshll.u32 %v3819, 16
        %v3919 = vrot.slane %v3917, 5
        %v3920 = vor.u32 %v3916, %v3919
        %v3921 = vrot.slane %v3920, 4
        %v3923 = vshll.u32 %v3827, 16
        %v3925 = vrot.slane %v3923, 5
        %v3926 = vsel %vm356, %v3921, %v3925
        %v3928 = vshrl.u32 %v3820, 16
        %v3930 = vrot.slane %v3928, 4
        %v3931 = vshll.u32 %v3820, 16
        %v3933 = vrot.slane %v3931, 5
        %v3934 = vor.u32 %v3930, %v3933
        %v3935 = vrot.slane %v3934, 4
        %v3937 = vshll.u32 %v3828, 16
        %v3939 = vrot.slane %v3937, 5
        %v3940 = vsel %vm356, %v3935, %v3939
        %v3941 = vld [vmem:[%s3812] sm:$0xe]
        %v3942 = vld [vmem:[%s3812 + $0x8] sm:$0xe]
        %v3943 = vld [vmem:[%s3812 + $0x10] sm:$0xe]
        %v3944 = vld [vmem:[%s3812 + $0x18] sm:$0xe]
        %v3945 = vld [vmem:[%s3812 + $0x20] sm:$0xe]
        %v3946 = vld [vmem:[%s3812 + $0x28] sm:$0xe]
        %v3947 = vld [vmem:[%s3812 + $0x30] sm:$0xe]
        %v3948 = vld [vmem:[%s3812 + $0x38] sm:$0xe]
        %v3965 = vrot.slane %v3941, 5
        %v3966 = vrot.slane %v3965, 4
        %v3967 = vrot.slane %v3821, 5
        %v3968 = vsel %vm495, %v3966, %v3967
        %v3969 = vrot.slane %v3942, 5
        %v3970 = vrot.slane %v3969, 4
        %v3971 = vrot.slane %v3822, 5
        %v3972 = vsel %vm495, %v3970, %v3971
        %v3973 = vrot.slane %v3943, 5
        %v3974 = vrot.slane %v3973, 4
        %v3975 = vrot.slane %v3823, 5
        %v3976 = vsel %vm495, %v3974, %v3975
        %v3977 = vrot.slane %v3944, 5
        %v3978 = vrot.slane %v3977, 4
        %v3979 = vrot.slane %v3824, 5
        %v3980 = vsel %vm495, %v3978, %v3979
        %v3981 = vrot.slane %v3945, 5
        %v3982 = vrot.slane %v3981, 4
        %v3983 = vrot.slane %v3825, 5
        %v3984 = vsel %vm495, %v3982, %v3983
        %v3985 = vrot.slane %v3946, 5
        %v3986 = vrot.slane %v3985, 4
        %v3987 = vrot.slane %v3826, 5
        %v3988 = vsel %vm495, %v3986, %v3987
        %v3989 = vrot.slane %v3947, 5
        %v3990 = vrot.slane %v3989, 4
        %v3991 = vrot.slane %v3827, 5
        %v3992 = vsel %vm495, %v3990, %v3991
        %v3993 = vrot.slane %v3948, 5
        %v3994 = vrot.slane %v3993, 4
        %v3995 = vrot.slane %v3828, 5
        %v3996 = vsel %vm495, %v3994, %v3995
        %v4005 = vunpack.c.l.b16 %v338
        %v4006 = vunpack.c.l.b16 %v339
        %v4007 = vunpack.c.l.b16 %v340
        %v4008 = vunpack.c.l.b16 %v341
        %v4009 = vunpack.c.l.b16 %v342
        %v4010 = vunpack.c.l.b16 %v343
        %v4011 = vunpack.c.l.b16 %v344
        %v4012 = vunpack.c.l.b16 %v345
        %v4013 = vpack.c.b16 %v4006, %v4005
        %v4014 = vpack.c.b16 %v4008, %v4007
        %v4015 = vpack.c.b16 %v4010, %v4009
        %v4016 = vpack.c.b16 %v4012, %v4011
        %v4017 = vunpack.c.l.b16 %v370
        %v4018 = vunpack.c.l.b16 %v384
        %v4019 = vunpack.c.l.b16 %v398
        %v4020 = vunpack.c.l.b16 %v412
        %v4021 = vunpack.c.l.b16 %v426
        %v4022 = vunpack.c.l.b16 %v440
        %v4023 = vunpack.c.l.b16 %v454
        %v4024 = vunpack.c.l.b16 %v468
        %v4025 = vpack.c.b16 %v4018, %v4017
        %v4026 = vpack.c.b16 %v4020, %v4019
        %v4027 = vpack.c.b16 %v4022, %v4021
        %v4028 = vpack.c.b16 %v4024, %v4023
        %4029 = vrot.lane.b32.xlu0 %v4025, 3
        %v4030 = vpop.permute.xlu0 %4029
        %4031 = vrot.lane.b32.xlu0 %v4026, 3
        %v4032 = vpop.permute.xlu0 %4031
        %4033 = vrot.lane.b32.xlu0 %v4027, 3
        %v4034 = vpop.permute.xlu0 %4033
        %4035 = vrot.lane.b32.xlu0 %v4028, 3
        %v4036 = vpop.permute.xlu0 %4035
        %v4037 = vunpack.c.l.b16 %v499
        %v4038 = vunpack.c.l.b16 %v503
        %v4039 = vunpack.c.l.b16 %v507
        %v4040 = vunpack.c.l.b16 %v511
        %v4041 = vunpack.c.l.b16 %v515
        %v4042 = vunpack.c.l.b16 %v519
        %v4043 = vunpack.c.l.b16 %v523
        %v4044 = vunpack.c.l.b16 %v527
        %v4045 = vpack.c.b16 %v4038, %v4037
        %v4046 = vpack.c.b16 %v4040, %v4039
        %v4047 = vpack.c.b16 %v4042, %v4041
        %v4048 = vpack.c.b16 %v4044, %v4043
        %4049 = vrot.lane.b32.xlu0 %v4045, 6
        %v4050 = vpop.permute.xlu0 %4049
        %4051 = vrot.lane.b32.xlu0 %v4046, 6
        %v4052 = vpop.permute.xlu0 %4051
        %4053 = vrot.lane.b32.xlu0 %v4047, 6
        %v4054 = vpop.permute.xlu0 %4053
        %4055 = vrot.lane.b32.xlu0 %v4048, 6
        %v4056 = vpop.permute.xlu0 %4055
        %v4057 = vunpack.c.l.b16 %v556
        %v4058 = vunpack.c.l.b16 %v574
        %v4059 = vunpack.c.l.b16 %v592
        %v4060 = vunpack.c.l.b16 %v610
        %v4061 = vunpack.c.l.b16 %v628
        %v4062 = vunpack.c.l.b16 %v646
        %v4063 = vunpack.c.l.b16 %v664
        %v4064 = vunpack.c.l.b16 %v682
        %v4065 = vpack.c.b16 %v4058, %v4057
        %v4066 = vpack.c.b16 %v4060, %v4059
        %v4067 = vpack.c.b16 %v4062, %v4061
        %v4068 = vpack.c.b16 %v4064, %v4063
        %4069 = vrot.lane.b32.xlu0 %v4065, 9
        %v4070 = vpop.permute.xlu0 %4069
        %4071 = vrot.lane.b32.xlu0 %v4066, 9
        %v4072 = vpop.permute.xlu0 %4071
        %4073 = vrot.lane.b32.xlu0 %v4067, 9
        %v4074 = vpop.permute.xlu0 %4073
        %4075 = vrot.lane.b32.xlu0 %v4068, 9
        %v4076 = vpop.permute.xlu0 %4075
        %v4085 = vunpack.c.l.b16 %v684
        %v4086 = vunpack.c.l.b16 %v685
        %v4087 = vunpack.c.l.b16 %v686
        %v4088 = vunpack.c.l.b16 %v687
        %v4089 = vunpack.c.l.b16 %v688
        %v4090 = vunpack.c.l.b16 %v689
        %v4091 = vunpack.c.l.b16 %v690
        %v4092 = vunpack.c.l.b16 %v691
        %v4093 = vpack.c.b16 %v4086, %v4085
        %v4094 = vpack.c.b16 %v4088, %v4087
        %v4095 = vpack.c.b16 %v4090, %v4089
        %v4096 = vpack.c.b16 %v4092, %v4091
        %4097 = vrot.lane.b32.xlu0 %v4093, 12
        %v4098 = vpop.permute.xlu0 %4097
        %4099 = vrot.lane.b32.xlu0 %v4094, 12
        %v4100 = vpop.permute.xlu0 %4099
        %4101 = vrot.lane.b32.xlu0 %v4095, 12
        %v4102 = vpop.permute.xlu0 %4101
        %4103 = vrot.lane.b32.xlu0 %v4096, 12
        %v4104 = vpop.permute.xlu0 %4103
        %v4105 = vunpack.c.l.b16 %v713
        %v4106 = vunpack.c.l.b16 %v727
        %v4107 = vunpack.c.l.b16 %v741
        %v4108 = vunpack.c.l.b16 %v755
        %v4109 = vunpack.c.l.b16 %v769
        %v4110 = vunpack.c.l.b16 %v783
        %v4111 = vunpack.c.l.b16 %v797
        %v4112 = vunpack.c.l.b16 %v811
        %v4113 = vpack.c.b16 %v4106, %v4105
        %v4114 = vpack.c.b16 %v4108, %v4107
        %v4115 = vpack.c.b16 %v4110, %v4109
        %v4116 = vpack.c.b16 %v4112, %v4111
        %4117 = vrot.lane.b32.xlu0 %v4113, 15
        %v4118 = vpop.permute.xlu0 %4117
        %4119 = vrot.lane.b32.xlu0 %v4114, 15
        %v4120 = vpop.permute.xlu0 %4119
        %4121 = vrot.lane.b32.xlu0 %v4115, 15
        %v4122 = vpop.permute.xlu0 %4121
        %4123 = vrot.lane.b32.xlu0 %v4116, 15
        %v4124 = vpop.permute.xlu0 %4123
        %v4125 = vunpack.c.l.b16 %v839
        %v4126 = vunpack.c.l.b16 %v843
        %v4127 = vunpack.c.l.b16 %v847
        %v4128 = vunpack.c.l.b16 %v851
        %v4129 = vunpack.c.l.b16 %v855
        %v4130 = vunpack.c.l.b16 %v859
        %v4131 = vunpack.c.l.b16 %v863
        %v4132 = vunpack.c.l.b16 %v867
        %v4133 = vpack.c.b16 %v4126, %v4125
        %v4134 = vpack.c.b16 %v4128, %v4127
        %v4135 = vpack.c.b16 %v4130, %v4129
        %v4136 = vpack.c.b16 %v4132, %v4131
        %4137 = vrot.lane.b32.xlu0 %v4133, 18
        %v4138 = vpop.permute.xlu0 %4137
        %4139 = vrot.lane.b32.xlu0 %v4134, 18
        %v4140 = vpop.permute.xlu0 %4139
        %4141 = vrot.lane.b32.xlu0 %v4135, 18
        %v4142 = vpop.permute.xlu0 %4141
        %4143 = vrot.lane.b32.xlu0 %v4136, 18
        %v4144 = vpop.permute.xlu0 %4143
        %v4145 = vunpack.c.l.b16 %v893
        %v4146 = vunpack.c.l.b16 %v911
        %v4147 = vunpack.c.l.b16 %v929
        %v4148 = vunpack.c.l.b16 %v947
        %v4149 = vunpack.c.l.b16 %v965
        %v4150 = vunpack.c.l.b16 %v983
        %v4151 = vunpack.c.l.b16 %v1001
        %v4152 = vunpack.c.l.b16 %v1019
        %v4153 = vpack.c.b16 %v4146, %v4145
        %v4154 = vpack.c.b16 %v4148, %v4147
        %v4155 = vpack.c.b16 %v4150, %v4149
        %v4156 = vpack.c.b16 %v4152, %v4151
        %4157 = vrot.lane.b32.xlu0 %v4153, 21
        %v4158 = vpop.permute.xlu0 %4157
        %4159 = vrot.lane.b32.xlu0 %v4154, 21
        %v4160 = vpop.permute.xlu0 %4159
        %4161 = vrot.lane.b32.xlu0 %v4155, 21
        %v4162 = vpop.permute.xlu0 %4161
        %4163 = vrot.lane.b32.xlu0 %v4156, 21
        %v4164 = vpop.permute.xlu0 %4163
        %v4173 = vunpack.c.l.b16 %v1021
        %v4174 = vunpack.c.l.b16 %v1022
        %v4175 = vunpack.c.l.b16 %v1023
        %v4176 = vunpack.c.l.b16 %v1024
        %v4177 = vunpack.c.l.b16 %v1025
        %v4178 = vunpack.c.l.b16 %v1026
        %v4179 = vunpack.c.l.b16 %v1027
        %v4180 = vunpack.c.l.b16 %v1028
        %v4181 = vpack.c.b16 %v4174, %v4173
        %v4182 = vpack.c.b16 %v4176, %v4175
        %v4183 = vpack.c.b16 %v4178, %v4177
        %v4184 = vpack.c.b16 %v4180, %v4179
        %4185 = vrot.lane.b32.xlu0 %v4181, 24
        %v4186 = vpop.permute.xlu0 %4185
        %4187 = vrot.lane.b32.xlu0 %v4182, 24
        %v4188 = vpop.permute.xlu0 %4187
        %4189 = vrot.lane.b32.xlu0 %v4183, 24
        %v4190 = vpop.permute.xlu0 %4189
        %4191 = vrot.lane.b32.xlu0 %v4184, 24
        %v4192 = vpop.permute.xlu0 %4191
        %v4193 = vunpack.c.l.b16 %v1050
        %v4194 = vunpack.c.l.b16 %v1064
        %v4195 = vunpack.c.l.b16 %v1078
        %v4196 = vunpack.c.l.b16 %v1092
        %v4197 = vunpack.c.l.b16 %v1106
        %v4198 = vunpack.c.l.b16 %v1120
        %v4199 = vunpack.c.l.b16 %v1134
        %v4200 = vunpack.c.l.b16 %v1148
        %v4201 = vpack.c.b16 %v4194, %v4193
        %v4202 = vpack.c.b16 %v4196, %v4195
        %v4203 = vpack.c.b16 %v4198, %v4197
        %v4204 = vpack.c.b16 %v4200, %v4199
        %4205 = vrot.lane.b32.xlu0 %v4201, 27
        %v4206 = vpop.permute.xlu0 %4205
        %4207 = vrot.lane.b32.xlu0 %v4202, 27
        %v4208 = vpop.permute.xlu0 %4207
        %4209 = vrot.lane.b32.xlu0 %v4203, 27
        %v4210 = vpop.permute.xlu0 %4209
        %4211 = vrot.lane.b32.xlu0 %v4204, 27
        %v4212 = vpop.permute.xlu0 %4211
        %v4213 = vunpack.c.l.b16 %v1176
        %v4214 = vunpack.c.l.b16 %v1180
        %v4215 = vunpack.c.l.b16 %v1184
        %v4216 = vunpack.c.l.b16 %v1188
        %v4217 = vunpack.c.l.b16 %v1192
        %v4218 = vunpack.c.l.b16 %v1196
        %v4219 = vunpack.c.l.b16 %v1200
        %v4220 = vunpack.c.l.b16 %v1204
        %v4221 = vpack.c.b16 %v4214, %v4213
        %v4222 = vpack.c.b16 %v4216, %v4215
        %v4223 = vpack.c.b16 %v4218, %v4217
        %v4224 = vpack.c.b16 %v4220, %v4219
        %4225 = vrot.lane.b32.xlu0 %v4221, 30
        %v4226 = vpop.permute.xlu0 %4225
        %4227 = vrot.lane.b32.xlu0 %v4222, 30
        %v4228 = vpop.permute.xlu0 %4227
        %4229 = vrot.lane.b32.xlu0 %v4223, 30
        %v4230 = vpop.permute.xlu0 %4229
        %4231 = vrot.lane.b32.xlu0 %v4224, 30
        %v4232 = vpop.permute.xlu0 %4231
        %v4233 = vunpack.c.l.b16 %v1230
        %v4234 = vunpack.c.l.b16 %v1248
        %v4235 = vunpack.c.l.b16 %v1266
        %v4236 = vunpack.c.l.b16 %v1284
        %v4237 = vunpack.c.l.b16 %v1302
        %v4238 = vunpack.c.l.b16 %v1320
        %v4239 = vunpack.c.l.b16 %v1338
        %v4240 = vunpack.c.l.b16 %v1356
        %v4241 = vpack.c.b16 %v4234, %v4233
        %v4242 = vpack.c.b16 %v4236, %v4235
        %v4243 = vpack.c.b16 %v4238, %v4237
        %v4244 = vpack.c.b16 %v4240, %v4239
        %4245 = vrot.lane.b32.xlu0 %v4241, 33
        %v4246 = vpop.permute.xlu0 %4245
        %4247 = vrot.lane.b32.xlu0 %v4242, 33
        %v4248 = vpop.permute.xlu0 %4247
        %4249 = vrot.lane.b32.xlu0 %v4243, 33
        %v4250 = vpop.permute.xlu0 %4249
        %4251 = vrot.lane.b32.xlu0 %v4244, 33
        %v4252 = vpop.permute.xlu0 %4251
        %v4261 = vunpack.c.l.b16 %v1358
        %v4262 = vunpack.c.l.b16 %v1359
        %v4263 = vunpack.c.l.b16 %v1360
        %v4264 = vunpack.c.l.b16 %v1361
        %v4265 = vunpack.c.l.b16 %v1362
        %v4266 = vunpack.c.l.b16 %v1363
        %v4267 = vunpack.c.l.b16 %v1364
        %v4268 = vunpack.c.l.b16 %v1365
        %v4269 = vpack.c.b16 %v4262, %v4261
        %v4270 = vpack.c.b16 %v4264, %v4263
        %v4271 = vpack.c.b16 %v4266, %v4265
        %v4272 = vpack.c.b16 %v4268, %v4267
        %4273 = vrot.lane.b32.xlu0 %v4269, 36
        %v4274 = vpop.permute.xlu0 %4273
        %4275 = vrot.lane.b32.xlu0 %v4270, 36
        %v4276 = vpop.permute.xlu0 %4275
        %4277 = vrot.lane.b32.xlu0 %v4271, 36
        %v4278 = vpop.permute.xlu0 %4277
        %4279 = vrot.lane.b32.xlu0 %v4272, 36
        %v4280 = vpop.permute.xlu0 %4279
        %v4281 = vunpack.c.l.b16 %v1387
        %v4282 = vunpack.c.l.b16 %v1401
        %v4283 = vunpack.c.l.b16 %v1415
        %v4284 = vunpack.c.l.b16 %v1429
        %v4285 = vunpack.c.l.b16 %v1443
        %v4286 = vunpack.c.l.b16 %v1457
        %v4287 = vunpack.c.l.b16 %v1471
        %v4288 = vunpack.c.l.b16 %v1485
        %v4289 = vpack.c.b16 %v4282, %v4281
        %v4290 = vpack.c.b16 %v4284, %v4283
        %v4291 = vpack.c.b16 %v4286, %v4285
        %v4292 = vpack.c.b16 %v4288, %v4287
        %4293 = vrot.lane.b32.xlu0 %v4289, 39
        %v4294 = vpop.permute.xlu0 %4293
        %4295 = vrot.lane.b32.xlu0 %v4290, 39
        %v4296 = vpop.permute.xlu0 %4295
        %4297 = vrot.lane.b32.xlu0 %v4291, 39
        %v4298 = vpop.permute.xlu0 %4297
        %4299 = vrot.lane.b32.xlu0 %v4292, 39
        %v4300 = vpop.permute.xlu0 %4299
        %v4301 = vunpack.c.l.b16 %v1513
        %v4302 = vunpack.c.l.b16 %v1517
        %v4303 = vunpack.c.l.b16 %v1521
        %v4304 = vunpack.c.l.b16 %v1525
        %v4305 = vunpack.c.l.b16 %v1529
        %v4306 = vunpack.c.l.b16 %v1533
        %v4307 = vunpack.c.l.b16 %v1537
        %v4308 = vunpack.c.l.b16 %v1541
        %v4309 = vpack.c.b16 %v4302, %v4301
        %v4310 = vpack.c.b16 %v4304, %v4303
        %v4311 = vpack.c.b16 %v4306, %v4305
        %v4312 = vpack.c.b16 %v4308, %v4307
        %4313 = vrot.lane.b32.xlu0 %v4309, 42
        %v4314 = vpop.permute.xlu0 %4313
        %4315 = vrot.lane.b32.xlu0 %v4310, 42
        %v4316 = vpop.permute.xlu0 %4315
        %4317 = vrot.lane.b32.xlu0 %v4311, 42
        %v4318 = vpop.permute.xlu0 %4317
        %4319 = vrot.lane.b32.xlu0 %v4312, 42
        %v4320 = vpop.permute.xlu0 %4319
        %v4321 = vunpack.c.l.b16 %v1567
        %v4322 = vunpack.c.l.b16 %v1585
        %v4323 = vunpack.c.l.b16 %v1603
        %v4324 = vunpack.c.l.b16 %v1621
        %v4325 = vunpack.c.l.b16 %v1639
        %v4326 = vunpack.c.l.b16 %v1657
        %v4327 = vunpack.c.l.b16 %v1675
        %v4328 = vunpack.c.l.b16 %v1693
        %v4329 = vpack.c.b16 %v4322, %v4321
        %v4330 = vpack.c.b16 %v4324, %v4323
        %v4331 = vpack.c.b16 %v4326, %v4325
        %v4332 = vpack.c.b16 %v4328, %v4327
        %4333 = vrot.lane.b32.xlu0 %v4329, 45
        %v4334 = vpop.permute.xlu0 %4333
        %4335 = vrot.lane.b32.xlu0 %v4330, 45
        %v4336 = vpop.permute.xlu0 %4335
        %4337 = vrot.lane.b32.xlu0 %v4331, 45
        %v4338 = vpop.permute.xlu0 %4337
        %4339 = vrot.lane.b32.xlu0 %v4332, 45
        %v4340 = vpop.permute.xlu0 %4339
        %vm4341 = vcmask 23552
        %v4344 = vsel %vm4341, %v4013, %v4030
        %v4347 = vsel %vm4341, %v4014, %v4032
        %v4350 = vsel %vm4341, %v4015, %v4034
        %v4353 = vsel %vm4341, %v4016, %v4036
        %vm4354 = vcmask 48128
        %v4356 = vsel %vm4354, %v4344, %v4050
        %v4358 = vsel %vm4354, %v4347, %v4052
        %v4360 = vsel %vm4354, %v4350, %v4054
        %v4362 = vsel %vm4354, %v4353, %v4056
        %vm4363 = vcmask 72704
        %v4365 = vsel %vm4363, %v4356, %v4070
        %v4367 = vsel %vm4363, %v4358, %v4072
        %v4369 = vsel %vm4363, %v4360, %v4074
        %v4371 = vsel %vm4363, %v4362, %v4076
        %vm4372 = vcmask 97280
        %v4374 = vsel %vm4372, %v4365, %v4098
        %v4376 = vsel %vm4372, %v4367, %v4100
        %v4378 = vsel %vm4372, %v4369, %v4102
        %v4380 = vsel %vm4372, %v4371, %v4104
        %vm4381 = vcmask 121856
        %v4383 = vsel %vm4381, %v4374, %v4118
        %v4385 = vsel %vm4381, %v4376, %v4120
        %v4387 = vsel %vm4381, %v4378, %v4122
        %v4389 = vsel %vm4381, %v4380, %v4124
        %vm4390 = vcmask 146432
        %v4392 = vsel %vm4390, %v4383, %v4138
        %v4394 = vsel %vm4390, %v4385, %v4140
        %v4396 = vsel %vm4390, %v4387, %v4142
        %v4398 = vsel %vm4390, %v4389, %v4144
        %vm4399 = vcmask 171008
        %v4401 = vsel %vm4399, %v4392, %v4158
        %v4403 = vsel %vm4399, %v4394, %v4160
        %v4405 = vsel %vm4399, %v4396, %v4162
        %v4407 = vsel %vm4399, %v4398, %v4164
        %vm4408 = vcmask 195584
        %v4410 = vsel %vm4408, %v4401, %v4186
        %v4412 = vsel %vm4408, %v4403, %v4188
        %v4414 = vsel %vm4408, %v4405, %v4190
        %v4416 = vsel %vm4408, %v4407, %v4192
        %vm4417 = vcmask 220160
        %v4419 = vsel %vm4417, %v4410, %v4206
        %v4421 = vsel %vm4417, %v4412, %v4208
        %v4423 = vsel %vm4417, %v4414, %v4210
        %v4425 = vsel %vm4417, %v4416, %v4212
        %vm4426 = vcmask 244736
        %v4428 = vsel %vm4426, %v4419, %v4226
        %v4430 = vsel %vm4426, %v4421, %v4228
        %v4432 = vsel %vm4426, %v4423, %v4230
        %v4434 = vsel %vm4426, %v4425, %v4232
        %vm4435 = vcmask 269312
        %v4437 = vsel %vm4435, %v4428, %v4246
        %v4439 = vsel %vm4435, %v4430, %v4248
        %v4441 = vsel %vm4435, %v4432, %v4250
        %v4443 = vsel %vm4435, %v4434, %v4252
        %vm4444 = vcmask 293888
        %v4446 = vsel %vm4444, %v4437, %v4274
        %v4448 = vsel %vm4444, %v4439, %v4276
        %v4450 = vsel %vm4444, %v4441, %v4278
        %v4452 = vsel %vm4444, %v4443, %v4280
        %vm4453 = vcmask 318464
        %v4455 = vsel %vm4453, %v4446, %v4294
        %v4457 = vsel %vm4453, %v4448, %v4296
        %v4459 = vsel %vm4453, %v4450, %v4298
        %v4461 = vsel %vm4453, %v4452, %v4300
        %vm4462 = vcmask 343040
        %v4464 = vsel %vm4462, %v4455, %v4314
        %v4466 = vsel %vm4462, %v4457, %v4316
        %v4468 = vsel %vm4462, %v4459, %v4318
        %v4470 = vsel %vm4462, %v4461, %v4320
        %vm4471 = vcmask 367616
        %v4473 = vsel %vm4471, %v4464, %v4334
        %v4475 = vsel %vm4471, %v4466, %v4336
        %v4477 = vsel %vm4471, %v4468, %v4338
        %v4479 = vsel %vm4471, %v4470, %v4340
        %v4488 = vunpack.c.l.b16 %v1694
        %v4489 = vunpack.c.l.b16 %v1695
        %v4490 = vunpack.c.l.b16 %v1696
        %v4491 = vunpack.c.l.b16 %v1697
        %v4492 = vunpack.c.l.b16 %v1698
        %v4493 = vunpack.c.l.b16 %v1699
        %v4494 = vunpack.c.l.b16 %v1700
        %v4495 = vunpack.c.l.b16 %v1701
        %v4496 = vpack.c.b16 %v4489, %v4488
        %v4497 = vpack.c.b16 %v4491, %v4490
        %v4498 = vpack.c.b16 %v4493, %v4492
        %v4499 = vpack.c.b16 %v4495, %v4494
        %v4500 = vunpack.c.l.b16 %v1723
        %v4501 = vunpack.c.l.b16 %v1737
        %v4502 = vunpack.c.l.b16 %v1751
        %v4503 = vunpack.c.l.b16 %v1765
        %v4504 = vunpack.c.l.b16 %v1779
        %v4505 = vunpack.c.l.b16 %v1793
        %v4506 = vunpack.c.l.b16 %v1807
        %v4507 = vunpack.c.l.b16 %v1821
        %v4508 = vpack.c.b16 %v4501, %v4500
        %v4509 = vpack.c.b16 %v4503, %v4502
        %v4510 = vpack.c.b16 %v4505, %v4504
        %v4511 = vpack.c.b16 %v4507, %v4506
        %4512 = vrot.lane.b32.xlu0 %v4508, 3
        %v4513 = vpop.permute.xlu0 %4512
        %4514 = vrot.lane.b32.xlu0 %v4509, 3
        %v4515 = vpop.permute.xlu0 %4514
        %4516 = vrot.lane.b32.xlu0 %v4510, 3
        %v4517 = vpop.permute.xlu0 %4516
        %4518 = vrot.lane.b32.xlu0 %v4511, 3
        %v4519 = vpop.permute.xlu0 %4518
        %v4520 = vunpack.c.l.b16 %v1849
        %v4521 = vunpack.c.l.b16 %v1853
        %v4522 = vunpack.c.l.b16 %v1857
        %v4523 = vunpack.c.l.b16 %v1861
        %v4524 = vunpack.c.l.b16 %v1865
        %v4525 = vunpack.c.l.b16 %v1869
        %v4526 = vunpack.c.l.b16 %v1873
        %v4527 = vunpack.c.l.b16 %v1877
        %v4528 = vpack.c.b16 %v4521, %v4520
        %v4529 = vpack.c.b16 %v4523, %v4522
        %v4530 = vpack.c.b16 %v4525, %v4524
        %v4531 = vpack.c.b16 %v4527, %v4526
        %4532 = vrot.lane.b32.xlu0 %v4528, 6
        %v4533 = vpop.permute.xlu0 %4532
        %4534 = vrot.lane.b32.xlu0 %v4529, 6
        %v4535 = vpop.permute.xlu0 %4534
        %4536 = vrot.lane.b32.xlu0 %v4530, 6
        %v4537 = vpop.permute.xlu0 %4536
        %4538 = vrot.lane.b32.xlu0 %v4531, 6
        %v4539 = vpop.permute.xlu0 %4538
        %v4548 = vunpack.c.l.b16 %v1879
        %v4549 = vunpack.c.l.b16 %v1880
        %v4550 = vunpack.c.l.b16 %v1881
        %v4551 = vunpack.c.l.b16 %v1882
        %v4552 = vunpack.c.l.b16 %v1883
        %v4553 = vunpack.c.l.b16 %v1884
        %v4554 = vunpack.c.l.b16 %v1885
        %v4555 = vunpack.c.l.b16 %v1886
        %v4556 = vpack.c.b16 %v4549, %v4548
        %v4557 = vpack.c.b16 %v4551, %v4550
        %v4558 = vpack.c.b16 %v4553, %v4552
        %v4559 = vpack.c.b16 %v4555, %v4554
        %4560 = vrot.lane.b32.xlu0 %v4556, 9
        %v4561 = vpop.permute.xlu0 %4560
        %4562 = vrot.lane.b32.xlu0 %v4557, 9
        %v4563 = vpop.permute.xlu0 %4562
        %4564 = vrot.lane.b32.xlu0 %v4558, 9
        %v4565 = vpop.permute.xlu0 %4564
        %4566 = vrot.lane.b32.xlu0 %v4559, 9
        %v4567 = vpop.permute.xlu0 %4566
        %v4568 = vunpack.c.l.b16 %v1908
        %v4569 = vunpack.c.l.b16 %v1922
        %v4570 = vunpack.c.l.b16 %v1936
        %v4571 = vunpack.c.l.b16 %v1950
        %v4572 = vunpack.c.l.b16 %v1964
        %v4573 = vunpack.c.l.b16 %v1978
        %v4574 = vunpack.c.l.b16 %v1992
        %v4575 = vunpack.c.l.b16 %v2006
        %v4576 = vpack.c.b16 %v4569, %v4568
        %v4577 = vpack.c.b16 %v4571, %v4570
        %v4578 = vpack.c.b16 %v4573, %v4572
        %v4579 = vpack.c.b16 %v4575, %v4574
        %4580 = vrot.lane.b32.xlu0 %v4576, 12
        %v4581 = vpop.permute.xlu0 %4580
        %4582 = vrot.lane.b32.xlu0 %v4577, 12
        %v4583 = vpop.permute.xlu0 %4582
        %4584 = vrot.lane.b32.xlu0 %v4578, 12
        %v4585 = vpop.permute.xlu0 %4584
        %4586 = vrot.lane.b32.xlu0 %v4579, 12
        %v4587 = vpop.permute.xlu0 %4586
        %v4588 = vunpack.c.l.b16 %v2034
        %v4589 = vunpack.c.l.b16 %v2038
        %v4590 = vunpack.c.l.b16 %v2042
        %v4591 = vunpack.c.l.b16 %v2046
        %v4592 = vunpack.c.l.b16 %v2050
        %v4593 = vunpack.c.l.b16 %v2054
        %v4594 = vunpack.c.l.b16 %v2058
        %v4595 = vunpack.c.l.b16 %v2062
        %v4596 = vpack.c.b16 %v4589, %v4588
        %v4597 = vpack.c.b16 %v4591, %v4590
        %v4598 = vpack.c.b16 %v4593, %v4592
        %v4599 = vpack.c.b16 %v4595, %v4594
        %4600 = vrot.lane.b32.xlu0 %v4596, 15
        %v4601 = vpop.permute.xlu0 %4600
        %4602 = vrot.lane.b32.xlu0 %v4597, 15
        %v4603 = vpop.permute.xlu0 %4602
        %4604 = vrot.lane.b32.xlu0 %v4598, 15
        %v4605 = vpop.permute.xlu0 %4604
        %4606 = vrot.lane.b32.xlu0 %v4599, 15
        %v4607 = vpop.permute.xlu0 %4606
        %v4616 = vunpack.c.l.b16 %v2064
        %v4617 = vunpack.c.l.b16 %v2065
        %v4618 = vunpack.c.l.b16 %v2066
        %v4619 = vunpack.c.l.b16 %v2067
        %v4620 = vunpack.c.l.b16 %v2068
        %v4621 = vunpack.c.l.b16 %v2069
        %v4622 = vunpack.c.l.b16 %v2070
        %v4623 = vunpack.c.l.b16 %v2071
        %v4624 = vpack.c.b16 %v4617, %v4616
        %v4625 = vpack.c.b16 %v4619, %v4618
        %v4626 = vpack.c.b16 %v4621, %v4620
        %v4627 = vpack.c.b16 %v4623, %v4622
        %4628 = vrot.lane.b32.xlu0 %v4624, 18
        %v4629 = vpop.permute.xlu0 %4628
        %4630 = vrot.lane.b32.xlu0 %v4625, 18
        %v4631 = vpop.permute.xlu0 %4630
        %4632 = vrot.lane.b32.xlu0 %v4626, 18
        %v4633 = vpop.permute.xlu0 %4632
        %4634 = vrot.lane.b32.xlu0 %v4627, 18
        %v4635 = vpop.permute.xlu0 %4634
        %v4636 = vunpack.c.l.b16 %v2093
        %v4637 = vunpack.c.l.b16 %v2107
        %v4638 = vunpack.c.l.b16 %v2121
        %v4639 = vunpack.c.l.b16 %v2135
        %v4640 = vunpack.c.l.b16 %v2149
        %v4641 = vunpack.c.l.b16 %v2163
        %v4642 = vunpack.c.l.b16 %v2177
        %v4643 = vunpack.c.l.b16 %v2191
        %v4644 = vpack.c.b16 %v4637, %v4636
        %v4645 = vpack.c.b16 %v4639, %v4638
        %v4646 = vpack.c.b16 %v4641, %v4640
        %v4647 = vpack.c.b16 %v4643, %v4642
        %4648 = vrot.lane.b32.xlu0 %v4644, 21
        %v4649 = vpop.permute.xlu0 %4648
        %4650 = vrot.lane.b32.xlu0 %v4645, 21
        %v4651 = vpop.permute.xlu0 %4650
        %4652 = vrot.lane.b32.xlu0 %v4646, 21
        %v4653 = vpop.permute.xlu0 %4652
        %4654 = vrot.lane.b32.xlu0 %v4647, 21
        %v4655 = vpop.permute.xlu0 %4654
        %v4656 = vunpack.c.l.b16 %v2219
        %v4657 = vunpack.c.l.b16 %v2223
        %v4658 = vunpack.c.l.b16 %v2227
        %v4659 = vunpack.c.l.b16 %v2231
        %v4660 = vunpack.c.l.b16 %v2235
        %v4661 = vunpack.c.l.b16 %v2239
        %v4662 = vunpack.c.l.b16 %v2243
        %v4663 = vunpack.c.l.b16 %v2247
        %v4664 = vpack.c.b16 %v4657, %v4656
        %v4665 = vpack.c.b16 %v4659, %v4658
        %v4666 = vpack.c.b16 %v4661, %v4660
        %v4667 = vpack.c.b16 %v4663, %v4662
        %4668 = vrot.lane.b32.xlu0 %v4664, 24
        %v4669 = vpop.permute.xlu0 %4668
        %4670 = vrot.lane.b32.xlu0 %v4665, 24
        %v4671 = vpop.permute.xlu0 %4670
        %4672 = vrot.lane.b32.xlu0 %v4666, 24
        %v4673 = vpop.permute.xlu0 %4672
        %4674 = vrot.lane.b32.xlu0 %v4667, 24
        %v4675 = vpop.permute.xlu0 %4674
        %v4684 = vunpack.c.l.b16 %v2249
        %v4685 = vunpack.c.l.b16 %v2250
        %v4686 = vunpack.c.l.b16 %v2251
        %v4687 = vunpack.c.l.b16 %v2252
        %v4688 = vunpack.c.l.b16 %v2253
        %v4689 = vunpack.c.l.b16 %v2254
        %v4690 = vunpack.c.l.b16 %v2255
        %v4691 = vunpack.c.l.b16 %v2256
        %v4692 = vpack.c.b16 %v4685, %v4684
        %v4693 = vpack.c.b16 %v4687, %v4686
        %v4694 = vpack.c.b16 %v4689, %v4688
        %v4695 = vpack.c.b16 %v4691, %v4690
        %4696 = vrot.lane.b32.xlu0 %v4692, 27
        %v4697 = vpop.permute.xlu0 %4696
        %4698 = vrot.lane.b32.xlu0 %v4693, 27
        %v4699 = vpop.permute.xlu0 %4698
        %4700 = vrot.lane.b32.xlu0 %v4694, 27
        %v4701 = vpop.permute.xlu0 %4700
        %4702 = vrot.lane.b32.xlu0 %v4695, 27
        %v4703 = vpop.permute.xlu0 %4702
        %v4704 = vunpack.c.l.b16 %v2278
        %v4705 = vunpack.c.l.b16 %v2292
        %v4706 = vunpack.c.l.b16 %v2306
        %v4707 = vunpack.c.l.b16 %v2320
        %v4708 = vunpack.c.l.b16 %v2334
        %v4709 = vunpack.c.l.b16 %v2348
        %v4710 = vunpack.c.l.b16 %v2362
        %v4711 = vunpack.c.l.b16 %v2376
        %v4712 = vpack.c.b16 %v4705, %v4704
        %v4713 = vpack.c.b16 %v4707, %v4706
        %v4714 = vpack.c.b16 %v4709, %v4708
        %v4715 = vpack.c.b16 %v4711, %v4710
        %4716 = vrot.lane.b32.xlu0 %v4712, 30
        %v4717 = vpop.permute.xlu0 %4716
        %4718 = vrot.lane.b32.xlu0 %v4713, 30
        %v4719 = vpop.permute.xlu0 %4718
        %4720 = vrot.lane.b32.xlu0 %v4714, 30
        %v4721 = vpop.permute.xlu0 %4720
        %4722 = vrot.lane.b32.xlu0 %v4715, 30
        %v4723 = vpop.permute.xlu0 %4722
        %v4724 = vunpack.c.l.b16 %v2404
        %v4725 = vunpack.c.l.b16 %v2408
        %v4726 = vunpack.c.l.b16 %v2412
        %v4727 = vunpack.c.l.b16 %v2416
        %v4728 = vunpack.c.l.b16 %v2420
        %v4729 = vunpack.c.l.b16 %v2424
        %v4730 = vunpack.c.l.b16 %v2428
        %v4731 = vunpack.c.l.b16 %v2432
        %v4732 = vpack.c.b16 %v4725, %v4724
        %v4733 = vpack.c.b16 %v4727, %v4726
        %v4734 = vpack.c.b16 %v4729, %v4728
        %v4735 = vpack.c.b16 %v4731, %v4730
        %4736 = vrot.lane.b32.xlu0 %v4732, 33
        %v4737 = vpop.permute.xlu0 %4736
        %4738 = vrot.lane.b32.xlu0 %v4733, 33
        %v4739 = vpop.permute.xlu0 %4738
        %4740 = vrot.lane.b32.xlu0 %v4734, 33
        %v4741 = vpop.permute.xlu0 %4740
        %4742 = vrot.lane.b32.xlu0 %v4735, 33
        %v4743 = vpop.permute.xlu0 %4742
        %v4752 = vunpack.c.l.b16 %v2433
        %v4753 = vunpack.c.l.b16 %v2434
        %v4754 = vunpack.c.l.b16 %v2435
        %v4755 = vunpack.c.l.b16 %v2436
        %v4756 = vunpack.c.l.b16 %v2437
        %v4757 = vunpack.c.l.b16 %v2438
        %v4758 = vunpack.c.l.b16 %v2439
        %v4759 = vunpack.c.l.b16 %v2440
        %v4760 = vpack.c.b16 %v4753, %v4752
        %v4761 = vpack.c.b16 %v4755, %v4754
        %v4762 = vpack.c.b16 %v4757, %v4756
        %v4763 = vpack.c.b16 %v4759, %v4758
        %4764 = vrot.lane.b32.xlu0 %v4760, 36
        %v4765 = vpop.permute.xlu0 %4764
        %4766 = vrot.lane.b32.xlu0 %v4761, 36
        %v4767 = vpop.permute.xlu0 %4766
        %4768 = vrot.lane.b32.xlu0 %v4762, 36
        %v4769 = vpop.permute.xlu0 %4768
        %4770 = vrot.lane.b32.xlu0 %v4763, 36
        %v4771 = vpop.permute.xlu0 %4770
        %v4772 = vunpack.c.l.b16 %v2462
        %v4773 = vunpack.c.l.b16 %v2476
        %v4774 = vunpack.c.l.b16 %v2490
        %v4775 = vunpack.c.l.b16 %v2504
        %v4776 = vunpack.c.l.b16 %v2518
        %v4777 = vunpack.c.l.b16 %v2532
        %v4778 = vunpack.c.l.b16 %v2546
        %v4779 = vunpack.c.l.b16 %v2560
        %v4780 = vpack.c.b16 %v4773, %v4772
        %v4781 = vpack.c.b16 %v4775, %v4774
        %v4782 = vpack.c.b16 %v4777, %v4776
        %v4783 = vpack.c.b16 %v4779, %v4778
        %4784 = vrot.lane.b32.xlu0 %v4780, 39
        %v4785 = vpop.permute.xlu0 %4784
        %4786 = vrot.lane.b32.xlu0 %v4781, 39
        %v4787 = vpop.permute.xlu0 %4786
        %4788 = vrot.lane.b32.xlu0 %v4782, 39
        %v4789 = vpop.permute.xlu0 %4788
        %4790 = vrot.lane.b32.xlu0 %v4783, 39
        %v4791 = vpop.permute.xlu0 %4790
        %v4792 = vunpack.c.l.b16 %v2588
        %v4793 = vunpack.c.l.b16 %v2592
        %v4794 = vunpack.c.l.b16 %v2596
        %v4795 = vunpack.c.l.b16 %v2600
        %v4796 = vunpack.c.l.b16 %v2604
        %v4797 = vunpack.c.l.b16 %v2608
        %v4798 = vunpack.c.l.b16 %v2612
        %v4799 = vunpack.c.l.b16 %v2616
        %v4800 = vpack.c.b16 %v4793, %v4792
        %v4801 = vpack.c.b16 %v4795, %v4794
        %v4802 = vpack.c.b16 %v4797, %v4796
        %v4803 = vpack.c.b16 %v4799, %v4798
        %4804 = vrot.lane.b32.xlu0 %v4800, 42
        %v4805 = vpop.permute.xlu0 %4804
        %4806 = vrot.lane.b32.xlu0 %v4801, 42
        %v4807 = vpop.permute.xlu0 %4806
        %4808 = vrot.lane.b32.xlu0 %v4802, 42
        %v4809 = vpop.permute.xlu0 %4808
        %4810 = vrot.lane.b32.xlu0 %v4803, 42
        %v4811 = vpop.permute.xlu0 %4810
        %v4812 = vunpack.c.l.b16 %v2642
        %v4813 = vunpack.c.l.b16 %v2660
        %v4814 = vunpack.c.l.b16 %v2678
        %v4815 = vunpack.c.l.b16 %v2696
        %v4816 = vunpack.c.l.b16 %v2714
        %v4817 = vunpack.c.l.b16 %v2732
        %v4818 = vunpack.c.l.b16 %v2750
        %v4819 = vunpack.c.l.b16 %v2768
        %v4820 = vpack.c.b16 %v4813, %v4812
        %v4821 = vpack.c.b16 %v4815, %v4814
        %v4822 = vpack.c.b16 %v4817, %v4816
        %v4823 = vpack.c.b16 %v4819, %v4818
        %4824 = vrot.lane.b32.xlu0 %v4820, 45
        %v4825 = vpop.permute.xlu0 %4824
        %4826 = vrot.lane.b32.xlu0 %v4821, 45
        %v4827 = vpop.permute.xlu0 %4826
        %4828 = vrot.lane.b32.xlu0 %v4822, 45
        %v4829 = vpop.permute.xlu0 %4828
        %4830 = vrot.lane.b32.xlu0 %v4823, 45
        %v4831 = vpop.permute.xlu0 %4830
        %v4834 = vsel %vm4341, %v4496, %v4513
        %v4837 = vsel %vm4341, %v4497, %v4515
        %v4840 = vsel %vm4341, %v4498, %v4517
        %v4843 = vsel %vm4341, %v4499, %v4519
        %v4845 = vsel %vm4354, %v4834, %v4533
        %v4847 = vsel %vm4354, %v4837, %v4535
        %v4849 = vsel %vm4354, %v4840, %v4537
        %v4851 = vsel %vm4354, %v4843, %v4539
        %v4853 = vsel %vm4363, %v4845, %v4561
        %v4855 = vsel %vm4363, %v4847, %v4563
        %v4857 = vsel %vm4363, %v4849, %v4565
        %v4859 = vsel %vm4363, %v4851, %v4567
        %v4861 = vsel %vm4372, %v4853, %v4581
        %v4863 = vsel %vm4372, %v4855, %v4583
        %v4865 = vsel %vm4372, %v4857, %v4585
        %v4867 = vsel %vm4372, %v4859, %v4587
        %v4869 = vsel %vm4381, %v4861, %v4601
        %v4871 = vsel %vm4381, %v4863, %v4603
        %v4873 = vsel %vm4381, %v4865, %v4605
        %v4875 = vsel %vm4381, %v4867, %v4607
        %v4877 = vsel %vm4390, %v4869, %v4629
        %v4879 = vsel %vm4390, %v4871, %v4631
        %v4881 = vsel %vm4390, %v4873, %v4633
        %v4883 = vsel %vm4390, %v4875, %v4635
        %v4885 = vsel %vm4399, %v4877, %v4649
        %v4887 = vsel %vm4399, %v4879, %v4651
        %v4889 = vsel %vm4399, %v4881, %v4653
        %v4891 = vsel %vm4399, %v4883, %v4655
        %v4893 = vsel %vm4408, %v4885, %v4669
        %v4895 = vsel %vm4408, %v4887, %v4671
        %v4897 = vsel %vm4408, %v4889, %v4673
        %v4899 = vsel %vm4408, %v4891, %v4675
        %v4901 = vsel %vm4417, %v4893, %v4697
        %v4903 = vsel %vm4417, %v4895, %v4699
        %v4905 = vsel %vm4417, %v4897, %v4701
        %v4907 = vsel %vm4417, %v4899, %v4703
        %v4909 = vsel %vm4426, %v4901, %v4717
        %v4911 = vsel %vm4426, %v4903, %v4719
        %v4913 = vsel %vm4426, %v4905, %v4721
        %v4915 = vsel %vm4426, %v4907, %v4723
        %v4917 = vsel %vm4435, %v4909, %v4737
        %v4919 = vsel %vm4435, %v4911, %v4739
        %v4921 = vsel %vm4435, %v4913, %v4741
        %v4923 = vsel %vm4435, %v4915, %v4743
        %v4925 = vsel %vm4444, %v4917, %v4765
        %v4927 = vsel %vm4444, %v4919, %v4767
        %v4929 = vsel %vm4444, %v4921, %v4769
        %v4931 = vsel %vm4444, %v4923, %v4771
        %v4933 = vsel %vm4453, %v4925, %v4785
        %v4935 = vsel %vm4453, %v4927, %v4787
        %v4937 = vsel %vm4453, %v4929, %v4789
        %v4939 = vsel %vm4453, %v4931, %v4791
        %v4941 = vsel %vm4462, %v4933, %v4805
        %v4943 = vsel %vm4462, %v4935, %v4807
        %v4945 = vsel %vm4462, %v4937, %v4809
        %v4947 = vsel %vm4462, %v4939, %v4811
        %v4949 = vsel %vm4471, %v4941, %v4825
        %v4951 = vsel %vm4471, %v4943, %v4827
        %v4953 = vsel %vm4471, %v4945, %v4829
        %v4955 = vsel %vm4471, %v4947, %v4831
        %v4964 = vunpack.c.l.b16 %v2770
        %v4965 = vunpack.c.l.b16 %v2771
        %v4966 = vunpack.c.l.b16 %v2772
        %v4967 = vunpack.c.l.b16 %v2773
        %v4968 = vunpack.c.l.b16 %v2774
        %v4969 = vunpack.c.l.b16 %v2775
        %v4970 = vunpack.c.l.b16 %v2776
        %v4971 = vunpack.c.l.b16 %v2777
        %v4972 = vpack.c.b16 %v4965, %v4964
        %v4973 = vpack.c.b16 %v4967, %v4966
        %v4974 = vpack.c.b16 %v4969, %v4968
        %v4975 = vpack.c.b16 %v4971, %v4970
        %v4976 = vunpack.c.l.b16 %v2799
        %v4977 = vunpack.c.l.b16 %v2813
        %v4978 = vunpack.c.l.b16 %v2827
        %v4979 = vunpack.c.l.b16 %v2841
        %v4980 = vunpack.c.l.b16 %v2855
        %v4981 = vunpack.c.l.b16 %v2869
        %v4982 = vunpack.c.l.b16 %v2883
        %v4983 = vunpack.c.l.b16 %v2897
        %v4984 = vpack.c.b16 %v4977, %v4976
        %v4985 = vpack.c.b16 %v4979, %v4978
        %v4986 = vpack.c.b16 %v4981, %v4980
        %v4987 = vpack.c.b16 %v4983, %v4982
        %4988 = vrot.lane.b32.xlu0 %v4984, 3
        %v4989 = vpop.permute.xlu0 %4988
        %4990 = vrot.lane.b32.xlu0 %v4985, 3
        %v4991 = vpop.permute.xlu0 %4990
        %4992 = vrot.lane.b32.xlu0 %v4986, 3
        %v4993 = vpop.permute.xlu0 %4992
        %4994 = vrot.lane.b32.xlu0 %v4987, 3
        %v4995 = vpop.permute.xlu0 %4994
        %v4996 = vunpack.c.l.b16 %v2925
        %v4997 = vunpack.c.l.b16 %v2929
        %v4998 = vunpack.c.l.b16 %v2933
        %v4999 = vunpack.c.l.b16 %v2937
        %v5000 = vunpack.c.l.b16 %v2941
        %v5001 = vunpack.c.l.b16 %v2945
        %v5002 = vunpack.c.l.b16 %v2949
        %v5003 = vunpack.c.l.b16 %v2953
        %v5004 = vpack.c.b16 %v4997, %v4996
        %v5005 = vpack.c.b16 %v4999, %v4998
        %v5006 = vpack.c.b16 %v5001, %v5000
        %v5007 = vpack.c.b16 %v5003, %v5002
        %5008 = vrot.lane.b32.xlu0 %v5004, 6
        %v5009 = vpop.permute.xlu0 %5008
        %5010 = vrot.lane.b32.xlu0 %v5005, 6
        %v5011 = vpop.permute.xlu0 %5010
        %5012 = vrot.lane.b32.xlu0 %v5006, 6
        %v5013 = vpop.permute.xlu0 %5012
        %5014 = vrot.lane.b32.xlu0 %v5007, 6
        %v5015 = vpop.permute.xlu0 %5014
        %v5016 = vunpack.c.l.b16 %v2979
        %v5017 = vunpack.c.l.b16 %v2997
        %v5018 = vunpack.c.l.b16 %v3015
        %v5019 = vunpack.c.l.b16 %v3033
        %v5020 = vunpack.c.l.b16 %v3051
        %v5021 = vunpack.c.l.b16 %v3069
        %v5022 = vunpack.c.l.b16 %v3087
        %v5023 = vunpack.c.l.b16 %v3105
        %v5024 = vpack.c.b16 %v5017, %v5016
        %v5025 = vpack.c.b16 %v5019, %v5018
        %v5026 = vpack.c.b16 %v5021, %v5020
        %v5027 = vpack.c.b16 %v5023, %v5022
        %5028 = vrot.lane.b32.xlu0 %v5024, 9
        %v5029 = vpop.permute.xlu0 %5028
        %5030 = vrot.lane.b32.xlu0 %v5025, 9
        %v5031 = vpop.permute.xlu0 %5030
        %5032 = vrot.lane.b32.xlu0 %v5026, 9
        %v5033 = vpop.permute.xlu0 %5032
        %5034 = vrot.lane.b32.xlu0 %v5027, 9
        %v5035 = vpop.permute.xlu0 %5034
        %v5044 = vunpack.c.l.b16 %v3107
        %v5045 = vunpack.c.l.b16 %v3108
        %v5046 = vunpack.c.l.b16 %v3109
        %v5047 = vunpack.c.l.b16 %v3110
        %v5048 = vunpack.c.l.b16 %v3111
        %v5049 = vunpack.c.l.b16 %v3112
        %v5050 = vunpack.c.l.b16 %v3113
        %v5051 = vunpack.c.l.b16 %v3114
        %v5052 = vpack.c.b16 %v5045, %v5044
        %v5053 = vpack.c.b16 %v5047, %v5046
        %v5054 = vpack.c.b16 %v5049, %v5048
        %v5055 = vpack.c.b16 %v5051, %v5050
        %5056 = vrot.lane.b32.xlu0 %v5052, 12
        %v5057 = vpop.permute.xlu0 %5056
        %5058 = vrot.lane.b32.xlu0 %v5053, 12
        %v5059 = vpop.permute.xlu0 %5058
        %5060 = vrot.lane.b32.xlu0 %v5054, 12
        %v5061 = vpop.permute.xlu0 %5060
        %5062 = vrot.lane.b32.xlu0 %v5055, 12
        %v5063 = vpop.permute.xlu0 %5062
        %v5064 = vunpack.c.l.b16 %v3136
        %v5065 = vunpack.c.l.b16 %v3150
        %v5066 = vunpack.c.l.b16 %v3164
        %v5067 = vunpack.c.l.b16 %v3178
        %v5068 = vunpack.c.l.b16 %v3192
        %v5069 = vunpack.c.l.b16 %v3206
        %v5070 = vunpack.c.l.b16 %v3220
        %v5071 = vunpack.c.l.b16 %v3234
        %v5072 = vpack.c.b16 %v5065, %v5064
        %v5073 = vpack.c.b16 %v5067, %v5066
        %v5074 = vpack.c.b16 %v5069, %v5068
        %v5075 = vpack.c.b16 %v5071, %v5070
        %5076 = vrot.lane.b32.xlu0 %v5072, 15
        %v5077 = vpop.permute.xlu0 %5076
        %5078 = vrot.lane.b32.xlu0 %v5073, 15
        %v5079 = vpop.permute.xlu0 %5078
        %5080 = vrot.lane.b32.xlu0 %v5074, 15
        %v5081 = vpop.permute.xlu0 %5080
        %5082 = vrot.lane.b32.xlu0 %v5075, 15
        %v5083 = vpop.permute.xlu0 %5082
        %v5084 = vunpack.c.l.b16 %v3262
        %v5085 = vunpack.c.l.b16 %v3266
        %v5086 = vunpack.c.l.b16 %v3270
        %v5087 = vunpack.c.l.b16 %v3274
        %v5088 = vunpack.c.l.b16 %v3278
        %v5089 = vunpack.c.l.b16 %v3282
        %v5090 = vunpack.c.l.b16 %v3286
        %v5091 = vunpack.c.l.b16 %v3290
        %v5092 = vpack.c.b16 %v5085, %v5084
        %v5093 = vpack.c.b16 %v5087, %v5086
        %v5094 = vpack.c.b16 %v5089, %v5088
        %v5095 = vpack.c.b16 %v5091, %v5090
        %5096 = vrot.lane.b32.xlu0 %v5092, 18
        %v5097 = vpop.permute.xlu0 %5096
        %5098 = vrot.lane.b32.xlu0 %v5093, 18
        %v5099 = vpop.permute.xlu0 %5098
        %5100 = vrot.lane.b32.xlu0 %v5094, 18
        %v5101 = vpop.permute.xlu0 %5100
        %5102 = vrot.lane.b32.xlu0 %v5095, 18
        %v5103 = vpop.permute.xlu0 %5102
        %v5104 = vunpack.c.l.b16 %v3316
        %v5105 = vunpack.c.l.b16 %v3334
        %v5106 = vunpack.c.l.b16 %v3352
        %v5107 = vunpack.c.l.b16 %v3370
        %v5108 = vunpack.c.l.b16 %v3388
        %v5109 = vunpack.c.l.b16 %v3406
        %v5110 = vunpack.c.l.b16 %v3424
        %v5111 = vunpack.c.l.b16 %v3442
        %v5112 = vpack.c.b16 %v5105, %v5104
        %v5113 = vpack.c.b16 %v5107, %v5106
        %v5114 = vpack.c.b16 %v5109, %v5108
        %v5115 = vpack.c.b16 %v5111, %v5110
        %5116 = vrot.lane.b32.xlu0 %v5112, 21
        %v5117 = vpop.permute.xlu0 %5116
        %5118 = vrot.lane.b32.xlu0 %v5113, 21
        %v5119 = vpop.permute.xlu0 %5118
        %5120 = vrot.lane.b32.xlu0 %v5114, 21
        %v5121 = vpop.permute.xlu0 %5120
        %5122 = vrot.lane.b32.xlu0 %v5115, 21
        %v5123 = vpop.permute.xlu0 %5122
        %v5132 = vunpack.c.l.b16 %v3443
        %v5133 = vunpack.c.l.b16 %v3444
        %v5134 = vunpack.c.l.b16 %v3445
        %v5135 = vunpack.c.l.b16 %v3446
        %v5136 = vunpack.c.l.b16 %v3447
        %v5137 = vunpack.c.l.b16 %v3448
        %v5138 = vunpack.c.l.b16 %v3449
        %v5139 = vunpack.c.l.b16 %v3450
        %v5140 = vpack.c.b16 %v5133, %v5132
        %v5141 = vpack.c.b16 %v5135, %v5134
        %v5142 = vpack.c.b16 %v5137, %v5136
        %v5143 = vpack.c.b16 %v5139, %v5138
        %5144 = vrot.lane.b32.xlu0 %v5140, 24
        %v5145 = vpop.permute.xlu0 %5144
        %5146 = vrot.lane.b32.xlu0 %v5141, 24
        %v5147 = vpop.permute.xlu0 %5146
        %5148 = vrot.lane.b32.xlu0 %v5142, 24
        %v5149 = vpop.permute.xlu0 %5148
        %5150 = vrot.lane.b32.xlu0 %v5143, 24
        %v5151 = vpop.permute.xlu0 %5150
        %v5152 = vunpack.c.l.b16 %v3472
        %v5153 = vunpack.c.l.b16 %v3486
        %v5154 = vunpack.c.l.b16 %v3500
        %v5155 = vunpack.c.l.b16 %v3514
        %v5156 = vunpack.c.l.b16 %v3528
        %v5157 = vunpack.c.l.b16 %v3542
        %v5158 = vunpack.c.l.b16 %v3556
        %v5159 = vunpack.c.l.b16 %v3570
        %v5160 = vpack.c.b16 %v5153, %v5152
        %v5161 = vpack.c.b16 %v5155, %v5154
        %v5162 = vpack.c.b16 %v5157, %v5156
        %v5163 = vpack.c.b16 %v5159, %v5158
        %5164 = vrot.lane.b32.xlu0 %v5160, 27
        %v5165 = vpop.permute.xlu0 %5164
        %5166 = vrot.lane.b32.xlu0 %v5161, 27
        %v5167 = vpop.permute.xlu0 %5166
        %5168 = vrot.lane.b32.xlu0 %v5162, 27
        %v5169 = vpop.permute.xlu0 %5168
        %5170 = vrot.lane.b32.xlu0 %v5163, 27
        %v5171 = vpop.permute.xlu0 %5170
        %v5172 = vunpack.c.l.b16 %v3598
        %v5173 = vunpack.c.l.b16 %v3602
        %v5174 = vunpack.c.l.b16 %v3606
        %v5175 = vunpack.c.l.b16 %v3610
        %v5176 = vunpack.c.l.b16 %v3614
        %v5177 = vunpack.c.l.b16 %v3618
        %v5178 = vunpack.c.l.b16 %v3622
        %v5179 = vunpack.c.l.b16 %v3626
        %v5180 = vpack.c.b16 %v5173, %v5172
        %v5181 = vpack.c.b16 %v5175, %v5174
        %v5182 = vpack.c.b16 %v5177, %v5176
        %v5183 = vpack.c.b16 %v5179, %v5178
        %5184 = vrot.lane.b32.xlu0 %v5180, 30
        %v5185 = vpop.permute.xlu0 %5184
        %5186 = vrot.lane.b32.xlu0 %v5181, 30
        %v5187 = vpop.permute.xlu0 %5186
        %5188 = vrot.lane.b32.xlu0 %v5182, 30
        %v5189 = vpop.permute.xlu0 %5188
        %5190 = vrot.lane.b32.xlu0 %v5183, 30
        %v5191 = vpop.permute.xlu0 %5190
        %v5200 = vunpack.c.l.b16 %v3628
        %v5201 = vunpack.c.l.b16 %v3629
        %v5202 = vunpack.c.l.b16 %v3630
        %v5203 = vunpack.c.l.b16 %v3631
        %v5204 = vunpack.c.l.b16 %v3632
        %v5205 = vunpack.c.l.b16 %v3633
        %v5206 = vunpack.c.l.b16 %v3634
        %v5207 = vunpack.c.l.b16 %v3635
        %v5208 = vpack.c.b16 %v5201, %v5200
        %v5209 = vpack.c.b16 %v5203, %v5202
        %v5210 = vpack.c.b16 %v5205, %v5204
        %v5211 = vpack.c.b16 %v5207, %v5206
        %5212 = vrot.lane.b32.xlu0 %v5208, 33
        %v5213 = vpop.permute.xlu0 %5212
        %5214 = vrot.lane.b32.xlu0 %v5209, 33
        %v5215 = vpop.permute.xlu0 %5214
        %5216 = vrot.lane.b32.xlu0 %v5210, 33
        %v5217 = vpop.permute.xlu0 %5216
        %5218 = vrot.lane.b32.xlu0 %v5211, 33
        %v5219 = vpop.permute.xlu0 %5218
        %v5220 = vunpack.c.l.b16 %v3657
        %v5221 = vunpack.c.l.b16 %v3671
        %v5222 = vunpack.c.l.b16 %v3685
        %v5223 = vunpack.c.l.b16 %v3699
        %v5224 = vunpack.c.l.b16 %v3713
        %v5225 = vunpack.c.l.b16 %v3727
        %v5226 = vunpack.c.l.b16 %v3741
        %v5227 = vunpack.c.l.b16 %v3755
        %v5228 = vpack.c.b16 %v5221, %v5220
        %v5229 = vpack.c.b16 %v5223, %v5222
        %v5230 = vpack.c.b16 %v5225, %v5224
        %v5231 = vpack.c.b16 %v5227, %v5226
        %5232 = vrot.lane.b32.xlu0 %v5228, 36
        %v5233 = vpop.permute.xlu0 %5232
        %5234 = vrot.lane.b32.xlu0 %v5229, 36
        %v5235 = vpop.permute.xlu0 %5234
        %5236 = vrot.lane.b32.xlu0 %v5230, 36
        %v5237 = vpop.permute.xlu0 %5236
        %5238 = vrot.lane.b32.xlu0 %v5231, 36
        %v5239 = vpop.permute.xlu0 %5238
        %v5240 = vunpack.c.l.b16 %v3783
        %v5241 = vunpack.c.l.b16 %v3787
        %v5242 = vunpack.c.l.b16 %v3791
        %v5243 = vunpack.c.l.b16 %v3795
        %v5244 = vunpack.c.l.b16 %v3799
        %v5245 = vunpack.c.l.b16 %v3803
        %v5246 = vunpack.c.l.b16 %v3807
        %v5247 = vunpack.c.l.b16 %v3811
        %v5248 = vpack.c.b16 %v5241, %v5240
        %v5249 = vpack.c.b16 %v5243, %v5242
        %v5250 = vpack.c.b16 %v5245, %v5244
        %v5251 = vpack.c.b16 %v5247, %v5246
        %5252 = vrot.lane.b32.xlu0 %v5248, 39
        %v5253 = vpop.permute.xlu0 %5252
        %5254 = vrot.lane.b32.xlu0 %v5249, 39
        %v5255 = vpop.permute.xlu0 %5254
        %5256 = vrot.lane.b32.xlu0 %v5250, 39
        %v5257 = vpop.permute.xlu0 %5256
        %5258 = vrot.lane.b32.xlu0 %v5251, 39
        %v5259 = vpop.permute.xlu0 %5258
        %v5268 = vunpack.c.l.b16 %v3813
        %v5269 = vunpack.c.l.b16 %v3814
        %v5270 = vunpack.c.l.b16 %v3815
        %v5271 = vunpack.c.l.b16 %v3816
        %v5272 = vunpack.c.l.b16 %v3817
        %v5273 = vunpack.c.l.b16 %v3818
        %v5274 = vunpack.c.l.b16 %v3819
        %v5275 = vunpack.c.l.b16 %v3820
        %v5276 = vpack.c.b16 %v5269, %v5268
        %v5277 = vpack.c.b16 %v5271, %v5270
        %v5278 = vpack.c.b16 %v5273, %v5272
        %v5279 = vpack.c.b16 %v5275, %v5274
        %5280 = vrot.lane.b32.xlu0 %v5276, 42
        %v5281 = vpop.permute.xlu0 %5280
        %5282 = vrot.lane.b32.xlu0 %v5277, 42
        %v5283 = vpop.permute.xlu0 %5282
        %5284 = vrot.lane.b32.xlu0 %v5278, 42
        %v5285 = vpop.permute.xlu0 %5284
        %5286 = vrot.lane.b32.xlu0 %v5279, 42
        %v5287 = vpop.permute.xlu0 %5286
        %v5288 = vunpack.c.l.b16 %v3842
        %v5289 = vunpack.c.l.b16 %v3856
        %v5290 = vunpack.c.l.b16 %v3870
        %v5291 = vunpack.c.l.b16 %v3884
        %v5292 = vunpack.c.l.b16 %v3898
        %v5293 = vunpack.c.l.b16 %v3912
        %v5294 = vunpack.c.l.b16 %v3926
        %v5295 = vunpack.c.l.b16 %v3940
        %v5296 = vpack.c.b16 %v5289, %v5288
        %v5297 = vpack.c.b16 %v5291, %v5290
        %v5298 = vpack.c.b16 %v5293, %v5292
        %v5299 = vpack.c.b16 %v5295, %v5294
        %5300 = vrot.lane.b32.xlu0 %v5296, 45
        %v5301 = vpop.permute.xlu0 %5300
        %5302 = vrot.lane.b32.xlu0 %v5297, 45
        %v5303 = vpop.permute.xlu0 %5302
        %5304 = vrot.lane.b32.xlu0 %v5298, 45
        %v5305 = vpop.permute.xlu0 %5304
        %5306 = vrot.lane.b32.xlu0 %v5299, 45
        %v5307 = vpop.permute.xlu0 %5306
        %v5310 = vsel %vm4341, %v4972, %v4989
        %v5313 = vsel %vm4341, %v4973, %v4991
        %v5316 = vsel %vm4341, %v4974, %v4993
        %v5319 = vsel %vm4341, %v4975, %v4995
        %v5321 = vsel %vm4354, %v5310, %v5009
        %v5323 = vsel %vm4354, %v5313, %v5011
        %v5325 = vsel %vm4354, %v5316, %v5013
        %v5327 = vsel %vm4354, %v5319, %v5015
        %v5329 = vsel %vm4363, %v5321, %v5029
        %v5331 = vsel %vm4363, %v5323, %v5031
        %v5333 = vsel %vm4363, %v5325, %v5033
        %v5335 = vsel %vm4363, %v5327, %v5035
        %v5337 = vsel %vm4372, %v5329, %v5057
        %v5339 = vsel %vm4372, %v5331, %v5059
        %v5341 = vsel %vm4372, %v5333, %v5061
        %v5343 = vsel %vm4372, %v5335, %v5063
        %v5345 = vsel %vm4381, %v5337, %v5077
        %v5347 = vsel %vm4381, %v5339, %v5079
        %v5349 = vsel %vm4381, %v5341, %v5081
        %v5351 = vsel %vm4381, %v5343, %v5083
        %v5353 = vsel %vm4390, %v5345, %v5097
        %v5355 = vsel %vm4390, %v5347, %v5099
        %v5357 = vsel %vm4390, %v5349, %v5101
        %v5359 = vsel %vm4390, %v5351, %v5103
        %v5361 = vsel %vm4399, %v5353, %v5117
        %v5363 = vsel %vm4399, %v5355, %v5119
        %v5365 = vsel %vm4399, %v5357, %v5121
        %v5367 = vsel %vm4399, %v5359, %v5123
        %v5369 = vsel %vm4408, %v5361, %v5145
        %v5371 = vsel %vm4408, %v5363, %v5147
        %v5373 = vsel %vm4408, %v5365, %v5149
        %v5375 = vsel %vm4408, %v5367, %v5151
        %v5377 = vsel %vm4417, %v5369, %v5165
        %v5379 = vsel %vm4417, %v5371, %v5167
        %v5381 = vsel %vm4417, %v5373, %v5169
        %v5383 = vsel %vm4417, %v5375, %v5171
        %v5385 = vsel %vm4426, %v5377, %v5185
        %v5387 = vsel %vm4426, %v5379, %v5187
        %v5389 = vsel %vm4426, %v5381, %v5189
        %v5391 = vsel %vm4426, %v5383, %v5191
        %v5393 = vsel %vm4435, %v5385, %v5213
        %v5395 = vsel %vm4435, %v5387, %v5215
        %v5397 = vsel %vm4435, %v5389, %v5217
        %v5399 = vsel %vm4435, %v5391, %v5219
        %v5401 = vsel %vm4444, %v5393, %v5233
        %v5403 = vsel %vm4444, %v5395, %v5235
        %v5405 = vsel %vm4444, %v5397, %v5237
        %v5407 = vsel %vm4444, %v5399, %v5239
        %v5409 = vsel %vm4453, %v5401, %v5253
        %v5411 = vsel %vm4453, %v5403, %v5255
        %v5413 = vsel %vm4453, %v5405, %v5257
        %v5415 = vsel %vm4453, %v5407, %v5259
        %v5417 = vsel %vm4462, %v5409, %v5281
        %v5419 = vsel %vm4462, %v5411, %v5283
        %v5421 = vsel %vm4462, %v5413, %v5285
        %v5423 = vsel %vm4462, %v5415, %v5287
        %v5425 = vsel %vm4471, %v5417, %v5301
        %v5427 = vsel %vm4471, %v5419, %v5303
        %v5429 = vsel %vm4471, %v5421, %v5305
        %v5431 = vsel %vm4471, %v5423, %v5307
        %5436 = vrot.lane.b32.xlu0 %v4949, 48
        %v5437 = vpop.permute.xlu0 %5436
        %5438 = vrot.lane.b32.xlu0 %v4951, 48
        %v5439 = vpop.permute.xlu0 %5438
        %5440 = vrot.lane.b32.xlu0 %v4953, 48
        %v5441 = vpop.permute.xlu0 %5440
        %5442 = vrot.lane.b32.xlu0 %v4955, 48
        %v5443 = vpop.permute.xlu0 %5442
        %5448 = vrot.lane.b32.xlu0 %v5425, 96
        %v5449 = vpop.permute.xlu0 %5448
        %5450 = vrot.lane.b32.xlu0 %v5427, 96
        %v5451 = vpop.permute.xlu0 %5450
        %5452 = vrot.lane.b32.xlu0 %v5429, 96
        %v5453 = vpop.permute.xlu0 %5452
        %5454 = vrot.lane.b32.xlu0 %v5431, 96
        %v5455 = vpop.permute.xlu0 %5454
        %v5456 = vunpack.c.l.b16 %v3968
        %v5457 = vunpack.c.l.b16 %v3972
        %v5458 = vunpack.c.l.b16 %v3976
        %v5459 = vunpack.c.l.b16 %v3980
        %v5460 = vunpack.c.l.b16 %v3984
        %v5461 = vunpack.c.l.b16 %v3988
        %v5462 = vunpack.c.l.b16 %v3992
        %v5463 = vunpack.c.l.b16 %v3996
        %v5464 = vpack.c.b16 %v5457, %v5456
        %v5465 = vpack.c.b16 %v5459, %v5458
        %v5466 = vpack.c.b16 %v5461, %v5460
        %v5467 = vpack.c.b16 %v5463, %v5462
        %5468 = vrot.lane.b32.xlu0 %v5464, 16
        %v5469 = vpop.permute.xlu0 %5468
        %5470 = vrot.lane.b32.xlu0 %v5465, 16
        %v5471 = vpop.permute.xlu0 %5470
        %5472 = vrot.lane.b32.xlu0 %v5466, 16
        %v5473 = vpop.permute.xlu0 %5472
        %5474 = vrot.lane.b32.xlu0 %v5467, 16
        %v5475 = vpop.permute.xlu0 %5474
        %vm5476 = vcmask 392192
        %v5478 = vsel %vm5476, %v4473, %v5437
        %v5480 = vsel %vm5476, %v4475, %v5439
        %v5482 = vsel %vm5476, %v4477, %v5441
        %v5484 = vsel %vm5476, %v4479, %v5443
        %vm5485 = vcmask 785408
        %v5487 = vsel %vm5485, %v5478, %v5449
        %v5490 = vsel %vm5485, %v5480, %v5451
        %v5493 = vsel %vm5485, %v5482, %v5453
        %v5496 = vsel %vm5485, %v5484, %v5455
        %vm5498 = vcmask 130048
        %v5500 = vsel %vm5498, %v5449, %v5469
        %v5502 = vsel %vm5498, %v5451, %v5471
        %v5504 = vsel %vm5498, %v5453, %v5473
        %v5506 = vsel %vm5498, %v5455, %v5475
        %v5507 = vld [vmem:[%s4] sm:$0xf]
        %v5508 = vld [vmem:[%s4 + $0x4] sm:$0xf]
        %v5509 = vld [vmem:[%s4 + $0x8] sm:$0xf]
        %v5510 = vld [vmem:[%s4 + $0xc] sm:$0xf]
        %v5511 = vld [vmem:[%s4 + $0x10] sm:$0xf]
        %v5512 = vld [vmem:[%s4 + $0x14] sm:$0xf]
        %v5513 = vld [vmem:[%s4 + $0x18] sm:$0xf]
        %v5514 = vld [vmem:[%s4 + $0x1c] sm:$0xf]
        %v5515 = vld [vmem:[%s4 + $0x20] sm:$0xf]
        %v5516 = vld [vmem:[%s4 + $0x24] sm:$0xf]
        %v5517 = vld [vmem:[%s4 + $0x28] sm:$0xf]
        %v5518 = vld [vmem:[%s4 + $0x2c] sm:$0xf]
        %v5519 = vld [vmem:[%s4 + $0x30] sm:$0xf]
        %v5520 = vld [vmem:[%s4 + $0x34] sm:$0xf]
        %v5521 = vld [vmem:[%s4 + $0x38] sm:$0xf]
        %v5522 = vld [vmem:[%s4 + $0x3c] sm:$0xf]
        %v5523 = vld [vmem:[%s4 + $0x40] sm:$0xf]
        %v5524 = vld [vmem:[%s4 + $0x44] sm:$0xf]
        %v5525 = vld [vmem:[%s4 + $0x48] sm:$0x3]
        %v5545 = vunpack.c.l.b16 %v5507
        %v5546 = vunpack.c.l.b16 %v5508
        %v5547 = vunpack.c.l.b16 %v5509
        %v5548 = vunpack.c.l.b16 %v5510
        %v5549 = vunpack.c.l.b16 %v5511
        %v5550 = vunpack.c.l.b16 %v5512
        %v5551 = vunpack.c.l.b16 %v5513
        %v5552 = vunpack.c.l.b16 %v5514
        %v5553 = vunpack.c.l.b16 %v5515
        %v5554 = vunpack.c.l.b16 %v5516
        %v5555 = vunpack.c.l.b16 %v5517
        %v5556 = vunpack.c.l.b16 %v5518
        %v5557 = vunpack.c.l.b16 %v5519
        %v5558 = vunpack.c.l.b16 %v5520
        %v5559 = vunpack.c.l.b16 %v5521
        %v5560 = vunpack.c.l.b16 %v5522
        %v5561 = vunpack.c.l.b16 %v5523
        %v5562 = vunpack.c.l.b16 %v5524
        %v5563 = vunpack.c.l.b16 %v5525
        %v5564 = vpack.c.b16 %v5546, %v5545
        %v5565 = vpack.c.b16 %v5548, %v5547
        %v5566 = vpack.c.b16 %v5550, %v5549
        %v5567 = vpack.c.b16 %v5552, %v5551
        %v5568 = vpack.c.b16 %v5554, %v5553
        %v5569 = vpack.c.b16 %v5556, %v5555
        %v5570 = vpack.c.b16 %v5558, %v5557
        %v5571 = vpack.c.b16 %v5560, %v5559
        %v5572 = vpack.c.b16 %v5562, %v5561
        %v5573 = vpack.c.b16 %v5563, %v5563
        %vm5583 = vcmask 154624
        %v5584 = vsel %vm5583, %v5500, 0
        %v5586 = vsel %vm5583, %v5502, 0
        %v5588 = vsel %vm5583, %v5504, 0
        %v5590 = vsel %vm5583, %v5506, 0
        %vm5592 = vcmask 1040384
        %vm5593 = vcmask 1041408
        %v5594 = vsel %vm5592, 4294967295, 65535
        %v5595 = vsel %vm5593, %v5594, 0
        %v5597 = vand.u32 %v5573, %v5595
        %5599 = vmatpush.bf16.msra.mxu0 %v5571
        %5600 = vmatpush.bf16.msra.mxu0 %v5570
        %5601 = vmatpush.bf16.msra.mxu0 %v5569
        %5602 = vmatpush.bf16.msra.mxu0 %v5568
        %5603 = vmatpush.bf16.msra.mxu0 %v5567
        %5604 = vmatpush.bf16.msra.mxu0 %v5566
        %5605 = vmatpush.bf16.msra.mxu0 %v5565
        %5606 = vmatpush.bf16.msra.mxu0 %v5564
        %5607 = vmatmul.bf16.gmra.mxu0 %v5487
        %v5608 = vpop.f32.mrf.mxu0
        %v5609 = vadd.f32 0.0, %v5608
        %v5610 = vpop.f32.mrf.mxu0
        %v5611 = vadd.f32 0.0, %v5610
        %5612 = vmatmul.bf16.gmra.mxu0 %v5490
        %v5613 = vpop.f32.mrf.mxu0
        %v5614 = vadd.f32 0.0, %v5613
        %v5615 = vpop.f32.mrf.mxu0
        %v5616 = vadd.f32 0.0, %v5615
        %5617 = vmatmul.bf16.gmra.mxu0 %v5493
        %v5618 = vpop.f32.mrf.mxu0
        %v5619 = vadd.f32 0.0, %v5618
        %v5620 = vpop.f32.mrf.mxu0
        %v5621 = vadd.f32 0.0, %v5620
        %5622 = vmatmul.bf16.gmra.mxu0 %v5496
        %v5623 = vpop.f32.mrf.mxu0
        %v5624 = vadd.f32 0.0, %v5623
        %v5625 = vpop.f32.mrf.mxu0
        %v5626 = vadd.f32 0.0, %v5625
        %5627 = vdwg.mxu0
        %5628 = vmatpush.bf16.msra.mxu0 0
        %5629 = vmatpush.bf16.msra.mxu0 0
        %5630 = vmatpush.bf16.msra.mxu0 0
        %5631 = vmatpush.bf16.msra.mxu0 0
        %5632 = vmatpush.bf16.msra.mxu0 0
        %5633 = vmatpush.bf16.msra.mxu0 0
        %5634 = vmatpush.bf16.msra.mxu0 %v5597
        %5635 = vmatpush.bf16.msra.mxu0 %v5572
        %5636 = vmatmul.bf16.gmra.mxu0 %v5584
        %v5637 = vpop.f32.mrf.mxu0
        %v5638 = vadd.f32 %v5609, %v5637
        %v5639 = vpop.f32.mrf.mxu0
        %v5640 = vadd.f32 %v5611, %v5639
        %5641 = vmatmul.bf16.gmra.mxu0 %v5586
        %v5642 = vpop.f32.mrf.mxu0
        %v5643 = vadd.f32 %v5614, %v5642
        %v5644 = vpop.f32.mrf.mxu0
        %v5645 = vadd.f32 %v5616, %v5644
        %5646 = vmatmul.bf16.gmra.mxu0 %v5588
        %v5647 = vpop.f32.mrf.mxu0
        %v5648 = vadd.f32 %v5619, %v5647
        %v5649 = vpop.f32.mrf.mxu0
        %v5650 = vadd.f32 %v5621, %v5649
        %5651 = vmatmul.bf16.gmra.mxu0 %v5590
        %v5652 = vpop.f32.mrf.mxu0
        %v5653 = vadd.f32 %v5624, %v5652
        %v5654 = vpop.f32.mrf.mxu0
        %v5655 = vadd.f32 %v5626, %v5654
        %5656 = vdwg.mxu0
        %v5657 = vld [vmem:[%s5] sm:$0x1]
        %v5659 = vperm.slane %v5657, 0
        %v5661 = vmul.f32 %v5638, %v5659
        %v5662 = vmul.f32 %v5640, %v5659
        %v5663 = vmul.f32 %v5643, %v5659
        %v5664 = vmul.f32 %v5645, %v5659
        %v5665 = vmul.f32 %v5648, %v5659
        %v5666 = vmul.f32 %v5650, %v5659
        %v5667 = vmul.f32 %v5653, %v5659
        %v5668 = vmul.f32 %v5655, %v5659
        %v5669 = vld [vmem:[%s6] sm:$0x1]
        %v5671 = vperm.slane %v5669, 0
        %v5673 = vadd.f32 %v5661, %v5671
        %v5674 = vadd.f32 %v5662, %v5671
        %v5675 = vadd.f32 %v5663, %v5671
        %v5676 = vadd.f32 %v5664, %v5671
        %v5677 = vadd.f32 %v5665, %v5671
        %v5678 = vadd.f32 %v5666, %v5671
        %v5679 = vadd.f32 %v5667, %v5671
        %v5680 = vadd.f32 %v5668, %v5671
        %v5681 = vmax.f32 %v5673, 0.0
        %v5682 = vmax.f32 %v5674, 0.0
        %v5683 = vmax.f32 %v5675, 0.0
        %v5684 = vmax.f32 %v5676, 0.0
        %v5685 = vmax.f32 %v5677, 0.0
        %v5686 = vmax.f32 %v5678, 0.0
        %v5687 = vmax.f32 %v5679, 0.0
        %v5688 = vmax.f32 %v5680, 0.0
        %v5689 = vpack.c.bf16 %v5681, %v5681
        %v5690 = vpack.c.bf16 %v5682, %v5682
        %v5691 = vpack.c.bf16 %v5683, %v5683
        %v5692 = vpack.c.bf16 %v5684, %v5684
        %v5693 = vpack.c.bf16 %v5685, %v5685
        %v5694 = vpack.c.bf16 %v5686, %v5686
        %v5695 = vpack.c.bf16 %v5687, %v5687
        %v5696 = vpack.c.bf16 %v5688, %v5688
        %vm5697 = vcmask 519168
        %5698 = vst.msk [vmem:[%s316] sm:$0xf] %vm5697, %v5689
        %5699 = vst.msk [vmem:[%s316 + $0x4] sm:$0xf] %vm5697, %v5690
        %5700 = vst.msk [vmem:[%s316 + $0x8] sm:$0xf] %vm5697, %v5691
        %5701 = vst.msk [vmem:[%s316 + $0xc] sm:$0xf] %vm5697, %v5692
        %5702 = vst.msk [vmem:[%s316 + $0x10] sm:$0xf] %vm5697, %v5693
        %5703 = vst.msk [vmem:[%s316 + $0x14] sm:$0xf] %vm5697, %v5694
        %5704 = vst.msk [vmem:[%s316 + $0x18] sm:$0xf] %vm5697, %v5695
        %5705 = vst.msk [vmem:[%s316 + $0x1c] sm:$0xf] %vm5697, %v5696
        %s5706 = sand.u32 %s196, 1
        %s5707 = scalar_lea.sflag [#allocation3], %s5706
        %s5708 = sand.u32 %s196, 1
        %s5709 = smul.addr %s5708, 32
        %s5710 = scalar_lea.vmem [#allocation2], %s5709
        // Predicated region
        $region49: #{tpu_custom_call.1} parent=47 // pred_check
          %p5711 = pneg %p206
        $region50: #{tpu_custom_call.1} parent=47 // pred_check_branch
          %5713 = sbr.rel (%p5711) target = $region52
        $region51: #{tpu_custom_call.1} parent=47 // pred_region
          %5715 = vsyncadd %s5707, 0
          %s5716 = smul.addr %s21, 8
          %s5717 = smul.addr %s5716, 4
          %s5718 = scalar_lea.hbm %s7, %s5717
          %s5719 = sshll.u32 %s5710, 4
          %s5720 = int_to_ptr.vmem [resolvable:$true] %s5719
          %s5721 = sshll.u32 %s5718, 4
          %s5722 = int_to_ptr.hbm [resolvable:$true] %s5721
          %5727 = dma.vmem_to_hbm [thread:$0]  %s5720, 512, %s5722, %s5707, 64, 64, 4
        $region52: #{tpu_custom_call.1} parent=47 // pred_fallthru
          _
      $region48: #{tpu_custom_call.1} parent=5 // pred_fallthru
        _
      %p5728 = scmp.le.s32.totalorder 2, %s16
      // Predicated region
      $region53: #{tpu_custom_call.1} parent=5 // pred_check
        %p5729 = pneg %p5728
      $region54: #{tpu_custom_call.1} parent=5 // pred_check_branch
        %5731 = sbr.rel (%p5729) target = $region56
      $region55: #{tpu_custom_call.1} parent=5 // pred_region
        %s5732 = ssub.s32 %s16, 2
        // Predicated region
        $region57: #{tpu_custom_call.1} parent=55 // pred_check
          %p5733 = pneg %p212
        $region58: #{tpu_custom_call.1} parent=55 // pred_check_branch
          %5735 = sbr.rel (%p5733) target = $region60
        $region59: #{tpu_custom_call.1} parent=55 // pred_region
          %s5736 = sand.u32 %s197, 1
          %s5737 = scalar_lea.sflag [#allocation3], %s5736
          %s5738 = sand.u32 %s197, 1
          %s5739 = smul.addr %s5738, 32
          %s5740 = scalar_lea.vmem [#allocation2], %s5739
          %5742 = dma.done %s5737, 512
        $region60: #{tpu_custom_call.1} parent=55 // pred_fallthru
          _
      $region56: #{tpu_custom_call.1} parent=5 // pred_fallthru
        _
    $region6: #{tpu_custom_call.1} parent=1 // loop_footer
      %s20 = sadd.s32 1, %s16
    $region7: #{tpu_custom_call.1} parent=1 // loop_footer_branch
      %15 = sbr.rel target = $region3
    $region8: #{tpu_custom_call.1} parent=1 // loop_exit
      _
    %5743 = vsyncpa [#allocation3], 1
    %s5744 = scalar_lea.sflag [#allocation3], 1
    %5745 = vsyncpa %s5744, 1

</llo_original>
